<compile_context>
chip_gen: v7x
topology: tpu7x:2x2x1
jax: 0.10.0
libtpu: 0.0.40
codegen_flags: <defaults>
</compile_context>

<pallas_src>
from functools import partial

import jax
import jax.numpy as jnp
from jax.experimental import pallas as pl
from jax.experimental.pallas import tpu as pltpu


# ----------------------------------------------------------------------------
# Device-dependent output-channel tile (fills the MXU width)
# ----------------------------------------------------------------------------
def _mxu_width():
    try:
        kind = jax.devices()[0].device_kind.lower()
        if "v2" in kind or "v3" in kind or "v4" in kind or "v5" in kind:
            return 128      # 128-wide MXU generations
    except Exception:
        pass
    return 256              # v6e / v7x: 256-wide MXU


_MXU_N = _mxu_width()


def _strip_rows(H, pool, target=16):
    """Largest divisor of H that is <= target (even if a pool is fused)."""
    best = 1
    for s in range(1, min(H, target) + 1):
        if H % s != 0:
            continue
        if pool and s % 2 != 0:
            continue
        best = s
    if pool and best % 2 != 0:
        best = H
    return best


# ----------------------------------------------------------------------------
# Pallas kernel: fused 3x3 conv + folded-BN bias + ReLU (+ optional 2x2 maxpool)
# ----------------------------------------------------------------------------
def _conv_bn_relu_kernel(x_ref, w_ref, bias_ref, o_ref, *, S, W, pool):
    """One output row-strip for one Cout tile.

    x_ref   : (1, H+2, W+2, Cin)  bf16, whole padded image (batch-resident)
    w_ref   : (9, Cin, TC)        bf16, BN scale already folded in; resident
                                  across all spatial strips of a cout tile
    bias_ref: (1, TC)             f32 folded BN bias (incl. conv bias)
    o_ref   : (1, S, W, TC) or (1, S//2, W//2, TC) if pool, bf16
    """
    cin = x_ref.shape[-1]
    tc = o_ref.shape[-1]
    s = pl.program_id(2)
    row0 = s * S                       # padded-row index of the strip's top halo
    if S % 8 == 0:
        row0 = pl.multiple_of(row0, 8)

    # Load the (S+2, W+2, Cin) input strip once per grid step.
    xs = x_ref[0, pl.ds(row0, S + 2), :, :]

    # Accumulator starts at the folded bias -> epilogue is just ReLU (+pool).
    acc = jnp.broadcast_to(bias_ref[...], (S * W, tc))
    for kx in range(3):
        xk = xs[:, kx:kx + W, :]                       # (S+2, W, Cin), reused x3
        for ky in range(3):
            patch = xk[ky:ky + S].reshape(S * W, cin)  # outer-dim slice (cheap)
            acc = acc + jnp.dot(patch, w_ref[3 * ky + kx],
                                preferred_element_type=jnp.float32)

    y = jnp.maximum(acc, 0.0).reshape(S, W, tc)        # f32 ReLU epilogue
    if pool:                                           # fused 2x2 / stride-2 max
        y = jnp.maximum(y[0::2], y[1::2])
        y = jnp.maximum(y[:, 0::2], y[:, 1::2])
    o_ref[0] = y.astype(o_ref.dtype)


def conv_bn_relu(x_nhwc, w, scale, bias, *, pool=False):
    """x_nhwc: (N,H,W,Cin); w: (3,3,Cin,Cout); scale/bias: (Cout,). Returns bf16."""
    N, H, W, cin = x_nhwc.shape
    cout = w.shape[-1]
    tc = min(cout, _MXU_N)
    assert cout % tc == 0
    if pool:
        assert H % 2 == 0 and W % 2 == 0

    S = _strip_rows(H, pool)
    so = S // 2 if pool else S
    Ho = H // 2 if pool else H
    Wo = W // 2 if pool else W

    x = x_nhwc.astype(jnp.bfloat16)
    # Fold the BN scale into the conv weights (inference-mode fusion): this
    # removes a full-tensor multiply from the kernel epilogue and the scale
    # operand from the pallas_call.
    w9 = (w.astype(jnp.float32).reshape(9, cin, cout)
          * scale.astype(jnp.float32)[None, None, :]).astype(jnp.bfloat16)

    # Single pad op per layer: 1-pixel halo in H and W, plus lane-padding of the
    # 3-channel input of the very first conv.
    pc = (-cin) % 8
    xp = jnp.pad(x, ((0, 0), (1, 1), (1, 1), (0, pc)))
    if pc:
        w9 = jnp.pad(w9, ((0, 0), (0, pc), (0, 0)))
    cin_p = cin + pc

    bias2 = bias.reshape(1, cout).astype(jnp.float32)

    out = pl.pallas_call(
        partial(_conv_bn_relu_kernel, S=S, W=W, pool=pool),
        out_shape=jax.ShapeDtypeStruct((N, Ho, Wo, cout), jnp.bfloat16),
        grid=(N, cout // tc, H // S),
        in_specs=[
            # whole padded image: re-DMA'd only when the batch index changes
            pl.BlockSpec((1, H + 2, W + 2, cin_p), lambda n, j, s: (n, 0, 0, 0)),
            # weights: resident across all spatial strips of a cout tile
            pl.BlockSpec((9, cin_p, tc), lambda n, j, s: (0, 0, j)),
            pl.BlockSpec((1, tc), lambda n, j, s: (0, j)),
        ],
        out_specs=pl.BlockSpec((1, so, Wo, tc), lambda n, j, s: (n, s, 0, j)),
        compiler_params=pltpu.CompilerParams(
            dimension_semantics=("parallel", "parallel", "parallel"),
            vmem_limit_bytes=32 * 1024 * 1024),
    )(xp, w9, bias2)
    return out


# ----------------------------------------------------------------------------
# Parameter init (deterministic, synthetic — no checkpoint loading)
# ----------------------------------------------------------------------------
_BN_EPS = 1e-5


def _init_conv_bn(key, cin, cout):
    k1, k2, k3, k4, k5 = jax.random.split(key, 5)
    w = jax.random.normal(k1, (3, 3, cin, cout), jnp.float32) * jnp.sqrt(
        2.0 / (9 * cin))
    conv_b = jnp.zeros((cout,), jnp.float32)
    gamma = 1.0 + 0.1 * jax.random.normal(k2, (cout,), jnp.float32)
    beta = 0.1 * jax.random.normal(k3, (cout,), jnp.float32)
    rmean = 0.1 * jax.random.normal(k4, (cout,), jnp.float32)
    rvar = 1.0 + 0.1 * jax.random.uniform(k5, (cout,), jnp.float32)
    scale = gamma / jnp.sqrt(rvar + _BN_EPS)         # BN folded (inference)
    bias = (conv_b - rmean) * scale + beta
    return (w, scale, bias)


def init_vgg16_bn_params(key):
    cfg1 = [(3, 64), (64, 64),
            (64, 128), (128, 128),
            (128, 256), (256, 256), (256, 256),
            (256, 512), (512, 512), (512, 512)]
    cfg2 = [(512, 512), (512, 512), (512, 512)]
    keys = jax.random.split(key, len(cfg1) + len(cfg2))
    params1 = [_init_conv_bn(keys[i], ci, co) for i, (ci, co) in enumerate(cfg1)]
    params2 = [_init_conv_bn(keys[len(cfg1) + i], ci, co)
               for i, (ci, co) in enumerate(cfg2)]
    return params1, params2


# ----------------------------------------------------------------------------
# Forward pass (matches vgg16_bn.forward: returns (out1, out2), both NCHW f32)
# ----------------------------------------------------------------------------
_POOL_AFTER_CONV_IDX = (1, 3, 6)   # pools after conv1_2, conv2_2, conv3_3 only


def vgg16_bn_forward(x_nchw, params1, params2):
    x = jnp.transpose(x_nchw, (0, 2, 3, 1)).astype(jnp.bfloat16)  # NCHW -> NHWC
    for i, (w, s, b) in enumerate(params1):
        x = conv_bn_relu(x, w, s, b, pool=(i in _POOL_AFTER_CONV_IDX))
    out1 = x                      # (N, H/8, W/8, 512); pool at features[33] skipped
    y = out1
    nlast = len(params2) - 1
    for i, (w, s, b) in enumerate(params2):
        y = conv_bn_relu(y, w, s, b, pool=(i == nlast))  # final pool (features[43]) fused
    out2 = y                      # (N, H/16, W/16, 512)
    return (jnp.transpose(out1, (0, 3, 1, 2)).astype(jnp.float32),
            jnp.transpose(out2, (0, 3, 1, 2)).astype(jnp.float32))


# ----------------------------------------------------------------------------
# Plain-JAX reference for a single fused layer (used as an in-script check)
# ----------------------------------------------------------------------------
def _ref_conv_bn_relu(x, w, scale, bias, pool):
    xf = x.astype(jnp.float32)
    wf = w.astype(jnp.float32)
    N, H, W, _ = x.shape
    xp = jnp.pad(xf, ((0, 0), (1, 1), (1, 1), (0, 0)))
    out = jnp.zeros((N, H, W, w.shape[-1]), jnp.float32)
    for ky in range(3):
        for kx in range(3):
            out = out + jnp.einsum('nhwc,cd->nhwd',
                                   xp[:, ky:ky + H, kx:kx + W, :], wf[ky, kx])
    out = jnp.maximum(out * scale + bias, 0.0)
    if pool:
        out = jnp.maximum(out[:, 0::2], out[:, 1::2])
        out = jnp.maximum(out[:, :, 0::2], out[:, :, 1::2])
    return out


# ----------------------------------------------------------------------------
if __name__ == "__main__":
    key = jax.random.PRNGKey(0)
    k_params, k_x, k_chk = jax.random.split(key, 3)

    # --- single-layer correctness checks against the plain-JAX reference ----
    kc = jax.random.split(k_chk, 6)
    # (a) first-layer style: cin=3 (lane-pad path), no pool, non-trivial BN
    xa = jax.random.normal(kc[0], (2, 16, 16, 3), jnp.float32).astype(jnp.bfloat16)
    wa = (0.2 * jax.random.normal(kc[1], (3, 3, 3, 64), jnp.float32)).astype(jnp.bfloat16)
    sa = 1.0 + 0.1 * jax.random.normal(kc[2], (64,), jnp.float32)
    ba = 0.1 * jax.random.normal(kc[3], (64,), jnp.float32)
    got_a = conv_bn_relu(xa, wa, sa, ba, pool=False).astype(jnp.float32)
    ref_a = _ref_conv_bn_relu(xa, wa, sa, ba, pool=False)
    assert jnp.allclose(got_a, ref_a, rtol=5e-2, atol=5e-2)

    # (b) mid-layer style: cin=64 -> cout=128, fused 2x2 maxpool
    xb = jax.random.normal(kc[4], (2, 8, 8, 64), jnp.float32).astype(jnp.bfloat16)
    wb = (0.08 * jax.random.normal(kc[5], (3, 3, 64, 128), jnp.float32)).astype(jnp.bfloat16)
    sb = jnp.ones((128,), jnp.float32)
    bb = jnp.zeros((128,), jnp.float32)
    got_b = conv_bn_relu(xb, wb, sb, bb, pool=True).astype(jnp.float32)
    ref_b = _ref_conv_bn_relu(xb, wb, sb, bb, pool=True)
    assert jnp.allclose(got_b, ref_b, rtol=5e-2, atol=5e-2)

    # --- full forward at small shapes consistent with the module ------------
    params1, params2 = init_vgg16_bn_params(k_params)
    x = jax.random.normal(k_x, (2, 3, 32, 32), jnp.float32)   # NCHW

    fwd = jax.jit(vgg16_bn_forward)
    out1, out2 = fwd(x, params1, params2)
    out1 = jax.block_until_ready(out1)
    out2 = jax.block_until_ready(out2)

    assert out1.shape == (2, 512, 4, 4), out1.shape    # H/8
    assert out2.shape == (2, 512, 2, 2), out2.shape    # H/16
    assert out1.dtype == jnp.float32 and out2.dtype == jnp.float32
    assert bool(jnp.all(jnp.isfinite(out1))) and bool(jnp.all(jnp.isfinite(out2)))

    print("KERNEL_OK")
</pallas_src>

<mosaic_0001>
module attributes {stable_mosaic.version = 11 : i64} {
  func.func @_conv_bn_relu_kernel(%arg0: i32, %arg1: i32, %arg2: i32, %arg3: memref<1x18x18x8xbf16, #tpu.memory_space<vmem>>, %arg4: memref<9x8x64xbf16, #tpu.memory_space<vmem>>, %arg5: memref<1x64xf32, #tpu.memory_space<vmem>>, %arg6: memref<1x16x16x64xbf16, #tpu.memory_space<vmem>>) attributes {dimension_semantics = [#tpu.dimension_semantics<parallel>, #tpu.dimension_semantics<parallel>, #tpu.dimension_semantics<parallel>], iteration_bounds = array<i64: 2, 1, 1>, scalar_prefetch = 0 : i64, scratch_operands = 0 : i64, tpu.core_type = #tpu.core_type<tc>, window_params = [{transform_indices = @transform_0, window_bounds = array<i64: 1, 18, 18, 8>}, {transform_indices = @transform_1, window_bounds = array<i64: 9, 8, 64>}, {transform_indices = @transform_2, window_bounds = array<i64: 1, 64>}, {transform_indices = @transform_3, window_bounds = array<i64: 1, 16, 16, 64>}]} {
    %c16_i32 = arith.constant 16 : i32
    %0 = arith.muli %arg2, %c16_i32 : i32
    %1 = tpu.assume_multiple %0, 8 : i32
    %c0 = arith.constant 0 : index
    %2 = arith.index_cast %1 : i32 to index
    %c0_0 = arith.constant 0 : index
    %c0_1 = arith.constant 0 : index
    %3 = vector.load %arg3[%c0, %2, %c0_0, %c0_1] : memref<1x18x18x8xbf16, #tpu.memory_space<vmem>>, vector<1x18x18x8xbf16>
    %4 = vector.shape_cast %3 : vector<1x18x18x8xbf16> to vector<18x18x8xbf16>
    %c0_2 = arith.constant 0 : index
    %c0_3 = arith.constant 0 : index
    %5 = vector.load %arg5[%c0_2, %c0_3] : memref<1x64xf32, #tpu.memory_space<vmem>>, vector<1x64xf32>
    %6 = vector.shape_cast %5 : vector<1x64xf32> to vector<1x64xf32>
    %7 = vector.broadcast %6 : vector<1x64xf32> to vector<256x64xf32>
    %8 = vector.extract_strided_slice %4 {offsets = [0, 0, 0], sizes = [18, 16, 8], strides = [1, 1, 1]} : vector<18x18x8xbf16> to vector<18x16x8xbf16>
    %9 = vector.extract_strided_slice %8 {offsets = [0, 0, 0], sizes = [16, 16, 8], strides = [1, 1, 1]} : vector<18x16x8xbf16> to vector<16x16x8xbf16>
    %10 = vector.shape_cast %9 : vector<16x16x8xbf16> to vector<256x8xbf16>
    %c0_4 = arith.constant 0 : index
    %c0_5 = arith.constant 0 : index
    %c0_6 = arith.constant 0 : index
    %11 = vector.load %arg4[%c0_4, %c0_5, %c0_6] : memref<9x8x64xbf16, #tpu.memory_space<vmem>>, vector<1x8x64xbf16>
    %12 = vector.shape_cast %11 : vector<1x8x64xbf16> to vector<8x64xbf16>
    %cst = arith.constant dense<0.000000e+00> : vector<256x64xf32>
    %13 = tpu.matmul %10, %12, %cst {dimension_numbers = #tpu.dot_dimension_numbers<[1], [0], [0], [1], [0, 0, 1, 1], [], []>} : vector<256x8xbf16>, vector<8x64xbf16>, vector<256x64xf32> -> vector<256x64xf32>
    %14 = arith.addf %7, %13 : vector<256x64xf32>
    %15 = vector.extract_strided_slice %8 {offsets = [1, 0, 0], sizes = [16, 16, 8], strides = [1, 1, 1]} : vector<18x16x8xbf16> to vector<16x16x8xbf16>
    %16 = vector.shape_cast %15 : vector<16x16x8xbf16> to vector<256x8xbf16>
    %c3 = arith.constant 3 : index
    %c0_7 = arith.constant 0 : index
    %c0_8 = arith.constant 0 : index
    %17 = vector.load %arg4[%c3, %c0_7, %c0_8] : memref<9x8x64xbf16, #tpu.memory_space<vmem>>, vector<1x8x64xbf16>
    %18 = vector.shape_cast %17 : vector<1x8x64xbf16> to vector<8x64xbf16>
    %cst_9 = arith.constant dense<0.000000e+00> : vector<256x64xf32>
    %19 = tpu.matmul %16, %18, %cst_9 {dimension_numbers = #tpu.dot_dimension_numbers<[1], [0], [0], [1], [0, 0, 1, 1], [], []>} : vector<256x8xbf16>, vector<8x64xbf16>, vector<256x64xf32> -> vector<256x64xf32>
    %20 = arith.addf %14, %19 : vector<256x64xf32>
    %21 = vector.extract_strided_slice %8 {offsets = [2, 0, 0], sizes = [16, 16, 8], strides = [1, 1, 1]} : vector<18x16x8xbf16> to vector<16x16x8xbf16>
    %22 = vector.shape_cast %21 : vector<16x16x8xbf16> to vector<256x8xbf16>
    %c6 = arith.constant 6 : index
    %c0_10 = arith.constant 0 : index
    %c0_11 = arith.constant 0 : index
    %23 = vector.load %arg4[%c6, %c0_10, %c0_11] : memref<9x8x64xbf16, #tpu.memory_space<vmem>>, vector<1x8x64xbf16>
    %24 = vector.shape_cast %23 : vector<1x8x64xbf16> to vector<8x64xbf16>
    %cst_12 = arith.constant dense<0.000000e+00> : vector<256x64xf32>
    %25 = tpu.matmul %22, %24, %cst_12 {dimension_numbers = #tpu.dot_dimension_numbers<[1], [0], [0], [1], [0, 0, 1, 1], [], []>} : vector<256x8xbf16>, vector<8x64xbf16>, vector<256x64xf32> -> vector<256x64xf32>
    %26 = arith.addf %20, %25 : vector<256x64xf32>
    %27 = vector.extract_strided_slice %4 {offsets = [0, 1, 0], sizes = [18, 16, 8], strides = [1, 1, 1]} : vector<18x18x8xbf16> to vector<18x16x8xbf16>
    %28 = vector.extract_strided_slice %27 {offsets = [0, 0, 0], sizes = [16, 16, 8], strides = [1, 1, 1]} : vector<18x16x8xbf16> to vector<16x16x8xbf16>
    %29 = vector.shape_cast %28 : vector<16x16x8xbf16> to vector<256x8xbf16>
    %c1 = arith.constant 1 : index
    %c0_13 = arith.constant 0 : index
    %c0_14 = arith.constant 0 : index
    %30 = vector.load %arg4[%c1, %c0_13, %c0_14] : memref<9x8x64xbf16, #tpu.memory_space<vmem>>, vector<1x8x64xbf16>
    %31 = vector.shape_cast %30 : vector<1x8x64xbf16> to vector<8x64xbf16>
    %cst_15 = arith.constant dense<0.000000e+00> : vector<256x64xf32>
    %32 = tpu.matmul %29, %31, %cst_15 {dimension_numbers = #tpu.dot_dimension_numbers<[1], [0], [0], [1], [0, 0, 1, 1], [], []>} : vector<256x8xbf16>, vector<8x64xbf16>, vector<256x64xf32> -> vector<256x64xf32>
    %33 = arith.addf %26, %32 : vector<256x64xf32>
    %34 = vector.extract_strided_slice %27 {offsets = [1, 0, 0], sizes = [16, 16, 8], strides = [1, 1, 1]} : vector<18x16x8xbf16> to vector<16x16x8xbf16>
    %35 = vector.shape_cast %34 : vector<16x16x8xbf16> to vector<256x8xbf16>
    %c4 = arith.constant 4 : index
    %c0_16 = arith.constant 0 : index
    %c0_17 = arith.constant 0 : index
    %36 = vector.load %arg4[%c4, %c0_16, %c0_17] : memref<9x8x64xbf16, #tpu.memory_space<vmem>>, vector<1x8x64xbf16>
    %37 = vector.shape_cast %36 : vector<1x8x64xbf16> to vector<8x64xbf16>
    %cst_18 = arith.constant dense<0.000000e+00> : vector<256x64xf32>
    %38 = tpu.matmul %35, %37, %cst_18 {dimension_numbers = #tpu.dot_dimension_numbers<[1], [0], [0], [1], [0, 0, 1, 1], [], []>} : vector<256x8xbf16>, vector<8x64xbf16>, vector<256x64xf32> -> vector<256x64xf32>
    %39 = arith.addf %33, %38 : vector<256x64xf32>
    %40 = vector.extract_strided_slice %27 {offsets = [2, 0, 0], sizes = [16, 16, 8], strides = [1, 1, 1]} : vector<18x16x8xbf16> to vector<16x16x8xbf16>
    %41 = vector.shape_cast %40 : vector<16x16x8xbf16> to vector<256x8xbf16>
    %c7 = arith.constant 7 : index
    %c0_19 = arith.constant 0 : index
    %c0_20 = arith.constant 0 : index
    %42 = vector.load %arg4[%c7, %c0_19, %c0_20] : memref<9x8x64xbf16, #tpu.memory_space<vmem>>, vector<1x8x64xbf16>
    %43 = vector.shape_cast %42 : vector<1x8x64xbf16> to vector<8x64xbf16>
    %cst_21 = arith.constant dense<0.000000e+00> : vector<256x64xf32>
    %44 = tpu.matmul %41, %43, %cst_21 {dimension_numbers = #tpu.dot_dimension_numbers<[1], [0], [0], [1], [0, 0, 1, 1], [], []>} : vector<256x8xbf16>, vector<8x64xbf16>, vector<256x64xf32> -> vector<256x64xf32>
    %45 = arith.addf %39, %44 : vector<256x64xf32>
    %46 = vector.extract_strided_slice %4 {offsets = [0, 2, 0], sizes = [18, 16, 8], strides = [1, 1, 1]} : vector<18x18x8xbf16> to vector<18x16x8xbf16>
    %47 = vector.extract_strided_slice %46 {offsets = [0, 0, 0], sizes = [16, 16, 8], strides = [1, 1, 1]} : vector<18x16x8xbf16> to vector<16x16x8xbf16>
    %48 = vector.shape_cast %47 : vector<16x16x8xbf16> to vector<256x8xbf16>
    %c2 = arith.constant 2 : index
    %c0_22 = arith.constant 0 : index
    %c0_23 = arith.constant 0 : index
    %49 = vector.load %arg4[%c2, %c0_22, %c0_23] : memref<9x8x64xbf16, #tpu.memory_space<vmem>>, vector<1x8x64xbf16>
    %50 = vector.shape_cast %49 : vector<1x8x64xbf16> to vector<8x64xbf16>
    %cst_24 = arith.constant dense<0.000000e+00> : vector<256x64xf32>
    %51 = tpu.matmul %48, %50, %cst_24 {dimension_numbers = #tpu.dot_dimension_numbers<[1], [0], [0], [1], [0, 0, 1, 1], [], []>} : vector<256x8xbf16>, vector<8x64xbf16>, vector<256x64xf32> -> vector<256x64xf32>
    %52 = arith.addf %45, %51 : vector<256x64xf32>
    %53 = vector.extract_strided_slice %46 {offsets = [1, 0, 0], sizes = [16, 16, 8], strides = [1, 1, 1]} : vector<18x16x8xbf16> to vector<16x16x8xbf16>
    %54 = vector.shape_cast %53 : vector<16x16x8xbf16> to vector<256x8xbf16>
    %c5 = arith.constant 5 : index
    %c0_25 = arith.constant 0 : index
    %c0_26 = arith.constant 0 : index
    %55 = vector.load %arg4[%c5, %c0_25, %c0_26] : memref<9x8x64xbf16, #tpu.memory_space<vmem>>, vector<1x8x64xbf16>
    %56 = vector.shape_cast %55 : vector<1x8x64xbf16> to vector<8x64xbf16>
    %cst_27 = arith.constant dense<0.000000e+00> : vector<256x64xf32>
    %57 = tpu.matmul %54, %56, %cst_27 {dimension_numbers = #tpu.dot_dimension_numbers<[1], [0], [0], [1], [0, 0, 1, 1], [], []>} : vector<256x8xbf16>, vector<8x64xbf16>, vector<256x64xf32> -> vector<256x64xf32>
    %58 = arith.addf %52, %57 : vector<256x64xf32>
    %59 = vector.extract_strided_slice %46 {offsets = [2, 0, 0], sizes = [16, 16, 8], strides = [1, 1, 1]} : vector<18x16x8xbf16> to vector<16x16x8xbf16>
    %60 = vector.shape_cast %59 : vector<16x16x8xbf16> to vector<256x8xbf16>
    %c8 = arith.constant 8 : index
    %c0_28 = arith.constant 0 : index
    %c0_29 = arith.constant 0 : index
    %61 = vector.load %arg4[%c8, %c0_28, %c0_29] : memref<9x8x64xbf16, #tpu.memory_space<vmem>>, vector<1x8x64xbf16>
    %62 = vector.shape_cast %61 : vector<1x8x64xbf16> to vector<8x64xbf16>
    %cst_30 = arith.constant dense<0.000000e+00> : vector<256x64xf32>
    %63 = tpu.matmul %60, %62, %cst_30 {dimension_numbers = #tpu.dot_dimension_numbers<[1], [0], [0], [1], [0, 0, 1, 1], [], []>} : vector<256x8xbf16>, vector<8x64xbf16>, vector<256x64xf32> -> vector<256x64xf32>
    %64 = arith.addf %58, %63 : vector<256x64xf32>
    %cst_31 = arith.constant 0.000000e+00 : f32
    %65 = vector.broadcast %cst_31 : f32 to vector<256x64xf32>
    %66 = arith.maximumf %64, %65 : vector<256x64xf32>
    %67 = vector.shape_cast %66 : vector<256x64xf32> to vector<16x16x64xf32>
    %68 = arith.truncf %67 : vector<16x16x64xf32> to vector<16x16x64xbf16>
    %c0_32 = arith.constant 0 : index
    %c0_33 = arith.constant 0 : index
    %c0_34 = arith.constant 0 : index
    %c0_35 = arith.constant 0 : index
    %69 = vector.load %arg6[%c0_32, %c0_33, %c0_34, %c0_35] : memref<1x16x16x64xbf16, #tpu.memory_space<vmem>>, vector<1x16x16x64xbf16>
    %70 = vector.shape_cast %69 : vector<1x16x16x64xbf16> to vector<16x16x64xbf16>
    %71 = vector.shape_cast %68 : vector<16x16x64xbf16> to vector<1x16x16x64xbf16>
    tpu.vector_store %arg6[%c0_32, %c0_33, %c0_34, %c0_35], %71 {strides = array<i32>} : memref<1x16x16x64xbf16, #tpu.memory_space<vmem>>, vector<1x16x16x64xbf16>,
    return
  }
  func.func @transform_0(%arg0: i32, %arg1: i32, %arg2: i32) -> (i32, i32, i32, i32) {
    %c0_i32 = arith.constant 0 : i32
    %c0_i32_0 = arith.constant 0 : i32
    %c0_i32_1 = arith.constant 0 : i32
    %c0_i32_2 = arith.constant 0 : i32
    return %arg0, %c0_i32, %c0_i32_0, %c0_i32_1 : i32, i32, i32, i32
  }
  func.func @transform_1(%arg0: i32, %arg1: i32, %arg2: i32) -> (i32, i32, i32) {
    %c0_i32 = arith.constant 0 : i32
    %c0_i32_0 = arith.constant 0 : i32
    %c0_i32_1 = arith.constant 0 : i32
    return %c0_i32, %c0_i32_0, %arg1 : i32, i32, i32
  }
  func.func @transform_2(%arg0: i32, %arg1: i32, %arg2: i32) -> (i32, i32) {
    %c0_i32 = arith.constant 0 : i32
    %c0_i32_0 = arith.constant 0 : i32
    return %c0_i32, %arg1 : i32, i32
  }
  func.func @transform_3(%arg0: i32, %arg1: i32, %arg2: i32) -> (i32, i32, i32, i32) {
    %c0_i32 = arith.constant 0 : i32
    %c0_i32_0 = arith.constant 0 : i32
    return %arg0, %arg2, %c0_i32, %arg1 : i32, i32, i32, i32
  }
}

</mosaic_0001>

<llo_original>
// kernel: tpu_custom_call.1
$region0: #{tpu_custom_call.1}
  #allocation0 [shape = 'u32[]', space=smem, size = 0x4, offset = 0x4, fixed_abs, tag = 'smem constant byte address 0x4 - core index']
  #allocation1 [shape = 'u32[144,128]{1,0:T(1,128)}', space=vmem, size = 0x12000, scoped, tag = 'internal scratch']
  %s0 = inlined_call_operand.vmem [shape: bf16[2,18,18,8], index: 0, kind: input, shape index: {}]
  %s1 = inlined_call_operand.vmem [shape: bf16[9,8,64], index: 1, kind: input, shape index: {}]
  %s2 = inlined_call_operand.vmem [shape: f32[1,64], index: 2, kind: input, shape index: {}]
  %s3 = inlined_call_operand.hbm [shape: bf16[2,16,16,64], index: 3, kind: output, shape index: {}]
  %s4 = sld [smem:[#allocation0]]
  $region45: #{tpu_custom_call.1} parent=0
    _
  %s6 = ssub.s32 1, %s4
  %s7 = scalar_select 0, %s6, %s4
  $region1: #{tpu_custom_call.1} parent=0
    #allocation2 [shape = 'u8[131072]{0}', space=vmem, size = 0x20000, scoped, tag = 'output window, operand 0']
    #allocation3 [shape = 's32[2]{0}', space=sflag, size = 0x8, scoped, tag = 'scoped memory for tpu_custom_call.1']
    %8 = vsyncpa [#allocation3], 0
    %s9 = scalar_lea.sflag [#allocation3], 1
    %10 = vsyncpa %s9, 0
    loop: start=0, step=1, limit=4
    $region2: #{tpu_custom_call.1} parent=1 // loop_pre_header
      _
    $region3: #{tpu_custom_call.1} parent=1 // loop_header
      %s12 = sphi 0, %s16
      %p13 = scmp.ge.s32.totalorder %s12, 4
      %s19 = sphi 0, %s38
      %s20 = sphi 0, %s34
      %s21 = sphi 0, %s30
      %s22 = sphi 0, %s19
      %s23 = sphi 0, %s20
      %s24 = sphi 0, %s21
      %s25 = sphi 0, %s22
      %s26 = sphi 0, %s23
      %s27 = sphi 0, %s24
      %s41 = sphi 0, %s43
      %s44 = sphi 0, %s41
      %s45 = sphi 0, %s44
      %s61 = sphi 0, %s45
      %s67 = sphi 0, %s69
      %s70 = sphi 0, %s67
      %s71 = sphi 0, %s70
      %s87 = sphi 0, %s71
      %s93 = sphi 0, %s95
      %s96 = sphi 0, %s93
      %s97 = sphi 0, %s96
      %s113 = sphi 0, %s97
      %s123 = sphi 0, %s125
      %s126 = sphi 0, %s123
      %s127 = sphi 0, %s126
      %s143 = sphi 0, %s127
    $region4: #{tpu_custom_call.1} parent=1 // loop_header_branch
      %15 = sbr.rel (%p13) target = $region8
    $region5: #{tpu_custom_call.1} parent=1 // loop_body
      %s17 = ssub.s32 %s12, 1
      %s18 = ssub.s32 %s12, 2
      %s28 = sadd.s32 1, %s21
      %p29 = scmp.ge.s32.totalorder %s28, 1
      %s30 = scalar_select %p29, 0, %s28
      %s31 = sadd.s32 1, %s20
      %s32 = scalar_select %p29, %s31, %s20
      %p33 = scmp.ge.s32.totalorder %s32, 1
      %s34 = scalar_select %p33, 0, %s32
      %s35 = sadd.s32 1, %s19
      %s36 = scalar_select %p33, %s35, %s19
      %p37 = scmp.ge.s32.totalorder %s36, 2
      %s38 = scalar_select %p37, 0, %s36
      %s39 = ssub.s32 %s19, %s38
      %p40 = scmp.eq.s32.totalorder %s39, 0
      %s42 = sadd.s32 %s41, 1
      %s43 = scalar_select %p40, %s41, %s42
      %p46 = pneg %p40
      %p47 = scmp.eq.s32.totalorder %s12, 1
      %p48 = por %p46, %p47
      %p49 = scmp.ne.s32.totalorder %s41, %s44
      %p50 = scmp.eq.s32.totalorder %s12, 0
      %p51 = por %p49, %p50
      %p52 = scmp.ne.s32.totalorder %s41, %s44
      %p53 = scmp.eq.s32.totalorder %s17, 1
      %p54 = por %p52, %p53
      %p55 = scmp.ne.s32.totalorder %s44, %s45
      %p56 = scmp.eq.s32.totalorder %s17, 0
      %p57 = por %p55, %p56
      %p58 = scmp.ne.s32.totalorder %s44, %s45
      %p59 = scmp.eq.s32.totalorder %s18, 1
      %p60 = por %p58, %p59
      %p62 = scmp.ne.s32.totalorder %s45, %s61
      %p63 = scmp.eq.s32.totalorder %s18, 0
      %p64 = por %p62, %p63
      %s65 = ssub.s32 %s20, %s34
      %p66 = scmp.eq.s32.totalorder %s65, 0
      %s68 = sadd.s32 %s67, 1
      %s69 = scalar_select %p66, %s67, %s68
      %p72 = pneg %p66
      %p73 = scmp.eq.s32.totalorder %s12, 1
      %p74 = por %p72, %p73
      %p75 = scmp.ne.s32.totalorder %s67, %s70
      %p76 = scmp.eq.s32.totalorder %s12, 0
      %p77 = por %p75, %p76
      %p78 = scmp.ne.s32.totalorder %s67, %s70
      %p79 = scmp.eq.s32.totalorder %s17, 1
      %p80 = por %p78, %p79
      %p81 = scmp.ne.s32.totalorder %s70, %s71
      %p82 = scmp.eq.s32.totalorder %s17, 0
      %p83 = por %p81, %p82
      %p84 = scmp.ne.s32.totalorder %s70, %s71
      %p85 = scmp.eq.s32.totalorder %s18, 1
      %p86 = por %p84, %p85
      %p88 = scmp.ne.s32.totalorder %s71, %s87
      %p89 = scmp.eq.s32.totalorder %s18, 0
      %p90 = por %p88, %p89
      %s91 = ssub.s32 %s20, %s34
      %p92 = scmp.eq.s32.totalorder %s91, 0
      %s94 = sadd.s32 %s93, 1
      %s95 = scalar_select %p92, %s93, %s94
      %p98 = pneg %p92
      %p99 = scmp.eq.s32.totalorder %s12, 1
      %p100 = por %p98, %p99
      %p101 = scmp.ne.s32.totalorder %s93, %s96
      %p102 = scmp.eq.s32.totalorder %s12, 0
      %p103 = por %p101, %p102
      %p104 = scmp.ne.s32.totalorder %s93, %s96
      %p105 = scmp.eq.s32.totalorder %s17, 1
      %p106 = por %p104, %p105
      %p107 = scmp.ne.s32.totalorder %s96, %s97
      %p108 = scmp.eq.s32.totalorder %s17, 0
      %p109 = por %p107, %p108
      %p110 = scmp.ne.s32.totalorder %s96, %s97
      %p111 = scmp.eq.s32.totalorder %s18, 1
      %p112 = por %p110, %p111
      %p114 = scmp.ne.s32.totalorder %s97, %s113
      %p115 = scmp.eq.s32.totalorder %s18, 0
      %p116 = por %p114, %p115
      %s117 = ssub.s32 %s19, %s38
      %s118 = ssub.s32 %s21, %s30
      %s119 = sor.u32 %s117, %s118
      %s120 = ssub.s32 %s20, %s34
      %s121 = sor.u32 %s119, %s120
      %p122 = scmp.eq.s32.totalorder %s121, 0
      %s124 = sadd.s32 %s123, 1
      %s125 = scalar_select %p122, %s123, %s124
      %p128 = pneg %p122
      %p129 = scmp.eq.s32.totalorder %s12, 1
      %p130 = por %p128, %p129
      %p131 = scmp.ne.s32.totalorder %s123, %s126
      %p132 = scmp.eq.s32.totalorder %s12, 0
      %p133 = por %p131, %p132
      %p134 = scmp.ne.s32.totalorder %s123, %s126
      %p135 = scmp.eq.s32.totalorder %s17, 1
      %p136 = por %p134, %p135
      %p137 = scmp.ne.s32.totalorder %s126, %s127
      %p138 = scmp.eq.s32.totalorder %s17, 0
      %p139 = por %p137, %p138
      %p140 = scmp.ne.s32.totalorder %s126, %s127
      %p141 = scmp.eq.s32.totalorder %s18, 1
      %p142 = por %p140, %p141
      %p144 = scmp.ne.s32.totalorder %s127, %s143
      %p145 = scmp.eq.s32.totalorder %s18, 0
      %p146 = por %p144, %p145
      %p147 = scmp.le.s32.totalorder 1, %s12
      %p148 = scmp.lt.s32.totalorder %s12, 3
      %p149 = pnand %p147, %p148
      %p150 = pneg %p149
      // Predicated region
      $region9: #{tpu_custom_call.1} parent=5 // pred_check
        _
      $region10: #{tpu_custom_call.1} parent=5 // pred_check_branch
        %152 = sbr.rel (%p149) target = $region12
      $region11: #{tpu_custom_call.1} parent=5 // pred_region
        %s153 = ssub.s32 %s12, 1
        // Predicated region
        $region13: #{tpu_custom_call.1} parent=11 // pred_check
          %p154 = pneg %p83
        $region14: #{tpu_custom_call.1} parent=11 // pred_check_branch
          %156 = sbr.rel (%p154) target = $region16
        $region15: #{tpu_custom_call.1} parent=11 // pred_region
          %p157 = scmp.lt.s32.totalorder %s23, 0
          %s158 = scalar_select %p157, %s23, 0
          %s159 = smul.addr %s158, 4
          %s160 = scalar_lea.vmem %s1, %s159
        $region16: #{tpu_custom_call.1} parent=11 // pred_fallthru
          _
        // Predicated region
        $region17: #{tpu_custom_call.1} parent=11 // pred_check
          %p161 = pneg %p109
        $region18: #{tpu_custom_call.1} parent=11 // pred_check_branch
          %163 = sbr.rel (%p161) target = $region20
        $region19: #{tpu_custom_call.1} parent=11 // pred_region
          %p164 = scmp.lt.s32.totalorder %s23, 0
          %s165 = scalar_select %p164, %s23, 0
          %s166 = scalar_lea.vmem %s2, %s165
        $region20: #{tpu_custom_call.1} parent=11 // pred_fallthru
          _
      $region12: #{tpu_custom_call.1} parent=5 // pred_fallthru
        _
      %p167 = scmp.lt.s32.totalorder %s12, 2
      // Predicated region
      $region21: #{tpu_custom_call.1} parent=5 // pred_check
        %p168 = pneg %p167
      $region22: #{tpu_custom_call.1} parent=5 // pred_check_branch
        %170 = sbr.rel (%p168) target = $region24
      $region23: #{tpu_custom_call.1} parent=5 // pred_region
        // Predicated region
        $region25: #{tpu_custom_call.1} parent=23 // pred_check
          %p171 = pneg %p51
        $region26: #{tpu_custom_call.1} parent=23 // pred_check_branch
          %173 = sbr.rel (%p171) target = $region28
        $region27: #{tpu_custom_call.1} parent=23 // pred_region
          %p174 = scmp.lt.s32.totalorder %s19, 1
          %s175 = scalar_select %p174, %s19, 1
          %s176 = smul.addr %s175, 54
          %s177 = smul.addr %s176, 4
          %s178 = scalar_lea.vmem %s0, %s177
        $region28: #{tpu_custom_call.1} parent=23 // pred_fallthru
          _
      $region24: #{tpu_custom_call.1} parent=5 // pred_fallthru
        _
      %p179 = scmp.le.s32.totalorder 1, %s12
      %p180 = scmp.lt.s32.totalorder %s12, 3
      %p181 = pnand %p179, %p180
      %p182 = pneg %p181
      // Predicated region
      $region29: #{tpu_custom_call.1} parent=5 // pred_check
        _
      $region30: #{tpu_custom_call.1} parent=5 // pred_check_branch
        %184 = sbr.rel (%p181) target = $region32
      $region31: #{tpu_custom_call.1} parent=5 // pred_region
        %s185 = ssub.s32 %s12, 1
        %p186 = scmp.lt.s32.totalorder %s22, 1
        %s187 = scalar_select %p186, %s22, 1
        %s188 = smul.addr %s187, 54
        %s189 = smul.addr %s188, 4
        %s190 = scalar_lea.vmem %s0, %s189
        %p191 = pneg %p57
        %p192 = pneg %p54
        %p193 = scmp.lt.s32.totalorder %s23, 0
        %s194 = scalar_select %p193, %s23, 0
        %s195 = smul.addr %s194, 4
        %s196 = scalar_lea.vmem %s1, %s195
        %p197 = pneg %p83
        %p198 = pneg %p80
        %p199 = scmp.lt.s32.totalorder %s23, 0
        %s200 = scalar_select %p199, %s23, 0
        %s201 = scalar_lea.vmem %s2, %s200
        %p202 = pneg %p109
        %p203 = pneg %p106
        %p204 = pneg %p139
        %p205 = pneg %p136
        %s206 = sand.u32 %s126, 1
        %s207 = scalar_lea.sflag [#allocation3], %s206
        %s208 = sand.u32 %s126, 1
        %s209 = smul.addr %s208, 128
        %s210 = scalar_lea.vmem [#allocation2], %s209
        %p211 = scmp.lt.s32.totalorder %s22, 1
        %s212 = scalar_select %p211, %s22, 1
        %s213 = smul.addr %s212, 54
        %s214 = smul.addr %s213, 4
        %s215 = scalar_lea.vmem %s0, %s214
        %p216 = scmp.lt.s32.totalorder %s23, 0
        %s217 = scalar_select %p216, %s23, 0
        %s218 = smul.addr %s217, 4
        %s219 = scalar_lea.vmem %s1, %s218
        %p220 = scmp.lt.s32.totalorder %s23, 0
        %s221 = scalar_select %p220, %s23, 0
        %s222 = scalar_lea.vmem %s2, %s221
        %s223 = smul.u32 16, %s24
        %s225 = smul.u32 %s24, 16
        %s226 = smul.u32 %s225, 3
        %s227 = smul.addr %s226, 4
        %s228 = scalar_lea.vmem %s215, %s227
        %v229 = vld [vmem:[%s228] sm:$0xf]
        %v230 = vld [vmem:[%s228 + $0x4] sm:$0xf]
        %v231 = vld [vmem:[%s228 + $0x8] sm:$0x1]
        %v232 = vld [vmem:[%s228 + $0xc] sm:$0xf]
        %v233 = vld [vmem:[%s228 + $0x10] sm:$0xf]
        %v234 = vld [vmem:[%s228 + $0x14] sm:$0x1]
        %v235 = vld [vmem:[%s228 + $0x18] sm:$0xf]
        %v236 = vld [vmem:[%s228 + $0x1c] sm:$0xf]
        %v237 = vld [vmem:[%s228 + $0x20] sm:$0x1]
        %v238 = vld [vmem:[%s228 + $0x24] sm:$0xf]
        %v239 = vld [vmem:[%s228 + $0x28] sm:$0xf]
        %v240 = vld [vmem:[%s228 + $0x2c] sm:$0x1]
        %v241 = vld [vmem:[%s228 + $0x30] sm:$0xf]
        %v242 = vld [vmem:[%s228 + $0x34] sm:$0xf]
        %v243 = vld [vmem:[%s228 + $0x38] sm:$0x1]
        %v244 = vld [vmem:[%s228 + $0x3c] sm:$0xf]
        %v245 = vld [vmem:[%s228 + $0x40] sm:$0xf]
        %v246 = vld [vmem:[%s228 + $0x44] sm:$0x1]
        %v247 = vld [vmem:[%s228 + $0x48] sm:$0xf]
        %v248 = vld [vmem:[%s228 + $0x4c] sm:$0xf]
        %v249 = vld [vmem:[%s228 + $0x50] sm:$0x1]
        %v250 = vld [vmem:[%s228 + $0x54] sm:$0xf]
        %v251 = vld [vmem:[%s228 + $0x58] sm:$0xf]
        %v252 = vld [vmem:[%s228 + $0x5c] sm:$0x1]
        %v253 = vld [vmem:[%s228 + $0x60] sm:$0xf]
        %v254 = vld [vmem:[%s228 + $0x64] sm:$0xf]
        %v255 = vld [vmem:[%s228 + $0x68] sm:$0x1]
        %v256 = vld [vmem:[%s228 + $0x6c] sm:$0xf]
        %v257 = vld [vmem:[%s228 + $0x70] sm:$0xf]
        %v258 = vld [vmem:[%s228 + $0x74] sm:$0x1]
        %v259 = vld [vmem:[%s228 + $0x78] sm:$0xf]
        %v260 = vld [vmem:[%s228 + $0x7c] sm:$0xf]
        %v261 = vld [vmem:[%s228 + $0x80] sm:$0x1]
        %v262 = vld [vmem:[%s228 + $0x84] sm:$0xf]
        %v263 = vld [vmem:[%s228 + $0x88] sm:$0xf]
        %v264 = vld [vmem:[%s228 + $0x8c] sm:$0x1]
        %v265 = vld [vmem:[%s228 + $0x90] sm:$0xf]
        %v266 = vld [vmem:[%s228 + $0x94] sm:$0xf]
        %v267 = vld [vmem:[%s228 + $0x98] sm:$0x1]
        %v268 = vld [vmem:[%s228 + $0x9c] sm:$0xf]
        %v269 = vld [vmem:[%s228 + $0xa0] sm:$0xf]
        %v270 = vld [vmem:[%s228 + $0xa4] sm:$0x1]
        %v271 = vld [vmem:[%s228 + $0xa8] sm:$0xf]
        %v272 = vld [vmem:[%s228 + $0xac] sm:$0xf]
        %v273 = vld [vmem:[%s228 + $0xb0] sm:$0x1]
        %v274 = vld [vmem:[%s228 + $0xb4] sm:$0xf]
        %v275 = vld [vmem:[%s228 + $0xb8] sm:$0xf]
        %v276 = vld [vmem:[%s228 + $0xbc] sm:$0x1]
        %v277 = vld [vmem:[%s228 + $0xc0] sm:$0xf]
        %v278 = vld [vmem:[%s228 + $0xc4] sm:$0xf]
        %v279 = vld [vmem:[%s228 + $0xc8] sm:$0x1]
        %v280 = vld [vmem:[%s228 + $0xcc] sm:$0xf]
        %v281 = vld [vmem:[%s228 + $0xd0] sm:$0xf]
        %v282 = vld [vmem:[%s228 + $0xd4] sm:$0x1]
        %v283 = vld [vmem:[%s222] sm:$0x1]
        %v285 = vlaneseq
        %v286 = vshrl.u32 %v285, 7
        %v287 = vsub.s32 0, %v286
        %v288 = vrot.slane %v283, %v287
        %v290 = vld [vmem:[%s219] sm:$0xf]
        %v323 = vunpack.c.l.b16 %v229
        %v324 = vunpack.c.l.b16 %v230
        %v325 = vunpack.c.l.b16 %v232
        %v326 = vunpack.c.l.b16 %v233
        %v327 = vunpack.c.l.b16 %v235
        %v328 = vunpack.c.l.b16 %v236
        %v329 = vunpack.c.l.b16 %v238
        %v330 = vunpack.c.l.b16 %v239
        %v331 = vunpack.c.l.b16 %v241
        %v332 = vunpack.c.l.b16 %v242
        %v333 = vunpack.c.l.b16 %v244
        %v334 = vunpack.c.l.b16 %v245
        %v335 = vunpack.c.l.b16 %v247
        %v336 = vunpack.c.l.b16 %v248
        %v337 = vunpack.c.l.b16 %v250
        %v338 = vunpack.c.l.b16 %v251
        %v339 = vunpack.c.l.b16 %v253
        %v340 = vunpack.c.l.b16 %v254
        %v341 = vunpack.c.l.b16 %v256
        %v342 = vunpack.c.l.b16 %v257
        %v343 = vunpack.c.l.b16 %v259
        %v344 = vunpack.c.l.b16 %v260
        %v345 = vunpack.c.l.b16 %v262
        %v346 = vunpack.c.l.b16 %v263
        %v347 = vunpack.c.l.b16 %v265
        %v348 = vunpack.c.l.b16 %v266
        %v349 = vunpack.c.l.b16 %v268
        %v350 = vunpack.c.l.b16 %v269
        %v351 = vunpack.c.l.b16 %v271
        %v352 = vunpack.c.l.b16 %v272
        %v353 = vunpack.c.l.b16 %v274
        %v354 = vunpack.c.l.b16 %v275
        %v355 = vpack.c.b16 %v324, %v323
        %v356 = vpack.c.b16 %v326, %v325
        %v357 = vpack.c.b16 %v328, %v327
        %v358 = vpack.c.b16 %v330, %v329
        %v359 = vpack.c.b16 %v332, %v331
        %v360 = vpack.c.b16 %v334, %v333
        %v361 = vpack.c.b16 %v336, %v335
        %v362 = vpack.c.b16 %v338, %v337
        %v363 = vpack.c.b16 %v340, %v339
        %v364 = vpack.c.b16 %v342, %v341
        %v365 = vpack.c.b16 %v344, %v343
        %v366 = vpack.c.b16 %v346, %v345
        %v367 = vpack.c.b16 %v348, %v347
        %v368 = vpack.c.b16 %v350, %v349
        %v369 = vpack.c.b16 %v352, %v351
        %v370 = vpack.c.b16 %v354, %v353
        %vm371 = vcmask 64512
        %v373 = vsel %vm371, %v355, 0
        %v376 = vsel %vm371, %v356, 0
        %v379 = vsel %vm371, %v357, 0
        %v382 = vsel %vm371, %v358, 0
        %v385 = vsel %vm371, %v359, 0
        %v388 = vsel %vm371, %v360, 0
        %v391 = vsel %vm371, %v361, 0
        %v394 = vsel %vm371, %v362, 0
        %v397 = vsel %vm371, %v363, 0
        %v400 = vsel %vm371, %v364, 0
        %v403 = vsel %vm371, %v365, 0
        %v406 = vsel %vm371, %v366, 0
        %v409 = vsel %vm371, %v367, 0
        %v412 = vsel %vm371, %v368, 0
        %v415 = vsel %vm371, %v369, 0
        %v418 = vsel %vm371, %v370, 0
        %vm420 = vcmask 1043456
        %v422 = vsel %vm420, %v290, 0
        %424 = vmatprep.subr.bf16.mxu0 0
        %425 = vmatpush1.bf16.msra.mxu0 %v422
        %426 = vmatprep.subr.bf16.mxu0 0
        %427 = vmatpush1.bf16.msra.mxu0 0
        %428 = vmatprep.subr.bf16.mxu0 0
        %429 = vmatpush1.bf16.msra.mxu0 0
        %430 = vmatprep.subr.bf16.mxu0 0
        %431 = vmatpush1.bf16.msra.mxu0 0
        %432 = vmatprep.subr.bf16.mxu0 0
        %433 = vmatpush1.bf16.msra.mxu0 0
        %434 = vmatprep.subr.bf16.mxu0 0
        %435 = vmatpush1.bf16.msra.mxu0 0
        %436 = vmatprep.subr.bf16.mxu0 0
        %437 = vmatpush1.bf16.msra.mxu0 0
        %438 = vmatprep.subr.bf16.mxu0 0
        %439 = vmatpush1.bf16.msra.mxu0 0
        %440 = vmatprep.subr.bf16.mxu0 0
        %441 = vmatpush1.bf16.msra.mxu0 0
        %442 = vmatprep.subr.bf16.mxu0 0
        %443 = vmatpush1.bf16.msra.mxu0 0
        %444 = vmatprep.subr.bf16.mxu0 0
        %445 = vmatpush1.bf16.msra.mxu0 0
        %446 = vmatprep.subr.bf16.mxu0 0
        %447 = vmatpush1.bf16.msra.mxu0 0
        %448 = vmatprep.subr.bf16.mxu0 0
        %449 = vmatpush1.bf16.msra.mxu0 0
        %450 = vmatprep.subr.bf16.mxu0 0
        %451 = vmatpush1.bf16.msra.mxu0 0
        %452 = vmatprep.subr.bf16.mxu0 0
        %453 = vmatpush1.bf16.msra.mxu0 0
        %454 = vmatprep.subr.bf16.mxu0 0
        %455 = vmatpush1.bf16.msra.mxu0 0
        %456 = vmatprep.mubr.bf16.mxu0 0
        %457 = vmatmul.mubr.bf16.gmra.mrb[0].mxu0 %v373
        %v458 = vpop.f32.mrb[0].mxu0
        %v459 = vadd.f32 0.0, %v458
        %v460 = vpop.f32.mrb[0].mxu0
        %v461 = vpop.f32.mrb[0].mxu0
        %v462 = vadd.f32 0.0, %v461
        %v463 = vpop.f32.mrb[0].mxu0
        %464 = vmatprep.mubr.bf16.mxu0 0
        %465 = vmatmul.mubr.bf16.gmra.mrb[0].mxu0 %v376
        %v466 = vpop.f32.mrb[0].mxu0
        %v467 = vadd.f32 0.0, %v466
        %v468 = vpop.f32.mrb[0].mxu0
        %v469 = vpop.f32.mrb[0].mxu0
        %v470 = vadd.f32 0.0, %v469
        %v471 = vpop.f32.mrb[0].mxu0
        %472 = vmatprep.mubr.bf16.mxu0 0
        %473 = vmatmul.mubr.bf16.gmra.mrb[0].mxu0 %v379
        %v474 = vpop.f32.mrb[0].mxu0
        %v475 = vadd.f32 0.0, %v474
        %v476 = vpop.f32.mrb[0].mxu0
        %v477 = vpop.f32.mrb[0].mxu0
        %v478 = vadd.f32 0.0, %v477
        %v479 = vpop.f32.mrb[0].mxu0
        %480 = vmatprep.mubr.bf16.mxu0 0
        %481 = vmatmul.mubr.bf16.gmra.mrb[0].mxu0 %v382
        %v482 = vpop.f32.mrb[0].mxu0
        %v483 = vadd.f32 0.0, %v482
        %v484 = vpop.f32.mrb[0].mxu0
        %v485 = vpop.f32.mrb[0].mxu0
        %v486 = vadd.f32 0.0, %v485
        %v487 = vpop.f32.mrb[0].mxu0
        %488 = vmatprep.mubr.bf16.mxu0 0
        %489 = vmatmul.mubr.bf16.gmra.mrb[0].mxu0 %v385
        %v490 = vpop.f32.mrb[0].mxu0
        %v491 = vadd.f32 0.0, %v490
        %v492 = vpop.f32.mrb[0].mxu0
        %v493 = vpop.f32.mrb[0].mxu0
        %v494 = vadd.f32 0.0, %v493
        %v495 = vpop.f32.mrb[0].mxu0
        %496 = vmatprep.mubr.bf16.mxu0 0
        %497 = vmatmul.mubr.bf16.gmra.mrb[0].mxu0 %v388
        %v498 = vpop.f32.mrb[0].mxu0
        %v499 = vadd.f32 0.0, %v498
        %v500 = vpop.f32.mrb[0].mxu0
        %v501 = vpop.f32.mrb[0].mxu0
        %v502 = vadd.f32 0.0, %v501
        %v503 = vpop.f32.mrb[0].mxu0
        %504 = vmatprep.mubr.bf16.mxu0 0
        %505 = vmatmul.mubr.bf16.gmra.mrb[0].mxu0 %v391
        %v506 = vpop.f32.mrb[0].mxu0
        %v507 = vadd.f32 0.0, %v506
        %v508 = vpop.f32.mrb[0].mxu0
        %v509 = vpop.f32.mrb[0].mxu0
        %v510 = vadd.f32 0.0, %v509
        %v511 = vpop.f32.mrb[0].mxu0
        %512 = vmatprep.mubr.bf16.mxu0 0
        %513 = vmatmul.mubr.bf16.gmra.mrb[0].mxu0 %v394
        %v514 = vpop.f32.mrb[0].mxu0
        %v515 = vadd.f32 0.0, %v514
        %v516 = vpop.f32.mrb[0].mxu0
        %v517 = vpop.f32.mrb[0].mxu0
        %v518 = vadd.f32 0.0, %v517
        %v519 = vpop.f32.mrb[0].mxu0
        %520 = vmatprep.mubr.bf16.mxu0 0
        %521 = vmatmul.mubr.bf16.gmra.mrb[0].mxu0 %v397
        %v522 = vpop.f32.mrb[0].mxu0
        %v523 = vadd.f32 0.0, %v522
        %v524 = vpop.f32.mrb[0].mxu0
        %v525 = vpop.f32.mrb[0].mxu0
        %v526 = vadd.f32 0.0, %v525
        %v527 = vpop.f32.mrb[0].mxu0
        %528 = vmatprep.mubr.bf16.mxu0 0
        %529 = vmatmul.mubr.bf16.gmra.mrb[0].mxu0 %v400
        %v530 = vpop.f32.mrb[0].mxu0
        %v531 = vadd.f32 0.0, %v530
        %v532 = vpop.f32.mrb[0].mxu0
        %v533 = vpop.f32.mrb[0].mxu0
        %v534 = vadd.f32 0.0, %v533
        %v535 = vpop.f32.mrb[0].mxu0
        %536 = vmatprep.mubr.bf16.mxu0 0
        %537 = vmatmul.mubr.bf16.gmra.mrb[0].mxu0 %v403
        %v538 = vpop.f32.mrb[0].mxu0
        %v539 = vadd.f32 0.0, %v538
        %v540 = vpop.f32.mrb[0].mxu0
        %v541 = vpop.f32.mrb[0].mxu0
        %v542 = vadd.f32 0.0, %v541
        %v543 = vpop.f32.mrb[0].mxu0
        %544 = vmatprep.mubr.bf16.mxu0 0
        %545 = vmatmul.mubr.bf16.gmra.mrb[0].mxu0 %v406
        %v546 = vpop.f32.mrb[0].mxu0
        %v547 = vadd.f32 0.0, %v546
        %v548 = vpop.f32.mrb[0].mxu0
        %v549 = vpop.f32.mrb[0].mxu0
        %v550 = vadd.f32 0.0, %v549
        %v551 = vpop.f32.mrb[0].mxu0
        %552 = vmatprep.mubr.bf16.mxu0 0
        %553 = vmatmul.mubr.bf16.gmra.mrb[0].mxu0 %v409
        %v554 = vpop.f32.mrb[0].mxu0
        %v555 = vadd.f32 0.0, %v554
        %v556 = vpop.f32.mrb[0].mxu0
        %v557 = vpop.f32.mrb[0].mxu0
        %v558 = vadd.f32 0.0, %v557
        %v559 = vpop.f32.mrb[0].mxu0
        %560 = vmatprep.mubr.bf16.mxu0 0
        %561 = vmatmul.mubr.bf16.gmra.mrb[0].mxu0 %v412
        %v562 = vpop.f32.mrb[0].mxu0
        %v563 = vadd.f32 0.0, %v562
        %v564 = vpop.f32.mrb[0].mxu0
        %v565 = vpop.f32.mrb[0].mxu0
        %v566 = vadd.f32 0.0, %v565
        %v567 = vpop.f32.mrb[0].mxu0
        %568 = vmatprep.mubr.bf16.mxu0 0
        %569 = vmatmul.mubr.bf16.gmra.mrb[0].mxu0 %v415
        %v570 = vpop.f32.mrb[0].mxu0
        %v571 = vadd.f32 0.0, %v570
        %v572 = vpop.f32.mrb[0].mxu0
        %v573 = vpop.f32.mrb[0].mxu0
        %v574 = vadd.f32 0.0, %v573
        %v575 = vpop.f32.mrb[0].mxu0
        %576 = vmatprep.mubr.bf16.mxu0 0
        %577 = vmatmul.mubr.bf16.gmra.mrb[0].mxu0 %v418
        %v578 = vpop.f32.mrb[0].mxu0
        %v579 = vadd.f32 0.0, %v578
        %v580 = vpop.f32.mrb[0].mxu0
        %v581 = vpop.f32.mrb[0].mxu0
        %v582 = vadd.f32 0.0, %v581
        %v583 = vpop.f32.mrb[0].mxu0
        %584 = vdwg.mxu0
        %v585 = vadd.f32 %v288, %v459
        %v586 = vadd.f32 %v288, %v462
        %v587 = vadd.f32 %v288, %v467
        %v588 = vadd.f32 %v288, %v470
        %v589 = vadd.f32 %v288, %v475
        %v590 = vadd.f32 %v288, %v478
        %v591 = vadd.f32 %v288, %v483
        %v592 = vadd.f32 %v288, %v486
        %v593 = vadd.f32 %v288, %v491
        %v594 = vadd.f32 %v288, %v494
        %v595 = vadd.f32 %v288, %v499
        %v596 = vadd.f32 %v288, %v502
        %v597 = vadd.f32 %v288, %v507
        %v598 = vadd.f32 %v288, %v510
        %v599 = vadd.f32 %v288, %v515
        %v600 = vadd.f32 %v288, %v518
        %v601 = vadd.f32 %v288, %v523
        %v602 = vadd.f32 %v288, %v526
        %v603 = vadd.f32 %v288, %v531
        %v604 = vadd.f32 %v288, %v534
        %v605 = vadd.f32 %v288, %v539
        %v606 = vadd.f32 %v288, %v542
        %v607 = vadd.f32 %v288, %v547
        %v608 = vadd.f32 %v288, %v550
        %v609 = vadd.f32 %v288, %v555
        %v610 = vadd.f32 %v288, %v558
        %v611 = vadd.f32 %v288, %v563
        %v612 = vadd.f32 %v288, %v566
        %v613 = vadd.f32 %v288, %v571
        %v614 = vadd.f32 %v288, %v574
        %v615 = vadd.f32 %v288, %v579
        %v616 = vadd.f32 %v288, %v582
        %s617 = scalar_lea.vmem %s219, 12
        %v618 = vld [vmem:[%s617] sm:$0xf]
        %v621 = vunpack.c.l.b16 %v277
        %v622 = vunpack.c.l.b16 %v278
        %v623 = vpack.c.b16 %v622, %v621
        %v625 = vsel %vm371, %v623, 0
        %v628 = vsel %vm420, %v618, 0
        %630 = vmatprep.subr.bf16.mxu0 0
        %631 = vmatpush1.bf16.msra.mxu0 %v628
        %632 = vmatprep.subr.bf16.mxu0 0
        %633 = vmatpush1.bf16.msra.mxu0 0
        %634 = vmatprep.subr.bf16.mxu0 0
        %635 = vmatpush1.bf16.msra.mxu0 0
        %636 = vmatprep.subr.bf16.mxu0 0
        %637 = vmatpush1.bf16.msra.mxu0 0
        %638 = vmatprep.subr.bf16.mxu0 0
        %639 = vmatpush1.bf16.msra.mxu0 0
        %640 = vmatprep.subr.bf16.mxu0 0
        %641 = vmatpush1.bf16.msra.mxu0 0
        %642 = vmatprep.subr.bf16.mxu0 0
        %643 = vmatpush1.bf16.msra.mxu0 0
        %644 = vmatprep.subr.bf16.mxu0 0
        %645 = vmatpush1.bf16.msra.mxu0 0
        %646 = vmatprep.subr.bf16.mxu0 0
        %647 = vmatpush1.bf16.msra.mxu0 0
        %648 = vmatprep.subr.bf16.mxu0 0
        %649 = vmatpush1.bf16.msra.mxu0 0
        %650 = vmatprep.subr.bf16.mxu0 0
        %651 = vmatpush1.bf16.msra.mxu0 0
        %652 = vmatprep.subr.bf16.mxu0 0
        %653 = vmatpush1.bf16.msra.mxu0 0
        %654 = vmatprep.subr.bf16.mxu0 0
        %655 = vmatpush1.bf16.msra.mxu0 0
        %656 = vmatprep.subr.bf16.mxu0 0
        %657 = vmatpush1.bf16.msra.mxu0 0
        %658 = vmatprep.subr.bf16.mxu0 0
        %659 = vmatpush1.bf16.msra.mxu0 0
        %660 = vmatprep.subr.bf16.mxu0 0
        %661 = vmatpush1.bf16.msra.mxu0 0
        %662 = vmatprep.mubr.bf16.mxu0 0
        %663 = vmatmul.mubr.bf16.gmra.mrb[0].mxu0 %v376
        %v664 = vpop.f32.mrb[0].mxu0
        %v665 = vadd.f32 0.0, %v664
        %v666 = vpop.f32.mrb[0].mxu0
        %v667 = vpop.f32.mrb[0].mxu0
        %v668 = vadd.f32 0.0, %v667
        %v669 = vpop.f32.mrb[0].mxu0
        %670 = vmatprep.mubr.bf16.mxu0 0
        %671 = vmatmul.mubr.bf16.gmra.mrb[0].mxu0 %v379
        %v672 = vpop.f32.mrb[0].mxu0
        %v673 = vadd.f32 0.0, %v672
        %v674 = vpop.f32.mrb[0].mxu0
        %v675 = vpop.f32.mrb[0].mxu0
        %v676 = vadd.f32 0.0, %v675
        %v677 = vpop.f32.mrb[0].mxu0
        %678 = vmatprep.mubr.bf16.mxu0 0
        %679 = vmatmul.mubr.bf16.gmra.mrb[0].mxu0 %v382
        %v680 = vpop.f32.mrb[0].mxu0
        %v681 = vadd.f32 0.0, %v680
        %v682 = vpop.f32.mrb[0].mxu0
        %v683 = vpop.f32.mrb[0].mxu0
        %v684 = vadd.f32 0.0, %v683
        %v685 = vpop.f32.mrb[0].mxu0
        %686 = vmatprep.mubr.bf16.mxu0 0
        %687 = vmatmul.mubr.bf16.gmra.mrb[0].mxu0 %v385
        %v688 = vpop.f32.mrb[0].mxu0
        %v689 = vadd.f32 0.0, %v688
        %v690 = vpop.f32.mrb[0].mxu0
        %v691 = vpop.f32.mrb[0].mxu0
        %v692 = vadd.f32 0.0, %v691
        %v693 = vpop.f32.mrb[0].mxu0
        %694 = vmatprep.mubr.bf16.mxu0 0
        %695 = vmatmul.mubr.bf16.gmra.mrb[0].mxu0 %v388
        %v696 = vpop.f32.mrb[0].mxu0
        %v697 = vadd.f32 0.0, %v696
        %v698 = vpop.f32.mrb[0].mxu0
        %v699 = vpop.f32.mrb[0].mxu0
        %v700 = vadd.f32 0.0, %v699
        %v701 = vpop.f32.mrb[0].mxu0
        %702 = vmatprep.mubr.bf16.mxu0 0
        %703 = vmatmul.mubr.bf16.gmra.mrb[0].mxu0 %v391
        %v704 = vpop.f32.mrb[0].mxu0
        %v705 = vadd.f32 0.0, %v704
        %v706 = vpop.f32.mrb[0].mxu0
        %v707 = vpop.f32.mrb[0].mxu0
        %v708 = vadd.f32 0.0, %v707
        %v709 = vpop.f32.mrb[0].mxu0
        %710 = vmatprep.mubr.bf16.mxu0 0
        %711 = vmatmul.mubr.bf16.gmra.mrb[0].mxu0 %v394
        %v712 = vpop.f32.mrb[0].mxu0
        %v713 = vadd.f32 0.0, %v712
        %v714 = vpop.f32.mrb[0].mxu0
        %v715 = vpop.f32.mrb[0].mxu0
        %v716 = vadd.f32 0.0, %v715
        %v717 = vpop.f32.mrb[0].mxu0
        %718 = vmatprep.mubr.bf16.mxu0 0
        %719 = vmatmul.mubr.bf16.gmra.mrb[0].mxu0 %v397
        %v720 = vpop.f32.mrb[0].mxu0
        %v721 = vadd.f32 0.0, %v720
        %v722 = vpop.f32.mrb[0].mxu0
        %v723 = vpop.f32.mrb[0].mxu0
        %v724 = vadd.f32 0.0, %v723
        %v725 = vpop.f32.mrb[0].mxu0
        %726 = vmatprep.mubr.bf16.mxu0 0
        %727 = vmatmul.mubr.bf16.gmra.mrb[0].mxu0 %v400
        %v728 = vpop.f32.mrb[0].mxu0
        %v729 = vadd.f32 0.0, %v728
        %v730 = vpop.f32.mrb[0].mxu0
        %v731 = vpop.f32.mrb[0].mxu0
        %v732 = vadd.f32 0.0, %v731
        %v733 = vpop.f32.mrb[0].mxu0
        %734 = vmatprep.mubr.bf16.mxu0 0
        %735 = vmatmul.mubr.bf16.gmra.mrb[0].mxu0 %v403
        %v736 = vpop.f32.mrb[0].mxu0
        %v737 = vadd.f32 0.0, %v736
        %v738 = vpop.f32.mrb[0].mxu0
        %v739 = vpop.f32.mrb[0].mxu0
        %v740 = vadd.f32 0.0, %v739
        %v741 = vpop.f32.mrb[0].mxu0
        %742 = vmatprep.mubr.bf16.mxu0 0
        %743 = vmatmul.mubr.bf16.gmra.mrb[0].mxu0 %v406
        %v744 = vpop.f32.mrb[0].mxu0
        %v745 = vadd.f32 0.0, %v744
        %v746 = vpop.f32.mrb[0].mxu0
        %v747 = vpop.f32.mrb[0].mxu0
        %v748 = vadd.f32 0.0, %v747
        %v749 = vpop.f32.mrb[0].mxu0
        %750 = vmatprep.mubr.bf16.mxu0 0
        %751 = vmatmul.mubr.bf16.gmra.mrb[0].mxu0 %v409
        %v752 = vpop.f32.mrb[0].mxu0
        %v753 = vadd.f32 0.0, %v752
        %v754 = vpop.f32.mrb[0].mxu0
        %v755 = vpop.f32.mrb[0].mxu0
        %v756 = vadd.f32 0.0, %v755
        %v757 = vpop.f32.mrb[0].mxu0
        %758 = vmatprep.mubr.bf16.mxu0 0
        %759 = vmatmul.mubr.bf16.gmra.mrb[0].mxu0 %v412
        %v760 = vpop.f32.mrb[0].mxu0
        %v761 = vadd.f32 0.0, %v760
        %v762 = vpop.f32.mrb[0].mxu0
        %v763 = vpop.f32.mrb[0].mxu0
        %v764 = vadd.f32 0.0, %v763
        %v765 = vpop.f32.mrb[0].mxu0
        %766 = vmatprep.mubr.bf16.mxu0 0
        %767 = vmatmul.mubr.bf16.gmra.mrb[0].mxu0 %v415
        %v768 = vpop.f32.mrb[0].mxu0
        %v769 = vadd.f32 0.0, %v768
        %v770 = vpop.f32.mrb[0].mxu0
        %v771 = vpop.f32.mrb[0].mxu0
        %v772 = vadd.f32 0.0, %v771
        %v773 = vpop.f32.mrb[0].mxu0
        %774 = vmatprep.mubr.bf16.mxu0 0
        %775 = vmatmul.mubr.bf16.gmra.mrb[0].mxu0 %v418
        %v776 = vpop.f32.mrb[0].mxu0
        %v777 = vadd.f32 0.0, %v776
        %v778 = vpop.f32.mrb[0].mxu0
        %v779 = vpop.f32.mrb[0].mxu0
        %v780 = vadd.f32 0.0, %v779
        %v781 = vpop.f32.mrb[0].mxu0
        %782 = vmatprep.mubr.bf16.mxu0 0
        %783 = vmatmul.mubr.bf16.gmra.mrb[0].mxu0 %v625
        %v784 = vpop.f32.mrb[0].mxu0
        %v785 = vadd.f32 0.0, %v784
        %v786 = vpop.f32.mrb[0].mxu0
        %v787 = vpop.f32.mrb[0].mxu0
        %v788 = vadd.f32 0.0, %v787
        %v789 = vpop.f32.mrb[0].mxu0
        %790 = vdwg.mxu0
        %v791 = vadd.f32 %v585, %v665
        %v792 = vadd.f32 %v586, %v668
        %v793 = vadd.f32 %v587, %v673
        %v794 = vadd.f32 %v588, %v676
        %v795 = vadd.f32 %v589, %v681
        %v796 = vadd.f32 %v590, %v684
        %v797 = vadd.f32 %v591, %v689
        %v798 = vadd.f32 %v592, %v692
        %v799 = vadd.f32 %v593, %v697
        %v800 = vadd.f32 %v594, %v700
        %v801 = vadd.f32 %v595, %v705
        %v802 = vadd.f32 %v596, %v708
        %v803 = vadd.f32 %v597, %v713
        %v804 = vadd.f32 %v598, %v716
        %v805 = vadd.f32 %v599, %v721
        %v806 = vadd.f32 %v600, %v724
        %v807 = vadd.f32 %v601, %v729
        %v808 = vadd.f32 %v602, %v732
        %v809 = vadd.f32 %v603, %v737
        %v810 = vadd.f32 %v604, %v740
        %v811 = vadd.f32 %v605, %v745
        %v812 = vadd.f32 %v606, %v748
        %v813 = vadd.f32 %v607, %v753
        %v814 = vadd.f32 %v608, %v756
        %v815 = vadd.f32 %v609, %v761
        %v816 = vadd.f32 %v610, %v764
        %v817 = vadd.f32 %v611, %v769
        %v818 = vadd.f32 %v612, %v772
        %v819 = vadd.f32 %v613, %v777
        %v820 = vadd.f32 %v614, %v780
        %v821 = vadd.f32 %v615, %v785
        %v822 = vadd.f32 %v616, %v788
        %s823 = scalar_lea.vmem %s219, 24
        %v824 = vld [vmem:[%s823] sm:$0xf]
        %v827 = vunpack.c.l.b16 %v280
        %v828 = vunpack.c.l.b16 %v281
        %v829 = vpack.c.b16 %v828, %v827
        %v831 = vsel %vm371, %v829, 0
        %v834 = vsel %vm420, %v824, 0
        %836 = vmatprep.subr.bf16.mxu0 0
        %837 = vmatpush1.bf16.msra.mxu0 %v834
        %838 = vmatprep.subr.bf16.mxu0 0
        %839 = vmatpush1.bf16.msra.mxu0 0
        %840 = vmatprep.subr.bf16.mxu0 0
        %841 = vmatpush1.bf16.msra.mxu0 0
        %842 = vmatprep.subr.bf16.mxu0 0
        %843 = vmatpush1.bf16.msra.mxu0 0
        %844 = vmatprep.subr.bf16.mxu0 0
        %845 = vmatpush1.bf16.msra.mxu0 0
        %846 = vmatprep.subr.bf16.mxu0 0
        %847 = vmatpush1.bf16.msra.mxu0 0
        %848 = vmatprep.subr.bf16.mxu0 0
        %849 = vmatpush1.bf16.msra.mxu0 0
        %850 = vmatprep.subr.bf16.mxu0 0
        %851 = vmatpush1.bf16.msra.mxu0 0
        %852 = vmatprep.subr.bf16.mxu0 0
        %853 = vmatpush1.bf16.msra.mxu0 0
        %854 = vmatprep.subr.bf16.mxu0 0
        %855 = vmatpush1.bf16.msra.mxu0 0
        %856 = vmatprep.subr.bf16.mxu0 0
        %857 = vmatpush1.bf16.msra.mxu0 0
        %858 = vmatprep.subr.bf16.mxu0 0
        %859 = vmatpush1.bf16.msra.mxu0 0
        %860 = vmatprep.subr.bf16.mxu0 0
        %861 = vmatpush1.bf16.msra.mxu0 0
        %862 = vmatprep.subr.bf16.mxu0 0
        %863 = vmatpush1.bf16.msra.mxu0 0
        %864 = vmatprep.subr.bf16.mxu0 0
        %865 = vmatpush1.bf16.msra.mxu0 0
        %866 = vmatprep.subr.bf16.mxu0 0
        %867 = vmatpush1.bf16.msra.mxu0 0
        %868 = vmatprep.mubr.bf16.mxu0 0
        %869 = vmatmul.mubr.bf16.gmra.mrb[0].mxu0 %v379
        %v870 = vpop.f32.mrb[0].mxu0
        %v871 = vadd.f32 0.0, %v870
        %v872 = vpop.f32.mrb[0].mxu0
        %v873 = vpop.f32.mrb[0].mxu0
        %v874 = vadd.f32 0.0, %v873
        %v875 = vpop.f32.mrb[0].mxu0
        %876 = vmatprep.mubr.bf16.mxu0 0
        %877 = vmatmul.mubr.bf16.gmra.mrb[0].mxu0 %v382
        %v878 = vpop.f32.mrb[0].mxu0
        %v879 = vadd.f32 0.0, %v878
        %v880 = vpop.f32.mrb[0].mxu0
        %v881 = vpop.f32.mrb[0].mxu0
        %v882 = vadd.f32 0.0, %v881
        %v883 = vpop.f32.mrb[0].mxu0
        %884 = vmatprep.mubr.bf16.mxu0 0
        %885 = vmatmul.mubr.bf16.gmra.mrb[0].mxu0 %v385
        %v886 = vpop.f32.mrb[0].mxu0
        %v887 = vadd.f32 0.0, %v886
        %v888 = vpop.f32.mrb[0].mxu0
        %v889 = vpop.f32.mrb[0].mxu0
        %v890 = vadd.f32 0.0, %v889
        %v891 = vpop.f32.mrb[0].mxu0
        %892 = vmatprep.mubr.bf16.mxu0 0
        %893 = vmatmul.mubr.bf16.gmra.mrb[0].mxu0 %v388
        %v894 = vpop.f32.mrb[0].mxu0
        %v895 = vadd.f32 0.0, %v894
        %v896 = vpop.f32.mrb[0].mxu0
        %v897 = vpop.f32.mrb[0].mxu0
        %v898 = vadd.f32 0.0, %v897
        %v899 = vpop.f32.mrb[0].mxu0
        %900 = vmatprep.mubr.bf16.mxu0 0
        %901 = vmatmul.mubr.bf16.gmra.mrb[0].mxu0 %v391
        %v902 = vpop.f32.mrb[0].mxu0
        %v903 = vadd.f32 0.0, %v902
        %v904 = vpop.f32.mrb[0].mxu0
        %v905 = vpop.f32.mrb[0].mxu0
        %v906 = vadd.f32 0.0, %v905
        %v907 = vpop.f32.mrb[0].mxu0
        %908 = vmatprep.mubr.bf16.mxu0 0
        %909 = vmatmul.mubr.bf16.gmra.mrb[0].mxu0 %v394
        %v910 = vpop.f32.mrb[0].mxu0
        %v911 = vadd.f32 0.0, %v910
        %v912 = vpop.f32.mrb[0].mxu0
        %v913 = vpop.f32.mrb[0].mxu0
        %v914 = vadd.f32 0.0, %v913
        %v915 = vpop.f32.mrb[0].mxu0
        %916 = vmatprep.mubr.bf16.mxu0 0
        %917 = vmatmul.mubr.bf16.gmra.mrb[0].mxu0 %v397
        %v918 = vpop.f32.mrb[0].mxu0
        %v919 = vadd.f32 0.0, %v918
        %v920 = vpop.f32.mrb[0].mxu0
        %v921 = vpop.f32.mrb[0].mxu0
        %v922 = vadd.f32 0.0, %v921
        %v923 = vpop.f32.mrb[0].mxu0
        %924 = vmatprep.mubr.bf16.mxu0 0
        %925 = vmatmul.mubr.bf16.gmra.mrb[0].mxu0 %v400
        %v926 = vpop.f32.mrb[0].mxu0
        %v927 = vadd.f32 0.0, %v926
        %v928 = vpop.f32.mrb[0].mxu0
        %v929 = vpop.f32.mrb[0].mxu0
        %v930 = vadd.f32 0.0, %v929
        %v931 = vpop.f32.mrb[0].mxu0
        %932 = vmatprep.mubr.bf16.mxu0 0
        %933 = vmatmul.mubr.bf16.gmra.mrb[0].mxu0 %v403
        %v934 = vpop.f32.mrb[0].mxu0
        %v935 = vadd.f32 0.0, %v934
        %v936 = vpop.f32.mrb[0].mxu0
        %v937 = vpop.f32.mrb[0].mxu0
        %v938 = vadd.f32 0.0, %v937
        %v939 = vpop.f32.mrb[0].mxu0
        %940 = vmatprep.mubr.bf16.mxu0 0
        %941 = vmatmul.mubr.bf16.gmra.mrb[0].mxu0 %v406
        %v942 = vpop.f32.mrb[0].mxu0
        %v943 = vadd.f32 0.0, %v942
        %v944 = vpop.f32.mrb[0].mxu0
        %v945 = vpop.f32.mrb[0].mxu0
        %v946 = vadd.f32 0.0, %v945
        %v947 = vpop.f32.mrb[0].mxu0
        %948 = vmatprep.mubr.bf16.mxu0 0
        %949 = vmatmul.mubr.bf16.gmra.mrb[0].mxu0 %v409
        %v950 = vpop.f32.mrb[0].mxu0
        %v951 = vadd.f32 0.0, %v950
        %v952 = vpop.f32.mrb[0].mxu0
        %v953 = vpop.f32.mrb[0].mxu0
        %v954 = vadd.f32 0.0, %v953
        %v955 = vpop.f32.mrb[0].mxu0
        %956 = vmatprep.mubr.bf16.mxu0 0
        %957 = vmatmul.mubr.bf16.gmra.mrb[0].mxu0 %v412
        %v958 = vpop.f32.mrb[0].mxu0
        %v959 = vadd.f32 0.0, %v958
        %v960 = vpop.f32.mrb[0].mxu0
        %v961 = vpop.f32.mrb[0].mxu0
        %v962 = vadd.f32 0.0, %v961
        %v963 = vpop.f32.mrb[0].mxu0
        %964 = vmatprep.mubr.bf16.mxu0 0
        %965 = vmatmul.mubr.bf16.gmra.mrb[0].mxu0 %v415
        %v966 = vpop.f32.mrb[0].mxu0
        %v967 = vadd.f32 0.0, %v966
        %v968 = vpop.f32.mrb[0].mxu0
        %v969 = vpop.f32.mrb[0].mxu0
        %v970 = vadd.f32 0.0, %v969
        %v971 = vpop.f32.mrb[0].mxu0
        %972 = vmatprep.mubr.bf16.mxu0 0
        %973 = vmatmul.mubr.bf16.gmra.mrb[0].mxu0 %v418
        %v974 = vpop.f32.mrb[0].mxu0
        %v975 = vadd.f32 0.0, %v974
        %v976 = vpop.f32.mrb[0].mxu0
        %v977 = vpop.f32.mrb[0].mxu0
        %v978 = vadd.f32 0.0, %v977
        %v979 = vpop.f32.mrb[0].mxu0
        %980 = vmatprep.mubr.bf16.mxu0 0
        %981 = vmatmul.mubr.bf16.gmra.mrb[0].mxu0 %v625
        %v982 = vpop.f32.mrb[0].mxu0
        %v983 = vadd.f32 0.0, %v982
        %v984 = vpop.f32.mrb[0].mxu0
        %v985 = vpop.f32.mrb[0].mxu0
        %v986 = vadd.f32 0.0, %v985
        %v987 = vpop.f32.mrb[0].mxu0
        %988 = vmatprep.mubr.bf16.mxu0 0
        %989 = vmatmul.mubr.bf16.gmra.mrb[0].mxu0 %v831
        %v990 = vpop.f32.mrb[0].mxu0
        %v991 = vadd.f32 0.0, %v990
        %v992 = vpop.f32.mrb[0].mxu0
        %v993 = vpop.f32.mrb[0].mxu0
        %v994 = vadd.f32 0.0, %v993
        %v995 = vpop.f32.mrb[0].mxu0
        %996 = vdwg.mxu0
        %v997 = vadd.f32 %v791, %v871
        %v998 = vadd.f32 %v792, %v874
        %v999 = vadd.f32 %v793, %v879
        %v1000 = vadd.f32 %v794, %v882
        %v1001 = vadd.f32 %v795, %v887
        %v1002 = vadd.f32 %v796, %v890
        %v1003 = vadd.f32 %v797, %v895
        %v1004 = vadd.f32 %v798, %v898
        %v1005 = vadd.f32 %v799, %v903
        %v1006 = vadd.f32 %v800, %v906
        %v1007 = vadd.f32 %v801, %v911
        %v1008 = vadd.f32 %v802, %v914
        %v1009 = vadd.f32 %v803, %v919
        %v1010 = vadd.f32 %v804, %v922
        %v1011 = vadd.f32 %v805, %v927
        %v1012 = vadd.f32 %v806, %v930
        %v1013 = vadd.f32 %v807, %v935
        %v1014 = vadd.f32 %v808, %v938
        %v1015 = vadd.f32 %v809, %v943
        %v1016 = vadd.f32 %v810, %v946
        %v1017 = vadd.f32 %v811, %v951
        %v1018 = vadd.f32 %v812, %v954
        %v1019 = vadd.f32 %v813, %v959
        %v1020 = vadd.f32 %v814, %v962
        %v1021 = vadd.f32 %v815, %v967
        %v1022 = vadd.f32 %v816, %v970
        %v1023 = vadd.f32 %v817, %v975
        %v1024 = vadd.f32 %v818, %v978
        %v1025 = vadd.f32 %v819, %v983
        %v1026 = vadd.f32 %v820, %v986
        %v1027 = vadd.f32 %v821, %v991
        %v1028 = vadd.f32 %v822, %v994
        %vm1029 = vsmask.f32 3328
        %vm1030 = vsmask.f32 7440
        %vm1031 = vmor %vm1029, %vm1030
        %v1033 = vshrl.u32 %v229, 16
        %v1035 = vrot.slane %v1033, 4
        %v1036 = vshll.u32 %v229, 16
        %v1038 = vrot.slane %v1036, 5
        %v1039 = vor.u32 %v1035, %v1038
        %v1040 = vrot.slane %v1039, 4
        %v1042 = vshll.u32 %v230, 16
        %v1044 = vrot.slane %v1042, 5
        %v1045 = vsel %vm1031, %v1040, %v1044
        %v1046 = vshrl.u32 %v230, 16
        %v1048 = vrot.slane %v1046, 4
        %v1049 = vor.u32 %v1048, %v1044
        %v1050 = vrot.slane %v1049, 4
        %v1052 = vshll.u32 %v231, 16
        %v1054 = vrot.slane %v1052, 5
        %v1055 = vsel %vm1031, %v1050, %v1054
        %v1057 = vshrl.u32 %v232, 16
        %v1059 = vrot.slane %v1057, 4
        %v1060 = vshll.u32 %v232, 16
        %v1062 = vrot.slane %v1060, 5
        %v1063 = vor.u32 %v1059, %v1062
        %v1064 = vrot.slane %v1063, 4
        %v1066 = vshll.u32 %v233, 16
        %v1068 = vrot.slane %v1066, 5
        %v1069 = vsel %vm1031, %v1064, %v1068
        %v1070 = vshrl.u32 %v233, 16
        %v1072 = vrot.slane %v1070, 4
        %v1073 = vor.u32 %v1072, %v1068
        %v1074 = vrot.slane %v1073, 4
        %v1076 = vshll.u32 %v234, 16
        %v1078 = vrot.slane %v1076, 5
        %v1079 = vsel %vm1031, %v1074, %v1078
        %v1081 = vshrl.u32 %v235, 16
        %v1083 = vrot.slane %v1081, 4
        %v1084 = vshll.u32 %v235, 16
        %v1086 = vrot.slane %v1084, 5
        %v1087 = vor.u32 %v1083, %v1086
        %v1088 = vrot.slane %v1087, 4
        %v1090 = vshll.u32 %v236, 16
        %v1092 = vrot.slane %v1090, 5
        %v1093 = vsel %vm1031, %v1088, %v1092
        %v1094 = vshrl.u32 %v236, 16
        %v1096 = vrot.slane %v1094, 4
        %v1097 = vor.u32 %v1096, %v1092
        %v1098 = vrot.slane %v1097, 4
        %v1100 = vshll.u32 %v237, 16
        %v1102 = vrot.slane %v1100, 5
        %v1103 = vsel %vm1031, %v1098, %v1102
        %v1105 = vshrl.u32 %v238, 16
        %v1107 = vrot.slane %v1105, 4
        %v1108 = vshll.u32 %v238, 16
        %v1110 = vrot.slane %v1108, 5
        %v1111 = vor.u32 %v1107, %v1110
        %v1112 = vrot.slane %v1111, 4
        %v1114 = vshll.u32 %v239, 16
        %v1116 = vrot.slane %v1114, 5
        %v1117 = vsel %vm1031, %v1112, %v1116
        %v1118 = vshrl.u32 %v239, 16
        %v1120 = vrot.slane %v1118, 4
        %v1121 = vor.u32 %v1120, %v1116
        %v1122 = vrot.slane %v1121, 4
        %v1124 = vshll.u32 %v240, 16
        %v1126 = vrot.slane %v1124, 5
        %v1127 = vsel %vm1031, %v1122, %v1126
        %v1129 = vshrl.u32 %v241, 16
        %v1131 = vrot.slane %v1129, 4
        %v1132 = vshll.u32 %v241, 16
        %v1134 = vrot.slane %v1132, 5
        %v1135 = vor.u32 %v1131, %v1134
        %v1136 = vrot.slane %v1135, 4
        %v1138 = vshll.u32 %v242, 16
        %v1140 = vrot.slane %v1138, 5
        %v1141 = vsel %vm1031, %v1136, %v1140
        %v1142 = vshrl.u32 %v242, 16
        %v1144 = vrot.slane %v1142, 4
        %v1145 = vor.u32 %v1144, %v1140
        %v1146 = vrot.slane %v1145, 4
        %v1148 = vshll.u32 %v243, 16
        %v1150 = vrot.slane %v1148, 5
        %v1151 = vsel %vm1031, %v1146, %v1150
        %v1153 = vshrl.u32 %v244, 16
        %v1155 = vrot.slane %v1153, 4
        %v1156 = vshll.u32 %v244, 16
        %v1158 = vrot.slane %v1156, 5
        %v1159 = vor.u32 %v1155, %v1158
        %v1160 = vrot.slane %v1159, 4
        %v1162 = vshll.u32 %v245, 16
        %v1164 = vrot.slane %v1162, 5
        %v1165 = vsel %vm1031, %v1160, %v1164
        %v1166 = vshrl.u32 %v245, 16
        %v1168 = vrot.slane %v1166, 4
        %v1169 = vor.u32 %v1168, %v1164
        %v1170 = vrot.slane %v1169, 4
        %v1172 = vshll.u32 %v246, 16
        %v1174 = vrot.slane %v1172, 5
        %v1175 = vsel %vm1031, %v1170, %v1174
        %v1177 = vshrl.u32 %v247, 16
        %v1179 = vrot.slane %v1177, 4
        %v1180 = vshll.u32 %v247, 16
        %v1182 = vrot.slane %v1180, 5
        %v1183 = vor.u32 %v1179, %v1182
        %v1184 = vrot.slane %v1183, 4
        %v1186 = vshll.u32 %v248, 16
        %v1188 = vrot.slane %v1186, 5
        %v1189 = vsel %vm1031, %v1184, %v1188
        %v1190 = vshrl.u32 %v248, 16
        %v1192 = vrot.slane %v1190, 4
        %v1193 = vor.u32 %v1192, %v1188
        %v1194 = vrot.slane %v1193, 4
        %v1196 = vshll.u32 %v249, 16
        %v1198 = vrot.slane %v1196, 5
        %v1199 = vsel %vm1031, %v1194, %v1198
        %v1201 = vshrl.u32 %v250, 16
        %v1203 = vrot.slane %v1201, 4
        %v1204 = vshll.u32 %v250, 16
        %v1206 = vrot.slane %v1204, 5
        %v1207 = vor.u32 %v1203, %v1206
        %v1208 = vrot.slane %v1207, 4
        %v1210 = vshll.u32 %v251, 16
        %v1212 = vrot.slane %v1210, 5
        %v1213 = vsel %vm1031, %v1208, %v1212
        %v1214 = vshrl.u32 %v251, 16
        %v1216 = vrot.slane %v1214, 4
        %v1217 = vor.u32 %v1216, %v1212
        %v1218 = vrot.slane %v1217, 4
        %v1220 = vshll.u32 %v252, 16
        %v1222 = vrot.slane %v1220, 5
        %v1223 = vsel %vm1031, %v1218, %v1222
        %v1225 = vshrl.u32 %v253, 16
        %v1227 = vrot.slane %v1225, 4
        %v1228 = vshll.u32 %v253, 16
        %v1230 = vrot.slane %v1228, 5
        %v1231 = vor.u32 %v1227, %v1230
        %v1232 = vrot.slane %v1231, 4
        %v1234 = vshll.u32 %v254, 16
        %v1236 = vrot.slane %v1234, 5
        %v1237 = vsel %vm1031, %v1232, %v1236
        %v1238 = vshrl.u32 %v254, 16
        %v1240 = vrot.slane %v1238, 4
        %v1241 = vor.u32 %v1240, %v1236
        %v1242 = vrot.slane %v1241, 4
        %v1244 = vshll.u32 %v255, 16
        %v1246 = vrot.slane %v1244, 5
        %v1247 = vsel %vm1031, %v1242, %v1246
        %v1249 = vshrl.u32 %v256, 16
        %v1251 = vrot.slane %v1249, 4
        %v1252 = vshll.u32 %v256, 16
        %v1254 = vrot.slane %v1252, 5
        %v1255 = vor.u32 %v1251, %v1254
        %v1256 = vrot.slane %v1255, 4
        %v1258 = vshll.u32 %v257, 16
        %v1260 = vrot.slane %v1258, 5
        %v1261 = vsel %vm1031, %v1256, %v1260
        %v1262 = vshrl.u32 %v257, 16
        %v1264 = vrot.slane %v1262, 4
        %v1265 = vor.u32 %v1264, %v1260
        %v1266 = vrot.slane %v1265, 4
        %v1268 = vshll.u32 %v258, 16
        %v1270 = vrot.slane %v1268, 5
        %v1271 = vsel %vm1031, %v1266, %v1270
        %v1273 = vshrl.u32 %v259, 16
        %v1275 = vrot.slane %v1273, 4
        %v1276 = vshll.u32 %v259, 16
        %v1278 = vrot.slane %v1276, 5
        %v1279 = vor.u32 %v1275, %v1278
        %v1280 = vrot.slane %v1279, 4
        %v1282 = vshll.u32 %v260, 16
        %v1284 = vrot.slane %v1282, 5
        %v1285 = vsel %vm1031, %v1280, %v1284
        %v1286 = vshrl.u32 %v260, 16
        %v1288 = vrot.slane %v1286, 4
        %v1289 = vor.u32 %v1288, %v1284
        %v1290 = vrot.slane %v1289, 4
        %v1292 = vshll.u32 %v261, 16
        %v1294 = vrot.slane %v1292, 5
        %v1295 = vsel %vm1031, %v1290, %v1294
        %v1297 = vshrl.u32 %v262, 16
        %v1299 = vrot.slane %v1297, 4
        %v1300 = vshll.u32 %v262, 16
        %v1302 = vrot.slane %v1300, 5
        %v1303 = vor.u32 %v1299, %v1302
        %v1304 = vrot.slane %v1303, 4
        %v1306 = vshll.u32 %v263, 16
        %v1308 = vrot.slane %v1306, 5
        %v1309 = vsel %vm1031, %v1304, %v1308
        %v1310 = vshrl.u32 %v263, 16
        %v1312 = vrot.slane %v1310, 4
        %v1313 = vor.u32 %v1312, %v1308
        %v1314 = vrot.slane %v1313, 4
        %v1316 = vshll.u32 %v264, 16
        %v1318 = vrot.slane %v1316, 5
        %v1319 = vsel %vm1031, %v1314, %v1318
        %v1321 = vshrl.u32 %v265, 16
        %v1323 = vrot.slane %v1321, 4
        %v1324 = vshll.u32 %v265, 16
        %v1326 = vrot.slane %v1324, 5
        %v1327 = vor.u32 %v1323, %v1326
        %v1328 = vrot.slane %v1327, 4
        %v1330 = vshll.u32 %v266, 16
        %v1332 = vrot.slane %v1330, 5
        %v1333 = vsel %vm1031, %v1328, %v1332
        %v1334 = vshrl.u32 %v266, 16
        %v1336 = vrot.slane %v1334, 4
        %v1337 = vor.u32 %v1336, %v1332
        %v1338 = vrot.slane %v1337, 4
        %v1340 = vshll.u32 %v267, 16
        %v1342 = vrot.slane %v1340, 5
        %v1343 = vsel %vm1031, %v1338, %v1342
        %v1345 = vshrl.u32 %v268, 16
        %v1347 = vrot.slane %v1345, 4
        %v1348 = vshll.u32 %v268, 16
        %v1350 = vrot.slane %v1348, 5
        %v1351 = vor.u32 %v1347, %v1350
        %v1352 = vrot.slane %v1351, 4
        %v1354 = vshll.u32 %v269, 16
        %v1356 = vrot.slane %v1354, 5
        %v1357 = vsel %vm1031, %v1352, %v1356
        %v1358 = vshrl.u32 %v269, 16
        %v1360 = vrot.slane %v1358, 4
        %v1361 = vor.u32 %v1360, %v1356
        %v1362 = vrot.slane %v1361, 4
        %v1364 = vshll.u32 %v270, 16
        %v1366 = vrot.slane %v1364, 5
        %v1367 = vsel %vm1031, %v1362, %v1366
        %v1369 = vshrl.u32 %v271, 16
        %v1371 = vrot.slane %v1369, 4
        %v1372 = vshll.u32 %v271, 16
        %v1374 = vrot.slane %v1372, 5
        %v1375 = vor.u32 %v1371, %v1374
        %v1376 = vrot.slane %v1375, 4
        %v1378 = vshll.u32 %v272, 16
        %v1380 = vrot.slane %v1378, 5
        %v1381 = vsel %vm1031, %v1376, %v1380
        %v1382 = vshrl.u32 %v272, 16
        %v1384 = vrot.slane %v1382, 4
        %v1385 = vor.u32 %v1384, %v1380
        %v1386 = vrot.slane %v1385, 4
        %v1388 = vshll.u32 %v273, 16
        %v1390 = vrot.slane %v1388, 5
        %v1391 = vsel %vm1031, %v1386, %v1390
        %v1393 = vshrl.u32 %v274, 16
        %v1395 = vrot.slane %v1393, 4
        %v1396 = vshll.u32 %v274, 16
        %v1398 = vrot.slane %v1396, 5
        %v1399 = vor.u32 %v1395, %v1398
        %v1400 = vrot.slane %v1399, 4
        %v1402 = vshll.u32 %v275, 16
        %v1404 = vrot.slane %v1402, 5
        %v1405 = vsel %vm1031, %v1400, %v1404
        %v1406 = vshrl.u32 %v275, 16
        %v1408 = vrot.slane %v1406, 4
        %v1409 = vor.u32 %v1408, %v1404
        %v1410 = vrot.slane %v1409, 4
        %v1412 = vshll.u32 %v276, 16
        %v1414 = vrot.slane %v1412, 5
        %v1415 = vsel %vm1031, %v1410, %v1414
        %s1416 = scalar_lea.vmem %s219, 4
        %v1417 = vld [vmem:[%s1416] sm:$0xf]
        %v1418 = vunpack.c.l.b16 %v1045
        %v1419 = vunpack.c.l.b16 %v1055
        %v1420 = vunpack.c.l.b16 %v1069
        %v1421 = vunpack.c.l.b16 %v1079
        %v1422 = vunpack.c.l.b16 %v1093
        %v1423 = vunpack.c.l.b16 %v1103
        %v1424 = vunpack.c.l.b16 %v1117
        %v1425 = vunpack.c.l.b16 %v1127
        %v1426 = vunpack.c.l.b16 %v1141
        %v1427 = vunpack.c.l.b16 %v1151
        %v1428 = vunpack.c.l.b16 %v1165
        %v1429 = vunpack.c.l.b16 %v1175
        %v1430 = vunpack.c.l.b16 %v1189
        %v1431 = vunpack.c.l.b16 %v1199
        %v1432 = vunpack.c.l.b16 %v1213
        %v1433 = vunpack.c.l.b16 %v1223
        %v1434 = vunpack.c.l.b16 %v1237
        %v1435 = vunpack.c.l.b16 %v1247
        %v1436 = vunpack.c.l.b16 %v1261
        %v1437 = vunpack.c.l.b16 %v1271
        %v1438 = vunpack.c.l.b16 %v1285
        %v1439 = vunpack.c.l.b16 %v1295
        %v1440 = vunpack.c.l.b16 %v1309
        %v1441 = vunpack.c.l.b16 %v1319
        %v1442 = vunpack.c.l.b16 %v1333
        %v1443 = vunpack.c.l.b16 %v1343
        %v1444 = vunpack.c.l.b16 %v1357
        %v1445 = vunpack.c.l.b16 %v1367
        %v1446 = vunpack.c.l.b16 %v1381
        %v1447 = vunpack.c.l.b16 %v1391
        %v1448 = vunpack.c.l.b16 %v1405
        %v1449 = vunpack.c.l.b16 %v1415
        %v1450 = vpack.c.b16 %v1419, %v1418
        %v1451 = vpack.c.b16 %v1421, %v1420
        %v1452 = vpack.c.b16 %v1423, %v1422
        %v1453 = vpack.c.b16 %v1425, %v1424
        %v1454 = vpack.c.b16 %v1427, %v1426
        %v1455 = vpack.c.b16 %v1429, %v1428
        %v1456 = vpack.c.b16 %v1431, %v1430
        %v1457 = vpack.c.b16 %v1433, %v1432
        %v1458 = vpack.c.b16 %v1435, %v1434
        %v1459 = vpack.c.b16 %v1437, %v1436
        %v1460 = vpack.c.b16 %v1439, %v1438
        %v1461 = vpack.c.b16 %v1441, %v1440
        %v1462 = vpack.c.b16 %v1443, %v1442
        %v1463 = vpack.c.b16 %v1445, %v1444
        %v1464 = vpack.c.b16 %v1447, %v1446
        %v1465 = vpack.c.b16 %v1449, %v1448
        %v1467 = vsel %vm371, %v1450, 0
        %v1470 = vsel %vm371, %v1451, 0
        %v1473 = vsel %vm371, %v1452, 0
        %v1476 = vsel %vm371, %v1453, 0
        %v1479 = vsel %vm371, %v1454, 0
        %v1482 = vsel %vm371, %v1455, 0
        %v1485 = vsel %vm371, %v1456, 0
        %v1488 = vsel %vm371, %v1457, 0
        %v1491 = vsel %vm371, %v1458, 0
        %v1494 = vsel %vm371, %v1459, 0
        %v1497 = vsel %vm371, %v1460, 0
        %v1500 = vsel %vm371, %v1461, 0
        %v1503 = vsel %vm371, %v1462, 0
        %v1506 = vsel %vm371, %v1463, 0
        %v1509 = vsel %vm371, %v1464, 0
        %v1512 = vsel %vm371, %v1465, 0
        %v1515 = vsel %vm420, %v1417, 0
        %1517 = vmatprep.subr.bf16.mxu0 0
        %1518 = vmatpush1.bf16.msra.mxu0 %v1515
        %1519 = vmatprep.subr.bf16.mxu0 0
        %1520 = vmatpush1.bf16.msra.mxu0 0
        %1521 = vmatprep.subr.bf16.mxu0 0
        %1522 = vmatpush1.bf16.msra.mxu0 0
        %1523 = vmatprep.subr.bf16.mxu0 0
        %1524 = vmatpush1.bf16.msra.mxu0 0
        %1525 = vmatprep.subr.bf16.mxu0 0
        %1526 = vmatpush1.bf16.msra.mxu0 0
        %1527 = vmatprep.subr.bf16.mxu0 0
        %1528 = vmatpush1.bf16.msra.mxu0 0
        %1529 = vmatprep.subr.bf16.mxu0 0
        %1530 = vmatpush1.bf16.msra.mxu0 0
        %1531 = vmatprep.subr.bf16.mxu0 0
        %1532 = vmatpush1.bf16.msra.mxu0 0
        %1533 = vmatprep.subr.bf16.mxu0 0
        %1534 = vmatpush1.bf16.msra.mxu0 0
        %1535 = vmatprep.subr.bf16.mxu0 0
        %1536 = vmatpush1.bf16.msra.mxu0 0
        %1537 = vmatprep.subr.bf16.mxu0 0
        %1538 = vmatpush1.bf16.msra.mxu0 0
        %1539 = vmatprep.subr.bf16.mxu0 0
        %1540 = vmatpush1.bf16.msra.mxu0 0
        %1541 = vmatprep.subr.bf16.mxu0 0
        %1542 = vmatpush1.bf16.msra.mxu0 0
        %1543 = vmatprep.subr.bf16.mxu0 0
        %1544 = vmatpush1.bf16.msra.mxu0 0
        %1545 = vmatprep.subr.bf16.mxu0 0
        %1546 = vmatpush1.bf16.msra.mxu0 0
        %1547 = vmatprep.subr.bf16.mxu0 0
        %1548 = vmatpush1.bf16.msra.mxu0 0
        %1549 = vmatprep.mubr.bf16.mxu0 0
        %1550 = vmatmul.mubr.bf16.gmra.mrb[0].mxu0 %v1467
        %v1551 = vpop.f32.mrb[0].mxu0
        %v1552 = vadd.f32 0.0, %v1551
        %v1553 = vpop.f32.mrb[0].mxu0
        %v1554 = vpop.f32.mrb[0].mxu0
        %v1555 = vadd.f32 0.0, %v1554
        %v1556 = vpop.f32.mrb[0].mxu0
        %1557 = vmatprep.mubr.bf16.mxu0 0
        %1558 = vmatmul.mubr.bf16.gmra.mrb[0].mxu0 %v1470
        %v1559 = vpop.f32.mrb[0].mxu0
        %v1560 = vadd.f32 0.0, %v1559
        %v1561 = vpop.f32.mrb[0].mxu0
        %v1562 = vpop.f32.mrb[0].mxu0
        %v1563 = vadd.f32 0.0, %v1562
        %v1564 = vpop.f32.mrb[0].mxu0
        %1565 = vmatprep.mubr.bf16.mxu0 0
        %1566 = vmatmul.mubr.bf16.gmra.mrb[0].mxu0 %v1473
        %v1567 = vpop.f32.mrb[0].mxu0
        %v1568 = vadd.f32 0.0, %v1567
        %v1569 = vpop.f32.mrb[0].mxu0
        %v1570 = vpop.f32.mrb[0].mxu0
        %v1571 = vadd.f32 0.0, %v1570
        %v1572 = vpop.f32.mrb[0].mxu0
        %1573 = vmatprep.mubr.bf16.mxu0 0
        %1574 = vmatmul.mubr.bf16.gmra.mrb[0].mxu0 %v1476
        %v1575 = vpop.f32.mrb[0].mxu0
        %v1576 = vadd.f32 0.0, %v1575
        %v1577 = vpop.f32.mrb[0].mxu0
        %v1578 = vpop.f32.mrb[0].mxu0
        %v1579 = vadd.f32 0.0, %v1578
        %v1580 = vpop.f32.mrb[0].mxu0
        %1581 = vmatprep.mubr.bf16.mxu0 0
        %1582 = vmatmul.mubr.bf16.gmra.mrb[0].mxu0 %v1479
        %v1583 = vpop.f32.mrb[0].mxu0
        %v1584 = vadd.f32 0.0, %v1583
        %v1585 = vpop.f32.mrb[0].mxu0
        %v1586 = vpop.f32.mrb[0].mxu0
        %v1587 = vadd.f32 0.0, %v1586
        %v1588 = vpop.f32.mrb[0].mxu0
        %1589 = vmatprep.mubr.bf16.mxu0 0
        %1590 = vmatmul.mubr.bf16.gmra.mrb[0].mxu0 %v1482
        %v1591 = vpop.f32.mrb[0].mxu0
        %v1592 = vadd.f32 0.0, %v1591
        %v1593 = vpop.f32.mrb[0].mxu0
        %v1594 = vpop.f32.mrb[0].mxu0
        %v1595 = vadd.f32 0.0, %v1594
        %v1596 = vpop.f32.mrb[0].mxu0
        %1597 = vmatprep.mubr.bf16.mxu0 0
        %1598 = vmatmul.mubr.bf16.gmra.mrb[0].mxu0 %v1485
        %v1599 = vpop.f32.mrb[0].mxu0
        %v1600 = vadd.f32 0.0, %v1599
        %v1601 = vpop.f32.mrb[0].mxu0
        %v1602 = vpop.f32.mrb[0].mxu0
        %v1603 = vadd.f32 0.0, %v1602
        %v1604 = vpop.f32.mrb[0].mxu0
        %1605 = vmatprep.mubr.bf16.mxu0 0
        %1606 = vmatmul.mubr.bf16.gmra.mrb[0].mxu0 %v1488
        %v1607 = vpop.f32.mrb[0].mxu0
        %v1608 = vadd.f32 0.0, %v1607
        %v1609 = vpop.f32.mrb[0].mxu0
        %v1610 = vpop.f32.mrb[0].mxu0
        %v1611 = vadd.f32 0.0, %v1610
        %v1612 = vpop.f32.mrb[0].mxu0
        %1613 = vmatprep.mubr.bf16.mxu0 0
        %1614 = vmatmul.mubr.bf16.gmra.mrb[0].mxu0 %v1491
        %v1615 = vpop.f32.mrb[0].mxu0
        %v1616 = vadd.f32 0.0, %v1615
        %v1617 = vpop.f32.mrb[0].mxu0
        %v1618 = vpop.f32.mrb[0].mxu0
        %v1619 = vadd.f32 0.0, %v1618
        %v1620 = vpop.f32.mrb[0].mxu0
        %1621 = vmatprep.mubr.bf16.mxu0 0
        %1622 = vmatmul.mubr.bf16.gmra.mrb[0].mxu0 %v1494
        %v1623 = vpop.f32.mrb[0].mxu0
        %v1624 = vadd.f32 0.0, %v1623
        %v1625 = vpop.f32.mrb[0].mxu0
        %v1626 = vpop.f32.mrb[0].mxu0
        %v1627 = vadd.f32 0.0, %v1626
        %v1628 = vpop.f32.mrb[0].mxu0
        %1629 = vmatprep.mubr.bf16.mxu0 0
        %1630 = vmatmul.mubr.bf16.gmra.mrb[0].mxu0 %v1497
        %v1631 = vpop.f32.mrb[0].mxu0
        %v1632 = vadd.f32 0.0, %v1631
        %v1633 = vpop.f32.mrb[0].mxu0
        %v1634 = vpop.f32.mrb[0].mxu0
        %v1635 = vadd.f32 0.0, %v1634
        %v1636 = vpop.f32.mrb[0].mxu0
        %1637 = vmatprep.mubr.bf16.mxu0 0
        %1638 = vmatmul.mubr.bf16.gmra.mrb[0].mxu0 %v1500
        %v1639 = vpop.f32.mrb[0].mxu0
        %v1640 = vadd.f32 0.0, %v1639
        %v1641 = vpop.f32.mrb[0].mxu0
        %v1642 = vpop.f32.mrb[0].mxu0
        %v1643 = vadd.f32 0.0, %v1642
        %v1644 = vpop.f32.mrb[0].mxu0
        %1645 = vmatprep.mubr.bf16.mxu0 0
        %1646 = vmatmul.mubr.bf16.gmra.mrb[0].mxu0 %v1503
        %v1647 = vpop.f32.mrb[0].mxu0
        %v1648 = vadd.f32 0.0, %v1647
        %v1649 = vpop.f32.mrb[0].mxu0
        %v1650 = vpop.f32.mrb[0].mxu0
        %v1651 = vadd.f32 0.0, %v1650
        %v1652 = vpop.f32.mrb[0].mxu0
        %1653 = vmatprep.mubr.bf16.mxu0 0
        %1654 = vmatmul.mubr.bf16.gmra.mrb[0].mxu0 %v1506
        %v1655 = vpop.f32.mrb[0].mxu0
        %v1656 = vadd.f32 0.0, %v1655
        %v1657 = vpop.f32.mrb[0].mxu0
        %v1658 = vpop.f32.mrb[0].mxu0
        %v1659 = vadd.f32 0.0, %v1658
        %v1660 = vpop.f32.mrb[0].mxu0
        %1661 = vmatprep.mubr.bf16.mxu0 0
        %1662 = vmatmul.mubr.bf16.gmra.mrb[0].mxu0 %v1509
        %v1663 = vpop.f32.mrb[0].mxu0
        %v1664 = vadd.f32 0.0, %v1663
        %v1665 = vpop.f32.mrb[0].mxu0
        %v1666 = vpop.f32.mrb[0].mxu0
        %v1667 = vadd.f32 0.0, %v1666
        %v1668 = vpop.f32.mrb[0].mxu0
        %1669 = vmatprep.mubr.bf16.mxu0 0
        %1670 = vmatmul.mubr.bf16.gmra.mrb[0].mxu0 %v1512
        %v1671 = vpop.f32.mrb[0].mxu0
        %v1672 = vadd.f32 0.0, %v1671
        %v1673 = vpop.f32.mrb[0].mxu0
        %v1674 = vpop.f32.mrb[0].mxu0
        %v1675 = vadd.f32 0.0, %v1674
        %v1676 = vpop.f32.mrb[0].mxu0
        %1677 = vdwg.mxu0
        %v1678 = vadd.f32 %v997, %v1552
        %v1679 = vadd.f32 %v998, %v1555
        %v1680 = vadd.f32 %v999, %v1560
        %v1681 = vadd.f32 %v1000, %v1563
        %v1682 = vadd.f32 %v1001, %v1568
        %v1683 = vadd.f32 %v1002, %v1571
        %v1684 = vadd.f32 %v1003, %v1576
        %v1685 = vadd.f32 %v1004, %v1579
        %v1686 = vadd.f32 %v1005, %v1584
        %v1687 = vadd.f32 %v1006, %v1587
        %v1688 = vadd.f32 %v1007, %v1592
        %v1689 = vadd.f32 %v1008, %v1595
        %v1690 = vadd.f32 %v1009, %v1600
        %v1691 = vadd.f32 %v1010, %v1603
        %v1692 = vadd.f32 %v1011, %v1608
        %v1693 = vadd.f32 %v1012, %v1611
        %v1694 = vadd.f32 %v1013, %v1616
        %v1695 = vadd.f32 %v1014, %v1619
        %v1696 = vadd.f32 %v1015, %v1624
        %v1697 = vadd.f32 %v1016, %v1627
        %v1698 = vadd.f32 %v1017, %v1632
        %v1699 = vadd.f32 %v1018, %v1635
        %v1700 = vadd.f32 %v1019, %v1640
        %v1701 = vadd.f32 %v1020, %v1643
        %v1702 = vadd.f32 %v1021, %v1648
        %v1703 = vadd.f32 %v1022, %v1651
        %v1704 = vadd.f32 %v1023, %v1656
        %v1705 = vadd.f32 %v1024, %v1659
        %v1706 = vadd.f32 %v1025, %v1664
        %v1707 = vadd.f32 %v1026, %v1667
        %v1708 = vadd.f32 %v1027, %v1672
        %v1709 = vadd.f32 %v1028, %v1675
        %v1711 = vshrl.u32 %v277, 16
        %v1713 = vrot.slane %v1711, 4
        %v1714 = vshll.u32 %v277, 16
        %v1716 = vrot.slane %v1714, 5
        %v1717 = vor.u32 %v1713, %v1716
        %v1718 = vrot.slane %v1717, 4
        %v1720 = vshll.u32 %v278, 16
        %v1722 = vrot.slane %v1720, 5
        %v1723 = vsel %vm1031, %v1718, %v1722
        %v1724 = vshrl.u32 %v278, 16
        %v1726 = vrot.slane %v1724, 4
        %v1727 = vor.u32 %v1726, %v1722
        %v1728 = vrot.slane %v1727, 4
        %v1730 = vshll.u32 %v279, 16
        %v1732 = vrot.slane %v1730, 5
        %v1733 = vsel %vm1031, %v1728, %v1732
        %s1734 = scalar_lea.vmem %s219, 16
        %v1735 = vld [vmem:[%s1734] sm:$0xf]
        %v1736 = vunpack.c.l.b16 %v1723
        %v1737 = vunpack.c.l.b16 %v1733
        %v1738 = vpack.c.b16 %v1737, %v1736
        %v1740 = vsel %vm371, %v1738, 0
        %v1743 = vsel %vm420, %v1735, 0
        %1745 = vmatprep.subr.bf16.mxu0 0
        %1746 = vmatpush1.bf16.msra.mxu0 %v1743
        %1747 = vmatprep.subr.bf16.mxu0 0
        %1748 = vmatpush1.bf16.msra.mxu0 0
        %1749 = vmatprep.subr.bf16.mxu0 0
        %1750 = vmatpush1.bf16.msra.mxu0 0
        %1751 = vmatprep.subr.bf16.mxu0 0
        %1752 = vmatpush1.bf16.msra.mxu0 0
        %1753 = vmatprep.subr.bf16.mxu0 0
        %1754 = vmatpush1.bf16.msra.mxu0 0
        %1755 = vmatprep.subr.bf16.mxu0 0
        %1756 = vmatpush1.bf16.msra.mxu0 0
        %1757 = vmatprep.subr.bf16.mxu0 0
        %1758 = vmatpush1.bf16.msra.mxu0 0
        %1759 = vmatprep.subr.bf16.mxu0 0
        %1760 = vmatpush1.bf16.msra.mxu0 0
        %1761 = vmatprep.subr.bf16.mxu0 0
        %1762 = vmatpush1.bf16.msra.mxu0 0
        %1763 = vmatprep.subr.bf16.mxu0 0
        %1764 = vmatpush1.bf16.msra.mxu0 0
        %1765 = vmatprep.subr.bf16.mxu0 0
        %1766 = vmatpush1.bf16.msra.mxu0 0
        %1767 = vmatprep.subr.bf16.mxu0 0
        %1768 = vmatpush1.bf16.msra.mxu0 0
        %1769 = vmatprep.subr.bf16.mxu0 0
        %1770 = vmatpush1.bf16.msra.mxu0 0
        %1771 = vmatprep.subr.bf16.mxu0 0
        %1772 = vmatpush1.bf16.msra.mxu0 0
        %1773 = vmatprep.subr.bf16.mxu0 0
        %1774 = vmatpush1.bf16.msra.mxu0 0
        %1775 = vmatprep.subr.bf16.mxu0 0
        %1776 = vmatpush1.bf16.msra.mxu0 0
        %1777 = vmatprep.mubr.bf16.mxu0 0
        %1778 = vmatmul.mubr.bf16.gmra.mrb[0].mxu0 %v1470
        %v1779 = vpop.f32.mrb[0].mxu0
        %v1780 = vadd.f32 0.0, %v1779
        %v1781 = vpop.f32.mrb[0].mxu0
        %v1782 = vpop.f32.mrb[0].mxu0
        %v1783 = vadd.f32 0.0, %v1782
        %v1784 = vpop.f32.mrb[0].mxu0
        %1785 = vmatprep.mubr.bf16.mxu0 0
        %1786 = vmatmul.mubr.bf16.gmra.mrb[0].mxu0 %v1473
        %v1787 = vpop.f32.mrb[0].mxu0
        %v1788 = vadd.f32 0.0, %v1787
        %v1789 = vpop.f32.mrb[0].mxu0
        %v1790 = vpop.f32.mrb[0].mxu0
        %v1791 = vadd.f32 0.0, %v1790
        %v1792 = vpop.f32.mrb[0].mxu0
        %1793 = vmatprep.mubr.bf16.mxu0 0
        %1794 = vmatmul.mubr.bf16.gmra.mrb[0].mxu0 %v1476
        %v1795 = vpop.f32.mrb[0].mxu0
        %v1796 = vadd.f32 0.0, %v1795
        %v1797 = vpop.f32.mrb[0].mxu0
        %v1798 = vpop.f32.mrb[0].mxu0
        %v1799 = vadd.f32 0.0, %v1798
        %v1800 = vpop.f32.mrb[0].mxu0
        %1801 = vmatprep.mubr.bf16.mxu0 0
        %1802 = vmatmul.mubr.bf16.gmra.mrb[0].mxu0 %v1479
        %v1803 = vpop.f32.mrb[0].mxu0
        %v1804 = vadd.f32 0.0, %v1803
        %v1805 = vpop.f32.mrb[0].mxu0
        %v1806 = vpop.f32.mrb[0].mxu0
        %v1807 = vadd.f32 0.0, %v1806
        %v1808 = vpop.f32.mrb[0].mxu0
        %1809 = vmatprep.mubr.bf16.mxu0 0
        %1810 = vmatmul.mubr.bf16.gmra.mrb[0].mxu0 %v1482
        %v1811 = vpop.f32.mrb[0].mxu0
        %v1812 = vadd.f32 0.0, %v1811
        %v1813 = vpop.f32.mrb[0].mxu0
        %v1814 = vpop.f32.mrb[0].mxu0
        %v1815 = vadd.f32 0.0, %v1814
        %v1816 = vpop.f32.mrb[0].mxu0
        %1817 = vmatprep.mubr.bf16.mxu0 0
        %1818 = vmatmul.mubr.bf16.gmra.mrb[0].mxu0 %v1485
        %v1819 = vpop.f32.mrb[0].mxu0
        %v1820 = vadd.f32 0.0, %v1819
        %v1821 = vpop.f32.mrb[0].mxu0
        %v1822 = vpop.f32.mrb[0].mxu0
        %v1823 = vadd.f32 0.0, %v1822
        %v1824 = vpop.f32.mrb[0].mxu0
        %1825 = vmatprep.mubr.bf16.mxu0 0
        %1826 = vmatmul.mubr.bf16.gmra.mrb[0].mxu0 %v1488
        %v1827 = vpop.f32.mrb[0].mxu0
        %v1828 = vadd.f32 0.0, %v1827
        %v1829 = vpop.f32.mrb[0].mxu0
        %v1830 = vpop.f32.mrb[0].mxu0
        %v1831 = vadd.f32 0.0, %v1830
        %v1832 = vpop.f32.mrb[0].mxu0
        %1833 = vmatprep.mubr.bf16.mxu0 0
        %1834 = vmatmul.mubr.bf16.gmra.mrb[0].mxu0 %v1491
        %v1835 = vpop.f32.mrb[0].mxu0
        %v1836 = vadd.f32 0.0, %v1835
        %v1837 = vpop.f32.mrb[0].mxu0
        %v1838 = vpop.f32.mrb[0].mxu0
        %v1839 = vadd.f32 0.0, %v1838
        %v1840 = vpop.f32.mrb[0].mxu0
        %1841 = vmatprep.mubr.bf16.mxu0 0
        %1842 = vmatmul.mubr.bf16.gmra.mrb[0].mxu0 %v1494
        %v1843 = vpop.f32.mrb[0].mxu0
        %v1844 = vadd.f32 0.0, %v1843
        %v1845 = vpop.f32.mrb[0].mxu0
        %v1846 = vpop.f32.mrb[0].mxu0
        %v1847 = vadd.f32 0.0, %v1846
        %v1848 = vpop.f32.mrb[0].mxu0
        %1849 = vmatprep.mubr.bf16.mxu0 0
        %1850 = vmatmul.mubr.bf16.gmra.mrb[0].mxu0 %v1497
        %v1851 = vpop.f32.mrb[0].mxu0
        %v1852 = vadd.f32 0.0, %v1851
        %v1853 = vpop.f32.mrb[0].mxu0
        %v1854 = vpop.f32.mrb[0].mxu0
        %v1855 = vadd.f32 0.0, %v1854
        %v1856 = vpop.f32.mrb[0].mxu0
        %1857 = vmatprep.mubr.bf16.mxu0 0
        %1858 = vmatmul.mubr.bf16.gmra.mrb[0].mxu0 %v1500
        %v1859 = vpop.f32.mrb[0].mxu0
        %v1860 = vadd.f32 0.0, %v1859
        %v1861 = vpop.f32.mrb[0].mxu0
        %v1862 = vpop.f32.mrb[0].mxu0
        %v1863 = vadd.f32 0.0, %v1862
        %v1864 = vpop.f32.mrb[0].mxu0
        %1865 = vmatprep.mubr.bf16.mxu0 0
        %1866 = vmatmul.mubr.bf16.gmra.mrb[0].mxu0 %v1503
        %v1867 = vpop.f32.mrb[0].mxu0
        %v1868 = vadd.f32 0.0, %v1867
        %v1869 = vpop.f32.mrb[0].mxu0
        %v1870 = vpop.f32.mrb[0].mxu0
        %v1871 = vadd.f32 0.0, %v1870
        %v1872 = vpop.f32.mrb[0].mxu0
        %1873 = vmatprep.mubr.bf16.mxu0 0
        %1874 = vmatmul.mubr.bf16.gmra.mrb[0].mxu0 %v1506
        %v1875 = vpop.f32.mrb[0].mxu0
        %v1876 = vadd.f32 0.0, %v1875
        %v1877 = vpop.f32.mrb[0].mxu0
        %v1878 = vpop.f32.mrb[0].mxu0
        %v1879 = vadd.f32 0.0, %v1878
        %v1880 = vpop.f32.mrb[0].mxu0
        %1881 = vmatprep.mubr.bf16.mxu0 0
        %1882 = vmatmul.mubr.bf16.gmra.mrb[0].mxu0 %v1509
        %v1883 = vpop.f32.mrb[0].mxu0
        %v1884 = vadd.f32 0.0, %v1883
        %v1885 = vpop.f32.mrb[0].mxu0
        %v1886 = vpop.f32.mrb[0].mxu0
        %v1887 = vadd.f32 0.0, %v1886
        %v1888 = vpop.f32.mrb[0].mxu0
        %1889 = vmatprep.mubr.bf16.mxu0 0
        %1890 = vmatmul.mubr.bf16.gmra.mrb[0].mxu0 %v1512
        %v1891 = vpop.f32.mrb[0].mxu0
        %v1892 = vadd.f32 0.0, %v1891
        %v1893 = vpop.f32.mrb[0].mxu0
        %v1894 = vpop.f32.mrb[0].mxu0
        %v1895 = vadd.f32 0.0, %v1894
        %v1896 = vpop.f32.mrb[0].mxu0
        %1897 = vmatprep.mubr.bf16.mxu0 0
        %1898 = vmatmul.mubr.bf16.gmra.mrb[0].mxu0 %v1740
        %v1899 = vpop.f32.mrb[0].mxu0
        %v1900 = vadd.f32 0.0, %v1899
        %v1901 = vpop.f32.mrb[0].mxu0
        %v1902 = vpop.f32.mrb[0].mxu0
        %v1903 = vadd.f32 0.0, %v1902
        %v1904 = vpop.f32.mrb[0].mxu0
        %1905 = vdwg.mxu0
        %v1906 = vadd.f32 %v1678, %v1780
        %v1907 = vadd.f32 %v1679, %v1783
        %v1908 = vadd.f32 %v1680, %v1788
        %v1909 = vadd.f32 %v1681, %v1791
        %v1910 = vadd.f32 %v1682, %v1796
        %v1911 = vadd.f32 %v1683, %v1799
        %v1912 = vadd.f32 %v1684, %v1804
        %v1913 = vadd.f32 %v1685, %v1807
        %v1914 = vadd.f32 %v1686, %v1812
        %v1915 = vadd.f32 %v1687, %v1815
        %v1916 = vadd.f32 %v1688, %v1820
        %v1917 = vadd.f32 %v1689, %v1823
        %v1918 = vadd.f32 %v1690, %v1828
        %v1919 = vadd.f32 %v1691, %v1831
        %v1920 = vadd.f32 %v1692, %v1836
        %v1921 = vadd.f32 %v1693, %v1839
        %v1922 = vadd.f32 %v1694, %v1844
        %v1923 = vadd.f32 %v1695, %v1847
        %v1924 = vadd.f32 %v1696, %v1852
        %v1925 = vadd.f32 %v1697, %v1855
        %v1926 = vadd.f32 %v1698, %v1860
        %v1927 = vadd.f32 %v1699, %v1863
        %v1928 = vadd.f32 %v1700, %v1868
        %v1929 = vadd.f32 %v1701, %v1871
        %v1930 = vadd.f32 %v1702, %v1876
        %v1931 = vadd.f32 %v1703, %v1879
        %v1932 = vadd.f32 %v1704, %v1884
        %v1933 = vadd.f32 %v1705, %v1887
        %v1934 = vadd.f32 %v1706, %v1892
        %v1935 = vadd.f32 %v1707, %v1895
        %v1936 = vadd.f32 %v1708, %v1900
        %v1937 = vadd.f32 %v1709, %v1903
        %v1939 = vshrl.u32 %v280, 16
        %v1941 = vrot.slane %v1939, 4
        %v1942 = vshll.u32 %v280, 16
        %v1944 = vrot.slane %v1942, 5
        %v1945 = vor.u32 %v1941, %v1944
        %v1946 = vrot.slane %v1945, 4
        %v1948 = vshll.u32 %v281, 16
        %v1950 = vrot.slane %v1948, 5
        %v1951 = vsel %vm1031, %v1946, %v1950
        %v1952 = vshrl.u32 %v281, 16
        %v1954 = vrot.slane %v1952, 4
        %v1955 = vor.u32 %v1954, %v1950
        %v1956 = vrot.slane %v1955, 4
        %v1958 = vshll.u32 %v282, 16
        %v1960 = vrot.slane %v1958, 5
        %v1961 = vsel %vm1031, %v1956, %v1960
        %s1962 = scalar_lea.vmem %s219, 28
        %v1963 = vld [vmem:[%s1962] sm:$0xf]
        %v1964 = vunpack.c.l.b16 %v1951
        %v1965 = vunpack.c.l.b16 %v1961
        %v1966 = vpack.c.b16 %v1965, %v1964
        %v1968 = vsel %vm371, %v1966, 0
        %v1971 = vsel %vm420, %v1963, 0
        %1973 = vmatprep.subr.bf16.mxu0 0
        %1974 = vmatpush1.bf16.msra.mxu0 %v1971
        %1975 = vmatprep.subr.bf16.mxu0 0
        %1976 = vmatpush1.bf16.msra.mxu0 0
        %1977 = vmatprep.subr.bf16.mxu0 0
        %1978 = vmatpush1.bf16.msra.mxu0 0
        %1979 = vmatprep.subr.bf16.mxu0 0
        %1980 = vmatpush1.bf16.msra.mxu0 0
        %1981 = vmatprep.subr.bf16.mxu0 0
        %1982 = vmatpush1.bf16.msra.mxu0 0
        %1983 = vmatprep.subr.bf16.mxu0 0
        %1984 = vmatpush1.bf16.msra.mxu0 0
        %1985 = vmatprep.subr.bf16.mxu0 0
        %1986 = vmatpush1.bf16.msra.mxu0 0
        %1987 = vmatprep.subr.bf16.mxu0 0
        %1988 = vmatpush1.bf16.msra.mxu0 0
        %1989 = vmatprep.subr.bf16.mxu0 0
        %1990 = vmatpush1.bf16.msra.mxu0 0
        %1991 = vmatprep.subr.bf16.mxu0 0
        %1992 = vmatpush1.bf16.msra.mxu0 0
        %1993 = vmatprep.subr.bf16.mxu0 0
        %1994 = vmatpush1.bf16.msra.mxu0 0
        %1995 = vmatprep.subr.bf16.mxu0 0
        %1996 = vmatpush1.bf16.msra.mxu0 0
        %1997 = vmatprep.subr.bf16.mxu0 0
        %1998 = vmatpush1.bf16.msra.mxu0 0
        %1999 = vmatprep.subr.bf16.mxu0 0
        %2000 = vmatpush1.bf16.msra.mxu0 0
        %2001 = vmatprep.subr.bf16.mxu0 0
        %2002 = vmatpush1.bf16.msra.mxu0 0
        %2003 = vmatprep.subr.bf16.mxu0 0
        %2004 = vmatpush1.bf16.msra.mxu0 0
        %2005 = vmatprep.mubr.bf16.mxu0 0
        %2006 = vmatmul.mubr.bf16.gmra.mrb[0].mxu0 %v1473
        %v2007 = vpop.f32.mrb[0].mxu0
        %v2008 = vadd.f32 0.0, %v2007
        %v2009 = vpop.f32.mrb[0].mxu0
        %v2010 = vpop.f32.mrb[0].mxu0
        %v2011 = vadd.f32 0.0, %v2010
        %v2012 = vpop.f32.mrb[0].mxu0
        %2013 = vmatprep.mubr.bf16.mxu0 0
        %2014 = vmatmul.mubr.bf16.gmra.mrb[0].mxu0 %v1476
        %v2015 = vpop.f32.mrb[0].mxu0
        %v2016 = vadd.f32 0.0, %v2015
        %v2017 = vpop.f32.mrb[0].mxu0
        %v2018 = vpop.f32.mrb[0].mxu0
        %v2019 = vadd.f32 0.0, %v2018
        %v2020 = vpop.f32.mrb[0].mxu0
        %2021 = vmatprep.mubr.bf16.mxu0 0
        %2022 = vmatmul.mubr.bf16.gmra.mrb[0].mxu0 %v1479
        %v2023 = vpop.f32.mrb[0].mxu0
        %v2024 = vadd.f32 0.0, %v2023
        %v2025 = vpop.f32.mrb[0].mxu0
        %v2026 = vpop.f32.mrb[0].mxu0
        %v2027 = vadd.f32 0.0, %v2026
        %v2028 = vpop.f32.mrb[0].mxu0
        %2029 = vmatprep.mubr.bf16.mxu0 0
        %2030 = vmatmul.mubr.bf16.gmra.mrb[0].mxu0 %v1482
        %v2031 = vpop.f32.mrb[0].mxu0
        %v2032 = vadd.f32 0.0, %v2031
        %v2033 = vpop.f32.mrb[0].mxu0
        %v2034 = vpop.f32.mrb[0].mxu0
        %v2035 = vadd.f32 0.0, %v2034
        %v2036 = vpop.f32.mrb[0].mxu0
        %2037 = vmatprep.mubr.bf16.mxu0 0
        %2038 = vmatmul.mubr.bf16.gmra.mrb[0].mxu0 %v1485
        %v2039 = vpop.f32.mrb[0].mxu0
        %v2040 = vadd.f32 0.0, %v2039
        %v2041 = vpop.f32.mrb[0].mxu0
        %v2042 = vpop.f32.mrb[0].mxu0
        %v2043 = vadd.f32 0.0, %v2042
        %v2044 = vpop.f32.mrb[0].mxu0
        %2045 = vmatprep.mubr.bf16.mxu0 0
        %2046 = vmatmul.mubr.bf16.gmra.mrb[0].mxu0 %v1488
        %v2047 = vpop.f32.mrb[0].mxu0
        %v2048 = vadd.f32 0.0, %v2047
        %v2049 = vpop.f32.mrb[0].mxu0
        %v2050 = vpop.f32.mrb[0].mxu0
        %v2051 = vadd.f32 0.0, %v2050
        %v2052 = vpop.f32.mrb[0].mxu0
        %2053 = vmatprep.mubr.bf16.mxu0 0
        %2054 = vmatmul.mubr.bf16.gmra.mrb[0].mxu0 %v1491
        %v2055 = vpop.f32.mrb[0].mxu0
        %v2056 = vadd.f32 0.0, %v2055
        %v2057 = vpop.f32.mrb[0].mxu0
        %v2058 = vpop.f32.mrb[0].mxu0
        %v2059 = vadd.f32 0.0, %v2058
        %v2060 = vpop.f32.mrb[0].mxu0
        %2061 = vmatprep.mubr.bf16.mxu0 0
        %2062 = vmatmul.mubr.bf16.gmra.mrb[0].mxu0 %v1494
        %v2063 = vpop.f32.mrb[0].mxu0
        %v2064 = vadd.f32 0.0, %v2063
        %v2065 = vpop.f32.mrb[0].mxu0
        %v2066 = vpop.f32.mrb[0].mxu0
        %v2067 = vadd.f32 0.0, %v2066
        %v2068 = vpop.f32.mrb[0].mxu0
        %2069 = vmatprep.mubr.bf16.mxu0 0
        %2070 = vmatmul.mubr.bf16.gmra.mrb[0].mxu0 %v1497
        %v2071 = vpop.f32.mrb[0].mxu0
        %v2072 = vadd.f32 0.0, %v2071
        %v2073 = vpop.f32.mrb[0].mxu0
        %v2074 = vpop.f32.mrb[0].mxu0
        %v2075 = vadd.f32 0.0, %v2074
        %v2076 = vpop.f32.mrb[0].mxu0
        %2077 = vmatprep.mubr.bf16.mxu0 0
        %2078 = vmatmul.mubr.bf16.gmra.mrb[0].mxu0 %v1500
        %v2079 = vpop.f32.mrb[0].mxu0
        %v2080 = vadd.f32 0.0, %v2079
        %v2081 = vpop.f32.mrb[0].mxu0
        %v2082 = vpop.f32.mrb[0].mxu0
        %v2083 = vadd.f32 0.0, %v2082
        %v2084 = vpop.f32.mrb[0].mxu0
        %2085 = vmatprep.mubr.bf16.mxu0 0
        %2086 = vmatmul.mubr.bf16.gmra.mrb[0].mxu0 %v1503
        %v2087 = vpop.f32.mrb[0].mxu0
        %v2088 = vadd.f32 0.0, %v2087
        %v2089 = vpop.f32.mrb[0].mxu0
        %v2090 = vpop.f32.mrb[0].mxu0
        %v2091 = vadd.f32 0.0, %v2090
        %v2092 = vpop.f32.mrb[0].mxu0
        %2093 = vmatprep.mubr.bf16.mxu0 0
        %2094 = vmatmul.mubr.bf16.gmra.mrb[0].mxu0 %v1506
        %v2095 = vpop.f32.mrb[0].mxu0
        %v2096 = vadd.f32 0.0, %v2095
        %v2097 = vpop.f32.mrb[0].mxu0
        %v2098 = vpop.f32.mrb[0].mxu0
        %v2099 = vadd.f32 0.0, %v2098
        %v2100 = vpop.f32.mrb[0].mxu0
        %2101 = vmatprep.mubr.bf16.mxu0 0
        %2102 = vmatmul.mubr.bf16.gmra.mrb[0].mxu0 %v1509
        %v2103 = vpop.f32.mrb[0].mxu0
        %v2104 = vadd.f32 0.0, %v2103
        %v2105 = vpop.f32.mrb[0].mxu0
        %v2106 = vpop.f32.mrb[0].mxu0
        %v2107 = vadd.f32 0.0, %v2106
        %v2108 = vpop.f32.mrb[0].mxu0
        %2109 = vmatprep.mubr.bf16.mxu0 0
        %2110 = vmatmul.mubr.bf16.gmra.mrb[0].mxu0 %v1512
        %v2111 = vpop.f32.mrb[0].mxu0
        %v2112 = vadd.f32 0.0, %v2111
        %v2113 = vpop.f32.mrb[0].mxu0
        %v2114 = vpop.f32.mrb[0].mxu0
        %v2115 = vadd.f32 0.0, %v2114
        %v2116 = vpop.f32.mrb[0].mxu0
        %2117 = vmatprep.mubr.bf16.mxu0 0
        %2118 = vmatmul.mubr.bf16.gmra.mrb[0].mxu0 %v1740
        %v2119 = vpop.f32.mrb[0].mxu0
        %v2120 = vadd.f32 0.0, %v2119
        %v2121 = vpop.f32.mrb[0].mxu0
        %v2122 = vpop.f32.mrb[0].mxu0
        %v2123 = vadd.f32 0.0, %v2122
        %v2124 = vpop.f32.mrb[0].mxu0
        %2125 = vmatprep.mubr.bf16.mxu0 0
        %2126 = vmatmul.mubr.bf16.gmra.mrb[0].mxu0 %v1968
        %v2127 = vpop.f32.mrb[0].mxu0
        %v2128 = vadd.f32 0.0, %v2127
        %v2129 = vpop.f32.mrb[0].mxu0
        %v2130 = vpop.f32.mrb[0].mxu0
        %v2131 = vadd.f32 0.0, %v2130
        %v2132 = vpop.f32.mrb[0].mxu0
        %2133 = vdwg.mxu0
        %v2134 = vadd.f32 %v1906, %v2008
        %v2135 = vadd.f32 %v1907, %v2011
        %v2136 = vadd.f32 %v1908, %v2016
        %v2137 = vadd.f32 %v1909, %v2019
        %v2138 = vadd.f32 %v1910, %v2024
        %v2139 = vadd.f32 %v1911, %v2027
        %v2140 = vadd.f32 %v1912, %v2032
        %v2141 = vadd.f32 %v1913, %v2035
        %v2142 = vadd.f32 %v1914, %v2040
        %v2143 = vadd.f32 %v1915, %v2043
        %v2144 = vadd.f32 %v1916, %v2048
        %v2145 = vadd.f32 %v1917, %v2051
        %v2146 = vadd.f32 %v1918, %v2056
        %v2147 = vadd.f32 %v1919, %v2059
        %v2148 = vadd.f32 %v1920, %v2064
        %v2149 = vadd.f32 %v1921, %v2067
        %v2150 = vadd.f32 %v1922, %v2072
        %v2151 = vadd.f32 %v1923, %v2075
        %v2152 = vadd.f32 %v1924, %v2080
        %v2153 = vadd.f32 %v1925, %v2083
        %v2154 = vadd.f32 %v1926, %v2088
        %v2155 = vadd.f32 %v1927, %v2091
        %v2156 = vadd.f32 %v1928, %v2096
        %v2157 = vadd.f32 %v1929, %v2099
        %v2158 = vadd.f32 %v1930, %v2104
        %v2159 = vadd.f32 %v1931, %v2107
        %v2160 = vadd.f32 %v1932, %v2112
        %v2161 = vadd.f32 %v1933, %v2115
        %v2162 = vadd.f32 %v1934, %v2120
        %v2163 = vadd.f32 %v1935, %v2123
        %v2164 = vadd.f32 %v1936, %v2128
        %v2165 = vadd.f32 %v1937, %v2131
        %vm2182 = vcmask 1042432
        %vm2183 = vcmask 1046532
        %vm2184 = vmor %vm2182, %vm2183
        %v2185 = vrot.slane %v229, 5
        %v2186 = vrot.slane %v2185, 4
        %v2187 = vrot.slane %v230, 5
        %v2188 = vsel %vm2184, %v2186, %v2187
        %v2189 = vrot.slane %v2187, 4
        %v2190 = vrot.slane %v231, 5
        %v2191 = vsel %vm2184, %v2189, %v2190
        %v2192 = vrot.slane %v232, 5
        %v2193 = vrot.slane %v2192, 4
        %v2194 = vrot.slane %v233, 5
        %v2195 = vsel %vm2184, %v2193, %v2194
        %v2196 = vrot.slane %v2194, 4
        %v2197 = vrot.slane %v234, 5
        %v2198 = vsel %vm2184, %v2196, %v2197
        %v2199 = vrot.slane %v235, 5
        %v2200 = vrot.slane %v2199, 4
        %v2201 = vrot.slane %v236, 5
        %v2202 = vsel %vm2184, %v2200, %v2201
        %v2203 = vrot.slane %v2201, 4
        %v2204 = vrot.slane %v237, 5
        %v2205 = vsel %vm2184, %v2203, %v2204
        %v2206 = vrot.slane %v238, 5
        %v2207 = vrot.slane %v2206, 4
        %v2208 = vrot.slane %v239, 5
        %v2209 = vsel %vm2184, %v2207, %v2208
        %v2210 = vrot.slane %v2208, 4
        %v2211 = vrot.slane %v240, 5
        %v2212 = vsel %vm2184, %v2210, %v2211
        %v2213 = vrot.slane %v241, 5
        %v2214 = vrot.slane %v2213, 4
        %v2215 = vrot.slane %v242, 5
        %v2216 = vsel %vm2184, %v2214, %v2215
        %v2217 = vrot.slane %v2215, 4
        %v2218 = vrot.slane %v243, 5
        %v2219 = vsel %vm2184, %v2217, %v2218
        %v2220 = vrot.slane %v244, 5
        %v2221 = vrot.slane %v2220, 4
        %v2222 = vrot.slane %v245, 5
        %v2223 = vsel %vm2184, %v2221, %v2222
        %v2224 = vrot.slane %v2222, 4
        %v2225 = vrot.slane %v246, 5
        %v2226 = vsel %vm2184, %v2224, %v2225
        %v2227 = vrot.slane %v247, 5
        %v2228 = vrot.slane %v2227, 4
        %v2229 = vrot.slane %v248, 5
        %v2230 = vsel %vm2184, %v2228, %v2229
        %v2231 = vrot.slane %v2229, 4
        %v2232 = vrot.slane %v249, 5
        %v2233 = vsel %vm2184, %v2231, %v2232
        %v2234 = vrot.slane %v250, 5
        %v2235 = vrot.slane %v2234, 4
        %v2236 = vrot.slane %v251, 5
        %v2237 = vsel %vm2184, %v2235, %v2236
        %v2238 = vrot.slane %v2236, 4
        %v2239 = vrot.slane %v252, 5
        %v2240 = vsel %vm2184, %v2238, %v2239
        %v2241 = vrot.slane %v253, 5
        %v2242 = vrot.slane %v2241, 4
        %v2243 = vrot.slane %v254, 5
        %v2244 = vsel %vm2184, %v2242, %v2243
        %v2245 = vrot.slane %v2243, 4
        %v2246 = vrot.slane %v255, 5
        %v2247 = vsel %vm2184, %v2245, %v2246
        %v2248 = vrot.slane %v256, 5
        %v2249 = vrot.slane %v2248, 4
        %v2250 = vrot.slane %v257, 5
        %v2251 = vsel %vm2184, %v2249, %v2250
        %v2252 = vrot.slane %v2250, 4
        %v2253 = vrot.slane %v258, 5
        %v2254 = vsel %vm2184, %v2252, %v2253
        %v2255 = vrot.slane %v259, 5
        %v2256 = vrot.slane %v2255, 4
        %v2257 = vrot.slane %v260, 5
        %v2258 = vsel %vm2184, %v2256, %v2257
        %v2259 = vrot.slane %v2257, 4
        %v2260 = vrot.slane %v261, 5
        %v2261 = vsel %vm2184, %v2259, %v2260
        %v2262 = vrot.slane %v262, 5
        %v2263 = vrot.slane %v2262, 4
        %v2264 = vrot.slane %v263, 5
        %v2265 = vsel %vm2184, %v2263, %v2264
        %v2266 = vrot.slane %v2264, 4
        %v2267 = vrot.slane %v264, 5
        %v2268 = vsel %vm2184, %v2266, %v2267
        %v2269 = vrot.slane %v265, 5
        %v2270 = vrot.slane %v2269, 4
        %v2271 = vrot.slane %v266, 5
        %v2272 = vsel %vm2184, %v2270, %v2271
        %v2273 = vrot.slane %v2271, 4
        %v2274 = vrot.slane %v267, 5
        %v2275 = vsel %vm2184, %v2273, %v2274
        %v2276 = vrot.slane %v268, 5
        %v2277 = vrot.slane %v2276, 4
        %v2278 = vrot.slane %v269, 5
        %v2279 = vsel %vm2184, %v2277, %v2278
        %v2280 = vrot.slane %v2278, 4
        %v2281 = vrot.slane %v270, 5
        %v2282 = vsel %vm2184, %v2280, %v2281
        %v2283 = vrot.slane %v271, 5
        %v2284 = vrot.slane %v2283, 4
        %v2285 = vrot.slane %v272, 5
        %v2286 = vsel %vm2184, %v2284, %v2285
        %v2287 = vrot.slane %v2285, 4
        %v2288 = vrot.slane %v273, 5
        %v2289 = vsel %vm2184, %v2287, %v2288
        %v2290 = vrot.slane %v274, 5
        %v2291 = vrot.slane %v2290, 4
        %v2292 = vrot.slane %v275, 5
        %v2293 = vsel %vm2184, %v2291, %v2292
        %v2294 = vrot.slane %v2292, 4
        %v2295 = vrot.slane %v276, 5
        %v2296 = vsel %vm2184, %v2294, %v2295
        %s2297 = scalar_lea.vmem %s219, 8
        %v2298 = vld [vmem:[%s2297] sm:$0xf]
        %v2299 = vunpack.c.l.b16 %v2188
        %v2300 = vunpack.c.l.b16 %v2191
        %v2301 = vunpack.c.l.b16 %v2195
        %v2302 = vunpack.c.l.b16 %v2198
        %v2303 = vunpack.c.l.b16 %v2202
        %v2304 = vunpack.c.l.b16 %v2205
        %v2305 = vunpack.c.l.b16 %v2209
        %v2306 = vunpack.c.l.b16 %v2212
        %v2307 = vunpack.c.l.b16 %v2216
        %v2308 = vunpack.c.l.b16 %v2219
        %v2309 = vunpack.c.l.b16 %v2223
        %v2310 = vunpack.c.l.b16 %v2226
        %v2311 = vunpack.c.l.b16 %v2230
        %v2312 = vunpack.c.l.b16 %v2233
        %v2313 = vunpack.c.l.b16 %v2237
        %v2314 = vunpack.c.l.b16 %v2240
        %v2315 = vunpack.c.l.b16 %v2244
        %v2316 = vunpack.c.l.b16 %v2247
        %v2317 = vunpack.c.l.b16 %v2251
        %v2318 = vunpack.c.l.b16 %v2254
        %v2319 = vunpack.c.l.b16 %v2258
        %v2320 = vunpack.c.l.b16 %v2261
        %v2321 = vunpack.c.l.b16 %v2265
        %v2322 = vunpack.c.l.b16 %v2268
        %v2323 = vunpack.c.l.b16 %v2272
        %v2324 = vunpack.c.l.b16 %v2275
        %v2325 = vunpack.c.l.b16 %v2279
        %v2326 = vunpack.c.l.b16 %v2282
        %v2327 = vunpack.c.l.b16 %v2286
        %v2328 = vunpack.c.l.b16 %v2289
        %v2329 = vunpack.c.l.b16 %v2293
        %v2330 = vunpack.c.l.b16 %v2296
        %v2331 = vpack.c.b16 %v2300, %v2299
        %v2332 = vpack.c.b16 %v2302, %v2301
        %v2333 = vpack.c.b16 %v2304, %v2303
        %v2334 = vpack.c.b16 %v2306, %v2305
        %v2335 = vpack.c.b16 %v2308, %v2307
        %v2336 = vpack.c.b16 %v2310, %v2309
        %v2337 = vpack.c.b16 %v2312, %v2311
        %v2338 = vpack.c.b16 %v2314, %v2313
        %v2339 = vpack.c.b16 %v2316, %v2315
        %v2340 = vpack.c.b16 %v2318, %v2317
        %v2341 = vpack.c.b16 %v2320, %v2319
        %v2342 = vpack.c.b16 %v2322, %v2321
        %v2343 = vpack.c.b16 %v2324, %v2323
        %v2344 = vpack.c.b16 %v2326, %v2325
        %v2345 = vpack.c.b16 %v2328, %v2327
        %v2346 = vpack.c.b16 %v2330, %v2329
        %v2348 = vsel %vm371, %v2331, 0
        %v2351 = vsel %vm371, %v2332, 0
        %v2354 = vsel %vm371, %v2333, 0
        %v2357 = vsel %vm371, %v2334, 0
        %v2360 = vsel %vm371, %v2335, 0
        %v2363 = vsel %vm371, %v2336, 0
        %v2366 = vsel %vm371, %v2337, 0
        %v2369 = vsel %vm371, %v2338, 0
        %v2372 = vsel %vm371, %v2339, 0
        %v2375 = vsel %vm371, %v2340, 0
        %v2378 = vsel %vm371, %v2341, 0
        %v2381 = vsel %vm371, %v2342, 0
        %v2384 = vsel %vm371, %v2343, 0
        %v2387 = vsel %vm371, %v2344, 0
        %v2390 = vsel %vm371, %v2345, 0
        %v2393 = vsel %vm371, %v2346, 0
        %v2396 = vsel %vm420, %v2298, 0
        %2398 = vmatprep.subr.bf16.mxu0 0
        %2399 = vmatpush1.bf16.msra.mxu0 %v2396
        %2400 = vmatprep.subr.bf16.mxu0 0
        %2401 = vmatpush1.bf16.msra.mxu0 0
        %2402 = vmatprep.subr.bf16.mxu0 0
        %2403 = vmatpush1.bf16.msra.mxu0 0
        %2404 = vmatprep.subr.bf16.mxu0 0
        %2405 = vmatpush1.bf16.msra.mxu0 0
        %2406 = vmatprep.subr.bf16.mxu0 0
        %2407 = vmatpush1.bf16.msra.mxu0 0
        %2408 = vmatprep.subr.bf16.mxu0 0
        %2409 = vmatpush1.bf16.msra.mxu0 0
        %2410 = vmatprep.subr.bf16.mxu0 0
        %2411 = vmatpush1.bf16.msra.mxu0 0
        %2412 = vmatprep.subr.bf16.mxu0 0
        %2413 = vmatpush1.bf16.msra.mxu0 0
        %2414 = vmatprep.subr.bf16.mxu0 0
        %2415 = vmatpush1.bf16.msra.mxu0 0
        %2416 = vmatprep.subr.bf16.mxu0 0
        %2417 = vmatpush1.bf16.msra.mxu0 0
        %2418 = vmatprep.subr.bf16.mxu0 0
        %2419 = vmatpush1.bf16.msra.mxu0 0
        %2420 = vmatprep.subr.bf16.mxu0 0
        %2421 = vmatpush1.bf16.msra.mxu0 0
        %2422 = vmatprep.subr.bf16.mxu0 0
        %2423 = vmatpush1.bf16.msra.mxu0 0
        %2424 = vmatprep.subr.bf16.mxu0 0
        %2425 = vmatpush1.bf16.msra.mxu0 0
        %2426 = vmatprep.subr.bf16.mxu0 0
        %2427 = vmatpush1.bf16.msra.mxu0 0
        %2428 = vmatprep.subr.bf16.mxu0 0
        %2429 = vmatpush1.bf16.msra.mxu0 0
        %2430 = vmatprep.mubr.bf16.mxu0 0
        %2431 = vmatmul.mubr.bf16.gmra.mrb[0].mxu0 %v2348
        %v2432 = vpop.f32.mrb[0].mxu0
        %v2433 = vadd.f32 0.0, %v2432
        %v2434 = vpop.f32.mrb[0].mxu0
        %v2435 = vpop.f32.mrb[0].mxu0
        %v2436 = vadd.f32 0.0, %v2435
        %v2437 = vpop.f32.mrb[0].mxu0
        %2438 = vmatprep.mubr.bf16.mxu0 0
        %2439 = vmatmul.mubr.bf16.gmra.mrb[0].mxu0 %v2351
        %v2440 = vpop.f32.mrb[0].mxu0
        %v2441 = vadd.f32 0.0, %v2440
        %v2442 = vpop.f32.mrb[0].mxu0
        %v2443 = vpop.f32.mrb[0].mxu0
        %v2444 = vadd.f32 0.0, %v2443
        %v2445 = vpop.f32.mrb[0].mxu0
        %2446 = vmatprep.mubr.bf16.mxu0 0
        %2447 = vmatmul.mubr.bf16.gmra.mrb[0].mxu0 %v2354
        %v2448 = vpop.f32.mrb[0].mxu0
        %v2449 = vadd.f32 0.0, %v2448
        %v2450 = vpop.f32.mrb[0].mxu0
        %v2451 = vpop.f32.mrb[0].mxu0
        %v2452 = vadd.f32 0.0, %v2451
        %v2453 = vpop.f32.mrb[0].mxu0
        %2454 = vmatprep.mubr.bf16.mxu0 0
        %2455 = vmatmul.mubr.bf16.gmra.mrb[0].mxu0 %v2357
        %v2456 = vpop.f32.mrb[0].mxu0
        %v2457 = vadd.f32 0.0, %v2456
        %v2458 = vpop.f32.mrb[0].mxu0
        %v2459 = vpop.f32.mrb[0].mxu0
        %v2460 = vadd.f32 0.0, %v2459
        %v2461 = vpop.f32.mrb[0].mxu0
        %2462 = vmatprep.mubr.bf16.mxu0 0
        %2463 = vmatmul.mubr.bf16.gmra.mrb[0].mxu0 %v2360
        %v2464 = vpop.f32.mrb[0].mxu0
        %v2465 = vadd.f32 0.0, %v2464
        %v2466 = vpop.f32.mrb[0].mxu0
        %v2467 = vpop.f32.mrb[0].mxu0
        %v2468 = vadd.f32 0.0, %v2467
        %v2469 = vpop.f32.mrb[0].mxu0
        %2470 = vmatprep.mubr.bf16.mxu0 0
        %2471 = vmatmul.mubr.bf16.gmra.mrb[0].mxu0 %v2363
        %v2472 = vpop.f32.mrb[0].mxu0
        %v2473 = vadd.f32 0.0, %v2472
        %v2474 = vpop.f32.mrb[0].mxu0
        %v2475 = vpop.f32.mrb[0].mxu0
        %v2476 = vadd.f32 0.0, %v2475
        %v2477 = vpop.f32.mrb[0].mxu0
        %2478 = vmatprep.mubr.bf16.mxu0 0
        %2479 = vmatmul.mubr.bf16.gmra.mrb[0].mxu0 %v2366
        %v2480 = vpop.f32.mrb[0].mxu0
        %v2481 = vadd.f32 0.0, %v2480
        %v2482 = vpop.f32.mrb[0].mxu0
        %v2483 = vpop.f32.mrb[0].mxu0
        %v2484 = vadd.f32 0.0, %v2483
        %v2485 = vpop.f32.mrb[0].mxu0
        %2486 = vmatprep.mubr.bf16.mxu0 0
        %2487 = vmatmul.mubr.bf16.gmra.mrb[0].mxu0 %v2369
        %v2488 = vpop.f32.mrb[0].mxu0
        %v2489 = vadd.f32 0.0, %v2488
        %v2490 = vpop.f32.mrb[0].mxu0
        %v2491 = vpop.f32.mrb[0].mxu0
        %v2492 = vadd.f32 0.0, %v2491
        %v2493 = vpop.f32.mrb[0].mxu0
        %2494 = vmatprep.mubr.bf16.mxu0 0
        %2495 = vmatmul.mubr.bf16.gmra.mrb[0].mxu0 %v2372
        %v2496 = vpop.f32.mrb[0].mxu0
        %v2497 = vadd.f32 0.0, %v2496
        %v2498 = vpop.f32.mrb[0].mxu0
        %v2499 = vpop.f32.mrb[0].mxu0
        %v2500 = vadd.f32 0.0, %v2499
        %v2501 = vpop.f32.mrb[0].mxu0
        %2502 = vmatprep.mubr.bf16.mxu0 0
        %2503 = vmatmul.mubr.bf16.gmra.mrb[0].mxu0 %v2375
        %v2504 = vpop.f32.mrb[0].mxu0
        %v2505 = vadd.f32 0.0, %v2504
        %v2506 = vpop.f32.mrb[0].mxu0
        %v2507 = vpop.f32.mrb[0].mxu0
        %v2508 = vadd.f32 0.0, %v2507
        %v2509 = vpop.f32.mrb[0].mxu0
        %2510 = vmatprep.mubr.bf16.mxu0 0
        %2511 = vmatmul.mubr.bf16.gmra.mrb[0].mxu0 %v2378
        %v2512 = vpop.f32.mrb[0].mxu0
        %v2513 = vadd.f32 0.0, %v2512
        %v2514 = vpop.f32.mrb[0].mxu0
        %v2515 = vpop.f32.mrb[0].mxu0
        %v2516 = vadd.f32 0.0, %v2515
        %v2517 = vpop.f32.mrb[0].mxu0
        %2518 = vmatprep.mubr.bf16.mxu0 0
        %2519 = vmatmul.mubr.bf16.gmra.mrb[0].mxu0 %v2381
        %v2520 = vpop.f32.mrb[0].mxu0
        %v2521 = vadd.f32 0.0, %v2520
        %v2522 = vpop.f32.mrb[0].mxu0
        %v2523 = vpop.f32.mrb[0].mxu0
        %v2524 = vadd.f32 0.0, %v2523
        %v2525 = vpop.f32.mrb[0].mxu0
        %2526 = vmatprep.mubr.bf16.mxu0 0
        %2527 = vmatmul.mubr.bf16.gmra.mrb[0].mxu0 %v2384
        %v2528 = vpop.f32.mrb[0].mxu0
        %v2529 = vadd.f32 0.0, %v2528
        %v2530 = vpop.f32.mrb[0].mxu0
        %v2531 = vpop.f32.mrb[0].mxu0
        %v2532 = vadd.f32 0.0, %v2531
        %v2533 = vpop.f32.mrb[0].mxu0
        %2534 = vmatprep.mubr.bf16.mxu0 0
        %2535 = vmatmul.mubr.bf16.gmra.mrb[0].mxu0 %v2387
        %v2536 = vpop.f32.mrb[0].mxu0
        %v2537 = vadd.f32 0.0, %v2536
        %v2538 = vpop.f32.mrb[0].mxu0
        %v2539 = vpop.f32.mrb[0].mxu0
        %v2540 = vadd.f32 0.0, %v2539
        %v2541 = vpop.f32.mrb[0].mxu0
        %2542 = vmatprep.mubr.bf16.mxu0 0
        %2543 = vmatmul.mubr.bf16.gmra.mrb[0].mxu0 %v2390
        %v2544 = vpop.f32.mrb[0].mxu0
        %v2545 = vadd.f32 0.0, %v2544
        %v2546 = vpop.f32.mrb[0].mxu0
        %v2547 = vpop.f32.mrb[0].mxu0
        %v2548 = vadd.f32 0.0, %v2547
        %v2549 = vpop.f32.mrb[0].mxu0
        %2550 = vmatprep.mubr.bf16.mxu0 0
        %2551 = vmatmul.mubr.bf16.gmra.mrb[0].mxu0 %v2393
        %v2552 = vpop.f32.mrb[0].mxu0
        %v2553 = vadd.f32 0.0, %v2552
        %v2554 = vpop.f32.mrb[0].mxu0
        %v2555 = vpop.f32.mrb[0].mxu0
        %v2556 = vadd.f32 0.0, %v2555
        %v2557 = vpop.f32.mrb[0].mxu0
        %2558 = vdwg.mxu0
        %v2559 = vadd.f32 %v2134, %v2433
        %v2560 = vadd.f32 %v2135, %v2436
        %v2561 = vadd.f32 %v2136, %v2441
        %v2562 = vadd.f32 %v2137, %v2444
        %v2563 = vadd.f32 %v2138, %v2449
        %v2564 = vadd.f32 %v2139, %v2452
        %v2565 = vadd.f32 %v2140, %v2457
        %v2566 = vadd.f32 %v2141, %v2460
        %v2567 = vadd.f32 %v2142, %v2465
        %v2568 = vadd.f32 %v2143, %v2468
        %v2569 = vadd.f32 %v2144, %v2473
        %v2570 = vadd.f32 %v2145, %v2476
        %v2571 = vadd.f32 %v2146, %v2481
        %v2572 = vadd.f32 %v2147, %v2484
        %v2573 = vadd.f32 %v2148, %v2489
        %v2574 = vadd.f32 %v2149, %v2492
        %v2575 = vadd.f32 %v2150, %v2497
        %v2576 = vadd.f32 %v2151, %v2500
        %v2577 = vadd.f32 %v2152, %v2505
        %v2578 = vadd.f32 %v2153, %v2508
        %v2579 = vadd.f32 %v2154, %v2513
        %v2580 = vadd.f32 %v2155, %v2516
        %v2581 = vadd.f32 %v2156, %v2521
        %v2582 = vadd.f32 %v2157, %v2524
        %v2583 = vadd.f32 %v2158, %v2529
        %v2584 = vadd.f32 %v2159, %v2532
        %v2585 = vadd.f32 %v2160, %v2537
        %v2586 = vadd.f32 %v2161, %v2540
        %v2587 = vadd.f32 %v2162, %v2545
        %v2588 = vadd.f32 %v2163, %v2548
        %v2589 = vadd.f32 %v2164, %v2553
        %v2590 = vadd.f32 %v2165, %v2556
        %v2592 = vrot.slane %v277, 5
        %v2593 = vrot.slane %v2592, 4
        %v2594 = vrot.slane %v278, 5
        %v2595 = vsel %vm2184, %v2593, %v2594
        %v2596 = vrot.slane %v2594, 4
        %v2597 = vrot.slane %v279, 5
        %v2598 = vsel %vm2184, %v2596, %v2597
        %s2599 = scalar_lea.vmem %s219, 20
        %v2600 = vld [vmem:[%s2599] sm:$0xf]
        %v2601 = vunpack.c.l.b16 %v2595
        %v2602 = vunpack.c.l.b16 %v2598
        %v2603 = vpack.c.b16 %v2602, %v2601
        %v2605 = vsel %vm371, %v2603, 0
        %v2608 = vsel %vm420, %v2600, 0
        %2610 = vmatprep.subr.bf16.mxu0 0
        %2611 = vmatpush1.bf16.msra.mxu0 %v2608
        %2612 = vmatprep.subr.bf16.mxu0 0
        %2613 = vmatpush1.bf16.msra.mxu0 0
        %2614 = vmatprep.subr.bf16.mxu0 0
        %2615 = vmatpush1.bf16.msra.mxu0 0
        %2616 = vmatprep.subr.bf16.mxu0 0
        %2617 = vmatpush1.bf16.msra.mxu0 0
        %2618 = vmatprep.subr.bf16.mxu0 0
        %2619 = vmatpush1.bf16.msra.mxu0 0
        %2620 = vmatprep.subr.bf16.mxu0 0
        %2621 = vmatpush1.bf16.msra.mxu0 0
        %2622 = vmatprep.subr.bf16.mxu0 0
        %2623 = vmatpush1.bf16.msra.mxu0 0
        %2624 = vmatprep.subr.bf16.mxu0 0
        %2625 = vmatpush1.bf16.msra.mxu0 0
        %2626 = vmatprep.subr.bf16.mxu0 0
        %2627 = vmatpush1.bf16.msra.mxu0 0
        %2628 = vmatprep.subr.bf16.mxu0 0
        %2629 = vmatpush1.bf16.msra.mxu0 0
        %2630 = vmatprep.subr.bf16.mxu0 0
        %2631 = vmatpush1.bf16.msra.mxu0 0
        %2632 = vmatprep.subr.bf16.mxu0 0
        %2633 = vmatpush1.bf16.msra.mxu0 0
        %2634 = vmatprep.subr.bf16.mxu0 0
        %2635 = vmatpush1.bf16.msra.mxu0 0
        %2636 = vmatprep.subr.bf16.mxu0 0
        %2637 = vmatpush1.bf16.msra.mxu0 0
        %2638 = vmatprep.subr.bf16.mxu0 0
        %2639 = vmatpush1.bf16.msra.mxu0 0
        %2640 = vmatprep.subr.bf16.mxu0 0
        %2641 = vmatpush1.bf16.msra.mxu0 0
        %2642 = vmatprep.mubr.bf16.mxu0 0
        %2643 = vmatmul.mubr.bf16.gmra.mrb[0].mxu0 %v2351
        %v2644 = vpop.f32.mrb[0].mxu0
        %v2645 = vadd.f32 0.0, %v2644
        %v2646 = vpop.f32.mrb[0].mxu0
        %v2647 = vpop.f32.mrb[0].mxu0
        %v2648 = vadd.f32 0.0, %v2647
        %v2649 = vpop.f32.mrb[0].mxu0
        %2650 = vmatprep.mubr.bf16.mxu0 0
        %2651 = vmatmul.mubr.bf16.gmra.mrb[0].mxu0 %v2354
        %v2652 = vpop.f32.mrb[0].mxu0
        %v2653 = vadd.f32 0.0, %v2652
        %v2654 = vpop.f32.mrb[0].mxu0
        %v2655 = vpop.f32.mrb[0].mxu0
        %v2656 = vadd.f32 0.0, %v2655
        %v2657 = vpop.f32.mrb[0].mxu0
        %2658 = vmatprep.mubr.bf16.mxu0 0
        %2659 = vmatmul.mubr.bf16.gmra.mrb[0].mxu0 %v2357
        %v2660 = vpop.f32.mrb[0].mxu0
        %v2661 = vadd.f32 0.0, %v2660
        %v2662 = vpop.f32.mrb[0].mxu0
        %v2663 = vpop.f32.mrb[0].mxu0
        %v2664 = vadd.f32 0.0, %v2663
        %v2665 = vpop.f32.mrb[0].mxu0
        %2666 = vmatprep.mubr.bf16.mxu0 0
        %2667 = vmatmul.mubr.bf16.gmra.mrb[0].mxu0 %v2360
        %v2668 = vpop.f32.mrb[0].mxu0
        %v2669 = vadd.f32 0.0, %v2668
        %v2670 = vpop.f32.mrb[0].mxu0
        %v2671 = vpop.f32.mrb[0].mxu0
        %v2672 = vadd.f32 0.0, %v2671
        %v2673 = vpop.f32.mrb[0].mxu0
        %2674 = vmatprep.mubr.bf16.mxu0 0
        %2675 = vmatmul.mubr.bf16.gmra.mrb[0].mxu0 %v2363
        %v2676 = vpop.f32.mrb[0].mxu0
        %v2677 = vadd.f32 0.0, %v2676
        %v2678 = vpop.f32.mrb[0].mxu0
        %v2679 = vpop.f32.mrb[0].mxu0
        %v2680 = vadd.f32 0.0, %v2679
        %v2681 = vpop.f32.mrb[0].mxu0
        %2682 = vmatprep.mubr.bf16.mxu0 0
        %2683 = vmatmul.mubr.bf16.gmra.mrb[0].mxu0 %v2366
        %v2684 = vpop.f32.mrb[0].mxu0
        %v2685 = vadd.f32 0.0, %v2684
        %v2686 = vpop.f32.mrb[0].mxu0
        %v2687 = vpop.f32.mrb[0].mxu0
        %v2688 = vadd.f32 0.0, %v2687
        %v2689 = vpop.f32.mrb[0].mxu0
        %2690 = vmatprep.mubr.bf16.mxu0 0
        %2691 = vmatmul.mubr.bf16.gmra.mrb[0].mxu0 %v2369
        %v2692 = vpop.f32.mrb[0].mxu0
        %v2693 = vadd.f32 0.0, %v2692
        %v2694 = vpop.f32.mrb[0].mxu0
        %v2695 = vpop.f32.mrb[0].mxu0
        %v2696 = vadd.f32 0.0, %v2695
        %v2697 = vpop.f32.mrb[0].mxu0
        %2698 = vmatprep.mubr.bf16.mxu0 0
        %2699 = vmatmul.mubr.bf16.gmra.mrb[0].mxu0 %v2372
        %v2700 = vpop.f32.mrb[0].mxu0
        %v2701 = vadd.f32 0.0, %v2700
        %v2702 = vpop.f32.mrb[0].mxu0
        %v2703 = vpop.f32.mrb[0].mxu0
        %v2704 = vadd.f32 0.0, %v2703
        %v2705 = vpop.f32.mrb[0].mxu0
        %2706 = vmatprep.mubr.bf16.mxu0 0
        %2707 = vmatmul.mubr.bf16.gmra.mrb[0].mxu0 %v2375
        %v2708 = vpop.f32.mrb[0].mxu0
        %v2709 = vadd.f32 0.0, %v2708
        %v2710 = vpop.f32.mrb[0].mxu0
        %v2711 = vpop.f32.mrb[0].mxu0
        %v2712 = vadd.f32 0.0, %v2711
        %v2713 = vpop.f32.mrb[0].mxu0
        %2714 = vmatprep.mubr.bf16.mxu0 0
        %2715 = vmatmul.mubr.bf16.gmra.mrb[0].mxu0 %v2378
        %v2716 = vpop.f32.mrb[0].mxu0
        %v2717 = vadd.f32 0.0, %v2716
        %v2718 = vpop.f32.mrb[0].mxu0
        %v2719 = vpop.f32.mrb[0].mxu0
        %v2720 = vadd.f32 0.0, %v2719
        %v2721 = vpop.f32.mrb[0].mxu0
        %2722 = vmatprep.mubr.bf16.mxu0 0
        %2723 = vmatmul.mubr.bf16.gmra.mrb[0].mxu0 %v2381
        %v2724 = vpop.f32.mrb[0].mxu0
        %v2725 = vadd.f32 0.0, %v2724
        %v2726 = vpop.f32.mrb[0].mxu0
        %v2727 = vpop.f32.mrb[0].mxu0
        %v2728 = vadd.f32 0.0, %v2727
        %v2729 = vpop.f32.mrb[0].mxu0
        %2730 = vmatprep.mubr.bf16.mxu0 0
        %2731 = vmatmul.mubr.bf16.gmra.mrb[0].mxu0 %v2384
        %v2732 = vpop.f32.mrb[0].mxu0
        %v2733 = vadd.f32 0.0, %v2732
        %v2734 = vpop.f32.mrb[0].mxu0
        %v2735 = vpop.f32.mrb[0].mxu0
        %v2736 = vadd.f32 0.0, %v2735
        %v2737 = vpop.f32.mrb[0].mxu0
        %2738 = vmatprep.mubr.bf16.mxu0 0
        %2739 = vmatmul.mubr.bf16.gmra.mrb[0].mxu0 %v2387
        %v2740 = vpop.f32.mrb[0].mxu0
        %v2741 = vadd.f32 0.0, %v2740
        %v2742 = vpop.f32.mrb[0].mxu0
        %v2743 = vpop.f32.mrb[0].mxu0
        %v2744 = vadd.f32 0.0, %v2743
        %v2745 = vpop.f32.mrb[0].mxu0
        %2746 = vmatprep.mubr.bf16.mxu0 0
        %2747 = vmatmul.mubr.bf16.gmra.mrb[0].mxu0 %v2390
        %v2748 = vpop.f32.mrb[0].mxu0
        %v2749 = vadd.f32 0.0, %v2748
        %v2750 = vpop.f32.mrb[0].mxu0
        %v2751 = vpop.f32.mrb[0].mxu0
        %v2752 = vadd.f32 0.0, %v2751
        %v2753 = vpop.f32.mrb[0].mxu0
        %2754 = vmatprep.mubr.bf16.mxu0 0
        %2755 = vmatmul.mubr.bf16.gmra.mrb[0].mxu0 %v2393
        %v2756 = vpop.f32.mrb[0].mxu0
        %v2757 = vadd.f32 0.0, %v2756
        %v2758 = vpop.f32.mrb[0].mxu0
        %v2759 = vpop.f32.mrb[0].mxu0
        %v2760 = vadd.f32 0.0, %v2759
        %v2761 = vpop.f32.mrb[0].mxu0
        %2762 = vmatprep.mubr.bf16.mxu0 0
        %2763 = vmatmul.mubr.bf16.gmra.mrb[0].mxu0 %v2605
        %v2764 = vpop.f32.mrb[0].mxu0
        %v2765 = vadd.f32 0.0, %v2764
        %v2766 = vpop.f32.mrb[0].mxu0
        %v2767 = vpop.f32.mrb[0].mxu0
        %v2768 = vadd.f32 0.0, %v2767
        %v2769 = vpop.f32.mrb[0].mxu0
        %2770 = vdwg.mxu0
        %v2771 = vadd.f32 %v2559, %v2645
        %v2772 = vadd.f32 %v2560, %v2648
        %v2773 = vadd.f32 %v2561, %v2653
        %v2774 = vadd.f32 %v2562, %v2656
        %v2775 = vadd.f32 %v2563, %v2661
        %v2776 = vadd.f32 %v2564, %v2664
        %v2777 = vadd.f32 %v2565, %v2669
        %v2778 = vadd.f32 %v2566, %v2672
        %v2779 = vadd.f32 %v2567, %v2677
        %v2780 = vadd.f32 %v2568, %v2680
        %v2781 = vadd.f32 %v2569, %v2685
        %v2782 = vadd.f32 %v2570, %v2688
        %v2783 = vadd.f32 %v2571, %v2693
        %v2784 = vadd.f32 %v2572, %v2696
        %v2785 = vadd.f32 %v2573, %v2701
        %v2786 = vadd.f32 %v2574, %v2704
        %v2787 = vadd.f32 %v2575, %v2709
        %v2788 = vadd.f32 %v2576, %v2712
        %v2789 = vadd.f32 %v2577, %v2717
        %v2790 = vadd.f32 %v2578, %v2720
        %v2791 = vadd.f32 %v2579, %v2725
        %v2792 = vadd.f32 %v2580, %v2728
        %v2793 = vadd.f32 %v2581, %v2733
        %v2794 = vadd.f32 %v2582, %v2736
        %v2795 = vadd.f32 %v2583, %v2741
        %v2796 = vadd.f32 %v2584, %v2744
        %v2797 = vadd.f32 %v2585, %v2749
        %v2798 = vadd.f32 %v2586, %v2752
        %v2799 = vadd.f32 %v2587, %v2757
        %v2800 = vadd.f32 %v2588, %v2760
        %v2801 = vadd.f32 %v2589, %v2765
        %v2802 = vadd.f32 %v2590, %v2768
        %v2804 = vrot.slane %v280, 5
        %v2805 = vrot.slane %v2804, 4
        %v2806 = vrot.slane %v281, 5
        %v2807 = vsel %vm2184, %v2805, %v2806
        %v2808 = vrot.slane %v2806, 4
        %v2809 = vrot.slane %v282, 5
        %v2810 = vsel %vm2184, %v2808, %v2809
        %s2811 = scalar_lea.vmem %s219, 32
        %v2812 = vld [vmem:[%s2811] sm:$0xf]
        %v2813 = vunpack.c.l.b16 %v2807
        %v2814 = vunpack.c.l.b16 %v2810
        %v2815 = vpack.c.b16 %v2814, %v2813
        %v2817 = vsel %vm371, %v2815, 0
        %v2820 = vsel %vm420, %v2812, 0
        %2822 = vmatprep.subr.bf16.mxu0 0
        %2823 = vmatpush1.bf16.msra.mxu0 %v2820
        %2824 = vmatprep.subr.bf16.mxu0 0
        %2825 = vmatpush1.bf16.msra.mxu0 0
        %2826 = vmatprep.subr.bf16.mxu0 0
        %2827 = vmatpush1.bf16.msra.mxu0 0
        %2828 = vmatprep.subr.bf16.mxu0 0
        %2829 = vmatpush1.bf16.msra.mxu0 0
        %2830 = vmatprep.subr.bf16.mxu0 0
        %2831 = vmatpush1.bf16.msra.mxu0 0
        %2832 = vmatprep.subr.bf16.mxu0 0
        %2833 = vmatpush1.bf16.msra.mxu0 0
        %2834 = vmatprep.subr.bf16.mxu0 0
        %2835 = vmatpush1.bf16.msra.mxu0 0
        %2836 = vmatprep.subr.bf16.mxu0 0
        %2837 = vmatpush1.bf16.msra.mxu0 0
        %2838 = vmatprep.subr.bf16.mxu0 0
        %2839 = vmatpush1.bf16.msra.mxu0 0
        %2840 = vmatprep.subr.bf16.mxu0 0
        %2841 = vmatpush1.bf16.msra.mxu0 0
        %2842 = vmatprep.subr.bf16.mxu0 0
        %2843 = vmatpush1.bf16.msra.mxu0 0
        %2844 = vmatprep.subr.bf16.mxu0 0
        %2845 = vmatpush1.bf16.msra.mxu0 0
        %2846 = vmatprep.subr.bf16.mxu0 0
        %2847 = vmatpush1.bf16.msra.mxu0 0
        %2848 = vmatprep.subr.bf16.mxu0 0
        %2849 = vmatpush1.bf16.msra.mxu0 0
        %2850 = vmatprep.subr.bf16.mxu0 0
        %2851 = vmatpush1.bf16.msra.mxu0 0
        %2852 = vmatprep.subr.bf16.mxu0 0
        %2853 = vmatpush1.bf16.msra.mxu0 0
        %2854 = vmatprep.mubr.bf16.mxu0 0
        %2855 = vmatmul.mubr.bf16.gmra.mrb[0].mxu0 %v2354
        %v2856 = vpop.f32.mrb[0].mxu0
        %v2857 = vadd.f32 0.0, %v2856
        %v2858 = vpop.f32.mrb[0].mxu0
        %v2859 = vpop.f32.mrb[0].mxu0
        %v2860 = vadd.f32 0.0, %v2859
        %v2861 = vpop.f32.mrb[0].mxu0
        %2862 = vmatprep.mubr.bf16.mxu0 0
        %2863 = vmatmul.mubr.bf16.gmra.mrb[0].mxu0 %v2357
        %v2864 = vpop.f32.mrb[0].mxu0
        %v2865 = vadd.f32 0.0, %v2864
        %v2866 = vpop.f32.mrb[0].mxu0
        %v2867 = vpop.f32.mrb[0].mxu0
        %v2868 = vadd.f32 0.0, %v2867
        %v2869 = vpop.f32.mrb[0].mxu0
        %2870 = vmatprep.mubr.bf16.mxu0 0
        %2871 = vmatmul.mubr.bf16.gmra.mrb[0].mxu0 %v2360
        %v2872 = vpop.f32.mrb[0].mxu0
        %v2873 = vadd.f32 0.0, %v2872
        %v2874 = vpop.f32.mrb[0].mxu0
        %v2875 = vpop.f32.mrb[0].mxu0
        %v2876 = vadd.f32 0.0, %v2875
        %v2877 = vpop.f32.mrb[0].mxu0
        %2878 = vmatprep.mubr.bf16.mxu0 0
        %2879 = vmatmul.mubr.bf16.gmra.mrb[0].mxu0 %v2363
        %v2880 = vpop.f32.mrb[0].mxu0
        %v2881 = vadd.f32 0.0, %v2880
        %v2882 = vpop.f32.mrb[0].mxu0
        %v2883 = vpop.f32.mrb[0].mxu0
        %v2884 = vadd.f32 0.0, %v2883
        %v2885 = vpop.f32.mrb[0].mxu0
        %2886 = vmatprep.mubr.bf16.mxu0 0
        %2887 = vmatmul.mubr.bf16.gmra.mrb[0].mxu0 %v2366
        %v2888 = vpop.f32.mrb[0].mxu0
        %v2889 = vadd.f32 0.0, %v2888
        %v2890 = vpop.f32.mrb[0].mxu0
        %v2891 = vpop.f32.mrb[0].mxu0
        %v2892 = vadd.f32 0.0, %v2891
        %v2893 = vpop.f32.mrb[0].mxu0
        %2894 = vmatprep.mubr.bf16.mxu0 0
        %2895 = vmatmul.mubr.bf16.gmra.mrb[0].mxu0 %v2369
        %v2896 = vpop.f32.mrb[0].mxu0
        %v2897 = vadd.f32 0.0, %v2896
        %v2898 = vpop.f32.mrb[0].mxu0
        %v2899 = vpop.f32.mrb[0].mxu0
        %v2900 = vadd.f32 0.0, %v2899
        %v2901 = vpop.f32.mrb[0].mxu0
        %2902 = vmatprep.mubr.bf16.mxu0 0
        %2903 = vmatmul.mubr.bf16.gmra.mrb[0].mxu0 %v2372
        %v2904 = vpop.f32.mrb[0].mxu0
        %v2905 = vadd.f32 0.0, %v2904
        %v2906 = vpop.f32.mrb[0].mxu0
        %v2907 = vpop.f32.mrb[0].mxu0
        %v2908 = vadd.f32 0.0, %v2907
        %v2909 = vpop.f32.mrb[0].mxu0
        %2910 = vmatprep.mubr.bf16.mxu0 0
        %2911 = vmatmul.mubr.bf16.gmra.mrb[0].mxu0 %v2375
        %v2912 = vpop.f32.mrb[0].mxu0
        %v2913 = vadd.f32 0.0, %v2912
        %v2914 = vpop.f32.mrb[0].mxu0
        %v2915 = vpop.f32.mrb[0].mxu0
        %v2916 = vadd.f32 0.0, %v2915
        %v2917 = vpop.f32.mrb[0].mxu0
        %2918 = vmatprep.mubr.bf16.mxu0 0
        %2919 = vmatmul.mubr.bf16.gmra.mrb[0].mxu0 %v2378
        %v2920 = vpop.f32.mrb[0].mxu0
        %v2921 = vadd.f32 0.0, %v2920
        %v2922 = vpop.f32.mrb[0].mxu0
        %v2923 = vpop.f32.mrb[0].mxu0
        %v2924 = vadd.f32 0.0, %v2923
        %v2925 = vpop.f32.mrb[0].mxu0
        %2926 = vmatprep.mubr.bf16.mxu0 0
        %2927 = vmatmul.mubr.bf16.gmra.mrb[0].mxu0 %v2381
        %v2928 = vpop.f32.mrb[0].mxu0
        %v2929 = vadd.f32 0.0, %v2928
        %v2930 = vpop.f32.mrb[0].mxu0
        %v2931 = vpop.f32.mrb[0].mxu0
        %v2932 = vadd.f32 0.0, %v2931
        %v2933 = vpop.f32.mrb[0].mxu0
        %2934 = vmatprep.mubr.bf16.mxu0 0
        %2935 = vmatmul.mubr.bf16.gmra.mrb[0].mxu0 %v2384
        %v2936 = vpop.f32.mrb[0].mxu0
        %v2937 = vadd.f32 0.0, %v2936
        %v2938 = vpop.f32.mrb[0].mxu0
        %v2939 = vpop.f32.mrb[0].mxu0
        %v2940 = vadd.f32 0.0, %v2939
        %v2941 = vpop.f32.mrb[0].mxu0
        %2942 = vmatprep.mubr.bf16.mxu0 0
        %2943 = vmatmul.mubr.bf16.gmra.mrb[0].mxu0 %v2387
        %v2944 = vpop.f32.mrb[0].mxu0
        %v2945 = vadd.f32 0.0, %v2944
        %v2946 = vpop.f32.mrb[0].mxu0
        %v2947 = vpop.f32.mrb[0].mxu0
        %v2948 = vadd.f32 0.0, %v2947
        %v2949 = vpop.f32.mrb[0].mxu0
        %2950 = vmatprep.mubr.bf16.mxu0 0
        %2951 = vmatmul.mubr.bf16.gmra.mrb[0].mxu0 %v2390
        %v2952 = vpop.f32.mrb[0].mxu0
        %v2953 = vadd.f32 0.0, %v2952
        %v2954 = vpop.f32.mrb[0].mxu0
        %v2955 = vpop.f32.mrb[0].mxu0
        %v2956 = vadd.f32 0.0, %v2955
        %v2957 = vpop.f32.mrb[0].mxu0
        %2958 = vmatprep.mubr.bf16.mxu0 0
        %2959 = vmatmul.mubr.bf16.gmra.mrb[0].mxu0 %v2393
        %v2960 = vpop.f32.mrb[0].mxu0
        %v2961 = vadd.f32 0.0, %v2960
        %v2962 = vpop.f32.mrb[0].mxu0
        %v2963 = vpop.f32.mrb[0].mxu0
        %v2964 = vadd.f32 0.0, %v2963
        %v2965 = vpop.f32.mrb[0].mxu0
        %2966 = vmatprep.mubr.bf16.mxu0 0
        %2967 = vmatmul.mubr.bf16.gmra.mrb[0].mxu0 %v2605
        %v2968 = vpop.f32.mrb[0].mxu0
        %v2969 = vadd.f32 0.0, %v2968
        %v2970 = vpop.f32.mrb[0].mxu0
        %v2971 = vpop.f32.mrb[0].mxu0
        %v2972 = vadd.f32 0.0, %v2971
        %v2973 = vpop.f32.mrb[0].mxu0
        %2974 = vmatprep.mubr.bf16.mxu0 0
        %2975 = vmatmul.mubr.bf16.gmra.mrb[0].mxu0 %v2817
        %v2976 = vpop.f32.mrb[0].mxu0
        %v2977 = vadd.f32 0.0, %v2976
        %v2978 = vpop.f32.mrb[0].mxu0
        %v2979 = vpop.f32.mrb[0].mxu0
        %v2980 = vadd.f32 0.0, %v2979
        %v2981 = vpop.f32.mrb[0].mxu0
        %2982 = vdwg.mxu0
        %v2983 = vadd.f32 %v2771, %v2857
        %v2984 = vadd.f32 %v2772, %v2860
        %v2985 = vadd.f32 %v2773, %v2865
        %v2986 = vadd.f32 %v2774, %v2868
        %v2987 = vadd.f32 %v2775, %v2873
        %v2988 = vadd.f32 %v2776, %v2876
        %v2989 = vadd.f32 %v2777, %v2881
        %v2990 = vadd.f32 %v2778, %v2884
        %v2991 = vadd.f32 %v2779, %v2889
        %v2992 = vadd.f32 %v2780, %v2892
        %v2993 = vadd.f32 %v2781, %v2897
        %v2994 = vadd.f32 %v2782, %v2900
        %v2995 = vadd.f32 %v2783, %v2905
        %v2996 = vadd.f32 %v2784, %v2908
        %v2997 = vadd.f32 %v2785, %v2913
        %v2998 = vadd.f32 %v2786, %v2916
        %v2999 = vadd.f32 %v2787, %v2921
        %v3000 = vadd.f32 %v2788, %v2924
        %v3001 = vadd.f32 %v2789, %v2929
        %v3002 = vadd.f32 %v2790, %v2932
        %v3003 = vadd.f32 %v2791, %v2937
        %v3004 = vadd.f32 %v2792, %v2940
        %v3005 = vadd.f32 %v2793, %v2945
        %v3006 = vadd.f32 %v2794, %v2948
        %v3007 = vadd.f32 %v2795, %v2953
        %v3008 = vadd.f32 %v2796, %v2956
        %v3009 = vadd.f32 %v2797, %v2961
        %v3010 = vadd.f32 %v2798, %v2964
        %v3011 = vadd.f32 %v2799, %v2969
        %v3012 = vadd.f32 %v2800, %v2972
        %v3013 = vadd.f32 %v2801, %v2977
        %v3014 = vadd.f32 %v2802, %v2980
        %v3015 = vmax.f32 %v2983, 0.0
        %v3016 = vmax.f32 %v2984, 0.0
        %v3017 = vmax.f32 %v2985, 0.0
        %v3018 = vmax.f32 %v2986, 0.0
        %v3019 = vmax.f32 %v2987, 0.0
        %v3020 = vmax.f32 %v2988, 0.0
        %v3021 = vmax.f32 %v2989, 0.0
        %v3022 = vmax.f32 %v2990, 0.0
        %v3023 = vmax.f32 %v2991, 0.0
        %v3024 = vmax.f32 %v2992, 0.0
        %v3025 = vmax.f32 %v2993, 0.0
        %v3026 = vmax.f32 %v2994, 0.0
        %v3027 = vmax.f32 %v2995, 0.0
        %v3028 = vmax.f32 %v2996, 0.0
        %v3029 = vmax.f32 %v2997, 0.0
        %v3030 = vmax.f32 %v2998, 0.0
        %v3031 = vmax.f32 %v2999, 0.0
        %v3032 = vmax.f32 %v3000, 0.0
        %v3033 = vmax.f32 %v3001, 0.0
        %v3034 = vmax.f32 %v3002, 0.0
        %v3035 = vmax.f32 %v3003, 0.0
        %v3036 = vmax.f32 %v3004, 0.0
        %v3037 = vmax.f32 %v3005, 0.0
        %v3038 = vmax.f32 %v3006, 0.0
        %v3039 = vmax.f32 %v3007, 0.0
        %v3040 = vmax.f32 %v3008, 0.0
        %v3041 = vmax.f32 %v3009, 0.0
        %v3042 = vmax.f32 %v3010, 0.0
        %v3043 = vmax.f32 %v3011, 0.0
        %v3044 = vmax.f32 %v3012, 0.0
        %v3045 = vmax.f32 %v3013, 0.0
        %v3046 = vmax.f32 %v3014, 0.0
        %v3047 = vpack.c.bf16 %v3016, %v3015
        %v3048 = vpack.c.bf16 %v3018, %v3017
        %v3049 = vpack.c.bf16 %v3020, %v3019
        %v3050 = vpack.c.bf16 %v3022, %v3021
        %v3051 = vpack.c.bf16 %v3024, %v3023
        %v3052 = vpack.c.bf16 %v3026, %v3025
        %v3053 = vpack.c.bf16 %v3028, %v3027
        %v3054 = vpack.c.bf16 %v3030, %v3029
        %v3055 = vpack.c.bf16 %v3032, %v3031
        %v3056 = vpack.c.bf16 %v3034, %v3033
        %v3057 = vpack.c.bf16 %v3036, %v3035
        %v3058 = vpack.c.bf16 %v3038, %v3037
        %v3059 = vpack.c.bf16 %v3040, %v3039
        %v3060 = vpack.c.bf16 %v3042, %v3041
        %v3061 = vpack.c.bf16 %v3044, %v3043
        %v3062 = vpack.c.bf16 %v3046, %v3045
        %v3079 = vunpack.c.l.b16 %v3047
        %v3080 = vunpack.c.h.b16 %v3047
        %v3081 = vunpack.c.l.b16 %v3048
        %v3082 = vunpack.c.h.b16 %v3048
        %v3083 = vunpack.c.l.b16 %v3049
        %v3084 = vunpack.c.h.b16 %v3049
        %v3085 = vunpack.c.l.b16 %v3050
        %v3086 = vunpack.c.h.b16 %v3050
        %v3087 = vunpack.c.l.b16 %v3051
        %v3088 = vunpack.c.h.b16 %v3051
        %v3089 = vunpack.c.l.b16 %v3052
        %v3090 = vunpack.c.h.b16 %v3052
        %v3091 = vunpack.c.l.b16 %v3053
        %v3092 = vunpack.c.h.b16 %v3053
        %v3093 = vunpack.c.l.b16 %v3054
        %v3094 = vunpack.c.h.b16 %v3054
        %v3095 = vunpack.c.l.b16 %v3055
        %v3096 = vunpack.c.h.b16 %v3055
        %v3097 = vunpack.c.l.b16 %v3056
        %v3098 = vunpack.c.h.b16 %v3056
        %v3099 = vunpack.c.l.b16 %v3057
        %v3100 = vunpack.c.h.b16 %v3057
        %v3101 = vunpack.c.l.b16 %v3058
        %v3102 = vunpack.c.h.b16 %v3058
        %v3103 = vunpack.c.l.b16 %v3059
        %v3104 = vunpack.c.h.b16 %v3059
        %v3105 = vunpack.c.l.b16 %v3060
        %v3106 = vunpack.c.h.b16 %v3060
        %v3107 = vunpack.c.l.b16 %v3061
        %v3108 = vunpack.c.h.b16 %v3061
        %v3109 = vunpack.c.l.b16 %v3062
        %v3110 = vunpack.c.h.b16 %v3062
        %v3111 = vpack.c.b16 %v3079, %v3079
        %v3112 = vpack.c.b16 %v3080, %v3080
        %v3113 = vpack.c.b16 %v3081, %v3081
        %v3114 = vpack.c.b16 %v3082, %v3082
        %v3115 = vpack.c.b16 %v3083, %v3083
        %v3116 = vpack.c.b16 %v3084, %v3084
        %v3117 = vpack.c.b16 %v3085, %v3085
        %v3118 = vpack.c.b16 %v3086, %v3086
        %v3119 = vpack.c.b16 %v3087, %v3087
        %v3120 = vpack.c.b16 %v3088, %v3088
        %v3121 = vpack.c.b16 %v3089, %v3089
        %v3122 = vpack.c.b16 %v3090, %v3090
        %v3123 = vpack.c.b16 %v3091, %v3091
        %v3124 = vpack.c.b16 %v3092, %v3092
        %v3125 = vpack.c.b16 %v3093, %v3093
        %v3126 = vpack.c.b16 %v3094, %v3094
        %v3127 = vpack.c.b16 %v3095, %v3095
        %v3128 = vpack.c.b16 %v3096, %v3096
        %v3129 = vpack.c.b16 %v3097, %v3097
        %v3130 = vpack.c.b16 %v3098, %v3098
        %v3131 = vpack.c.b16 %v3099, %v3099
        %v3132 = vpack.c.b16 %v3100, %v3100
        %v3133 = vpack.c.b16 %v3101, %v3101
        %v3134 = vpack.c.b16 %v3102, %v3102
        %v3135 = vpack.c.b16 %v3103, %v3103
        %v3136 = vpack.c.b16 %v3104, %v3104
        %v3137 = vpack.c.b16 %v3105, %v3105
        %v3138 = vpack.c.b16 %v3106, %v3106
        %v3139 = vpack.c.b16 %v3107, %v3107
        %v3140 = vpack.c.b16 %v3108, %v3108
        %v3141 = vpack.c.b16 %v3109, %v3109
        %v3142 = vpack.c.b16 %v3110, %v3110
        %vm3175 = vcmask 519168
        %3176 = vst.msk [vmem:[%s210] sm:$0xf] %vm3175, %v3111
        %3177 = vst.msk [vmem:[%s210 + $0x4] sm:$0xf] %vm3175, %v3112
        %3178 = vst.msk [vmem:[%s210 + $0x8] sm:$0xf] %vm3175, %v3113
        %3179 = vst.msk [vmem:[%s210 + $0xc] sm:$0xf] %vm3175, %v3114
        %3180 = vst.msk [vmem:[%s210 + $0x10] sm:$0xf] %vm3175, %v3115
        %3181 = vst.msk [vmem:[%s210 + $0x14] sm:$0xf] %vm3175, %v3116
        %3182 = vst.msk [vmem:[%s210 + $0x18] sm:$0xf] %vm3175, %v3117
        %3183 = vst.msk [vmem:[%s210 + $0x1c] sm:$0xf] %vm3175, %v3118
        %3184 = vst.msk [vmem:[%s210 + $0x20] sm:$0xf] %vm3175, %v3119
        %3185 = vst.msk [vmem:[%s210 + $0x24] sm:$0xf] %vm3175, %v3120
        %3186 = vst.msk [vmem:[%s210 + $0x28] sm:$0xf] %vm3175, %v3121
        %3187 = vst.msk [vmem:[%s210 + $0x2c] sm:$0xf] %vm3175, %v3122
        %3188 = vst.msk [vmem:[%s210 + $0x30] sm:$0xf] %vm3175, %v3123
        %3189 = vst.msk [vmem:[%s210 + $0x34] sm:$0xf] %vm3175, %v3124
        %3190 = vst.msk [vmem:[%s210 + $0x38] sm:$0xf] %vm3175, %v3125
        %3191 = vst.msk [vmem:[%s210 + $0x3c] sm:$0xf] %vm3175, %v3126
        %3192 = vst.msk [vmem:[%s210 + $0x40] sm:$0xf] %vm3175, %v3127
        %3193 = vst.msk [vmem:[%s210 + $0x44] sm:$0xf] %vm3175, %v3128
        %3194 = vst.msk [vmem:[%s210 + $0x48] sm:$0xf] %vm3175, %v3129
        %3195 = vst.msk [vmem:[%s210 + $0x4c] sm:$0xf] %vm3175, %v3130
        %3196 = vst.msk [vmem:[%s210 + $0x50] sm:$0xf] %vm3175, %v3131
        %3197 = vst.msk [vmem:[%s210 + $0x54] sm:$0xf] %vm3175, %v3132
        %3198 = vst.msk [vmem:[%s210 + $0x58] sm:$0xf] %vm3175, %v3133
        %3199 = vst.msk [vmem:[%s210 + $0x5c] sm:$0xf] %vm3175, %v3134
        %3200 = vst.msk [vmem:[%s210 + $0x60] sm:$0xf] %vm3175, %v3135
        %3201 = vst.msk [vmem:[%s210 + $0x64] sm:$0xf] %vm3175, %v3136
        %3202 = vst.msk [vmem:[%s210 + $0x68] sm:$0xf] %vm3175, %v3137
        %3203 = vst.msk [vmem:[%s210 + $0x6c] sm:$0xf] %vm3175, %v3138
        %3204 = vst.msk [vmem:[%s210 + $0x70] sm:$0xf] %vm3175, %v3139
        %3205 = vst.msk [vmem:[%s210 + $0x74] sm:$0xf] %vm3175, %v3140
        %3206 = vst.msk [vmem:[%s210 + $0x78] sm:$0xf] %vm3175, %v3141
        %3207 = vst.msk [vmem:[%s210 + $0x7c] sm:$0xf] %vm3175, %v3142
        %s3208 = sand.u32 %s126, 1
        %s3209 = scalar_lea.sflag [#allocation3], %s3208
        %s3210 = sand.u32 %s126, 1
        %s3211 = smul.addr %s3210, 128
        %s3212 = scalar_lea.vmem [#allocation2], %s3211
        // Predicated region
        $region33: #{tpu_custom_call.1} parent=31 // pred_check
          %p3213 = pneg %p136
        $region34: #{tpu_custom_call.1} parent=31 // pred_check_branch
          %3215 = sbr.rel (%p3213) target = $region36
        $region35: #{tpu_custom_call.1} parent=31 // pred_region
          %s3216 = smul.u32 16, %s24
          %s3218 = ssub.s32 2048, 2048
          %3219 = vsyncadd %s3209, %s3218
          %s3220 = smul.addr %s3216, 2
          %s3221 = sadd.s32 %s23, %s3220
          %s3222 = smul.addr %s22, 32
          %s3223 = sadd.s32 %s3221, %s3222
          %s3224 = smul.addr %s3223, 64
          %s3225 = scalar_lea.hbm %s3, %s3224
          %s3226 = sshll.u32 %s3212, 4
          %s3227 = int_to_ptr.vmem [resolvable:$true] %s3226
          %3232 = dma.vmem_to_hbm [thread:$0]  %s3227, 2048, %s3225, %s3209, 64, 64, 4
        $region36: #{tpu_custom_call.1} parent=31 // pred_fallthru
          _
      $region32: #{tpu_custom_call.1} parent=5 // pred_fallthru
        _
      %p3233 = scmp.le.s32.totalorder 2, %s12
      // Predicated region
      $region37: #{tpu_custom_call.1} parent=5 // pred_check
        %p3234 = pneg %p3233
      $region38: #{tpu_custom_call.1} parent=5 // pred_check_branch
        %3236 = sbr.rel (%p3234) target = $region40
      $region39: #{tpu_custom_call.1} parent=5 // pred_region
        %s3237 = ssub.s32 %s12, 2
        // Predicated region
        $region41: #{tpu_custom_call.1} parent=39 // pred_check
          %p3238 = pneg %p142
        $region42: #{tpu_custom_call.1} parent=39 // pred_check_branch
          %3240 = sbr.rel (%p3238) target = $region44
        $region43: #{tpu_custom_call.1} parent=39 // pred_region
          %s3241 = sand.u32 %s127, 1
          %s3242 = scalar_lea.sflag [#allocation3], %s3241
          %s3243 = sand.u32 %s127, 1
          %s3244 = smul.addr %s3243, 128
          %s3245 = scalar_lea.vmem [#allocation2], %s3244
          %3246 = dma.done %s3242, 2048
        $region44: #{tpu_custom_call.1} parent=39 // pred_fallthru
          _
      $region40: #{tpu_custom_call.1} parent=5 // pred_fallthru
        _
    $region6: #{tpu_custom_call.1} parent=1 // loop_footer
      %s16 = sadd.s32 1, %s12
    $region7: #{tpu_custom_call.1} parent=1 // loop_footer_branch
      %11 = sbr.rel target = $region3
    $region8: #{tpu_custom_call.1} parent=1 // loop_exit
      _
    %3247 = vsyncpa [#allocation3], 1
    %s3248 = scalar_lea.sflag [#allocation3], 1
    %3249 = vsyncpa %s3248, 1

</llo_original>
